<compile_context>
chip_gen: v7x
topology: tpu7x:2x2x1
jax: 0.10.0
libtpu: 0.0.40
codegen_flags: <defaults>
</compile_context>

<pallas_src>
import functools

import jax
import jax.numpy as jnp
from jax.experimental import pallas as pl
from jax.experimental.pallas import tpu as pltpu


# ----------------------------- Pallas kernel --------------------------------
def _down_block_kernel(x_ref, w_ref, shift_ref, o_ref, conv_ref, pool_ref, *,
                       k, ho_t, wo):
    # x_ref:     (1, 1, k*k, C_in_pad, (ho_t+2)*Wo + 2)  bf16  phase sub-grids (H halo only)
    # w_ref:     (9, C_out, C_in_pad)                     bf16  BN-scale & 1/k^2 folded taps
    # shift_ref: (C_out, 1)                               f32   folded bias/BN shift (/k^2)
    # o_ref:     (1, C_out, ho_t*Wo)                      f32   compact pooled output tile
    # conv_ref, pool_ref: (C_out, ho_t*Wo) f32 VMEM scratch accumulators
    n_lanes = ho_t * wo

    # Lane-column masks for the two taps whose column shift wraps across a row boundary
    # (they implement the conv's left/right zero padding).  Hoisted out of the loops.
    col = jax.lax.broadcasted_iota(jnp.int32, (1, n_lanes), 1) % wo
    left_edge = col == 0           # zero these lanes when the tap's column shift is -1
    right_edge = col == wo - 1     # ... when it is +1

    shift = shift_ref[...]         # (C_out, 1): lane-broadcast by the add below

    for ph in range(k * k):        # pooling phases (static unroll)
        i, j = ph // k, ph % k
        for t in range(9):         # 3x3 conv taps (static unroll)
            dy, dx = t // 3 - 1, t % 3 - 1
            qy, qx = (i + dy) // k, (j + dx) // k           # pooled row/col shift
            sg = ((i + dy) % k) * k + ((j + dx) % k)        # source pooling phase
            off = (qy + 1) * wo + (qx + 1)                  # flat lane offset (incl. pads)
            xs = x_ref[0, 0, sg, :, off:off + n_lanes]      # (C_in_pad, n_lanes) bf16
            if qx == -1:                                    # conv zero-pad at col 0
                xs = jnp.where(left_edge, jnp.zeros_like(xs), xs)
            elif qx == 1:                                    # conv zero-pad at col Wo-1
                xs = jnp.where(right_edge, jnp.zeros_like(xs), xs)
            contrib = jnp.dot(w_ref[t], xs, preferred_element_type=jnp.float32)
            if t == 0:
                conv_ref[...] = contrib                     # first tap: init accumulator
            else:
                conv_ref[...] += contrib                    # accumulating MXU matmuls
        y = jnp.maximum(conv_ref[...] + shift, 0.0)         # folded BN shift + ReLU
        if ph == 0:
            pool_ref[...] = y                               # average pool on the VPU
        else:
            pool_ref[...] += y                              # (1/k^2 already folded in)
    o_ref[0] = pool_ref[...].astype(o_ref.dtype)            # compact, lane-dense store


# ----------------------------- tile chooser ----------------------------------
def _pick_row_tile(ho, wo, c_in_pad, kk, elem_bytes=2, budget=4 << 20):
    """Largest row tile (multiple of 8 dividing Ho, or Ho itself) whose bf16 x tile fits
    the budget and keeps the output block lane-dense (multiple of 128 lanes) when tiled."""
    cands = [ho] + [d for d in range(8, ho, 8) if ho % d == 0]
    for d in sorted(set(cands), reverse=True):
        x_bytes = kk * c_in_pad * ((d + 2) * wo + 2) * elem_bytes
        lane_ok = (d == ho) or ((d * wo) % 128 == 0)
        if x_bytes <= budget and lane_ok:
            return d
    return ho  # fallback: one tile per batch element


# ------------------------------ wrapper --------------------------------------
@functools.partial(jax.jit, static_argnames=("eps", "pool_k"))
def down_block_pallas(x_nchw, w_kio, conv_bias, gamma, beta, run_mean, run_var,
                      eps=1e-5, pool_k=2):
    """Forward pass of _DownBlock.  x_nchw: (N, C_in, H, W) float32 -> (N, C_out, H/k, W/k)."""
    n, c_in, h, w = x_nchw.shape
    c_out = w_kio.shape[-1]
    k = pool_k
    if h % k or w % k:
        raise ValueError("H and W must be divisible by pool_k")
    ho, wo = h // k, w // k
    c_in_pad = ((c_in + 15) // 16) * 16          # bf16 sublane tile alignment
    ho_t = _pick_row_tile(ho, wo, c_in_pad, k * k)
    n_tiles = ho // ho_t
    t_flat = (ho_t + 2) * wo + 2
    n_lanes = ho_t * wo

    # Fold conv bias + BatchNorm (eval) + the positive 1/k^2 pool factor into weights/shift.
    inv_std = 1.0 / jnp.sqrt(run_var.astype(jnp.float32) + eps)
    scale = gamma.astype(jnp.float32) * inv_std                               # (C_out,)
    pool_scale = scale / float(k * k)
    shift = ((scale * (conv_bias.astype(jnp.float32) - run_mean.astype(jnp.float32))
              + beta.astype(jnp.float32)) / float(k * k)).reshape(c_out, 1)

    w_eff = w_kio.astype(jnp.float32) * pool_scale[None, None, None, :]       # (3,3,Cin,Cout)
    w_eff = jnp.pad(w_eff, ((0, 0), (0, 0), (0, c_in_pad - c_in), (0, 0)))
    w_taps = jnp.transpose(w_eff, (0, 1, 3, 2)).reshape(9, c_out, c_in_pad)
    w_taps = w_taps.astype(jnp.bfloat16)

    # Space-to-depth by pooling phase in bf16 (halves wrapper/DMA bytes):
    # (N, C, H, W) -> (N, k*k, C_pad, Ho, Wo), then zero halo rows (conv H padding).
    x_bf = x_nchw.astype(jnp.bfloat16)
    xp = jnp.pad(x_bf, ((0, 0), (0, c_in_pad - c_in), (0, 0), (0, 0)))
    xs = xp.reshape(n, c_in_pad, ho, k, wo, k).transpose(0, 3, 5, 1, 2, 4)
    xs = xs.reshape(n, k * k, c_in_pad, ho, wo)
    xs = jnp.pad(xs, ((0, 0), (0, 0), (0, 0), (1, 1), (0, 0)))
    # Overlapping row tiles (+1 halo row each side), flattened rows, +1 front/tail zero lane.
    tiles = [xs[:, :, :, t * ho_t: t * ho_t + ho_t + 2, :] for t in range(n_tiles)]
    xt = jnp.stack(tiles, axis=1)                       # (N, nt, kk, Cp, ho_t+2, Wo)
    xt = xt.reshape(n, n_tiles, k * k, c_in_pad, (ho_t + 2) * wo)
    xt = jnp.pad(xt, ((0, 0), (0, 0), (0, 0), (0, 0), (1, 1)))   # -> (..., t_flat)

    kernel = functools.partial(_down_block_kernel, k=k, ho_t=ho_t, wo=wo)

    out_flat = pl.pallas_call(
        kernel,
        out_shape=jax.ShapeDtypeStruct((n, c_out, ho * wo), jnp.float32),
        grid=(n, n_tiles),
        in_specs=[
            pl.BlockSpec((1, 1, k * k, c_in_pad, t_flat), lambda b, s: (b, s, 0, 0, 0)),
            pl.BlockSpec((9, c_out, c_in_pad), lambda b, s: (0, 0, 0)),
            pl.BlockSpec((c_out, 1), lambda b, s: (0, 0)),
        ],
        out_specs=pl.BlockSpec((1, c_out, n_lanes), lambda b, s: (b, 0, s)),
        scratch_shapes=[
            pltpu.VMEM((c_out, n_lanes), jnp.float32),   # per-phase conv accumulator
            pltpu.VMEM((c_out, n_lanes), jnp.float32),   # pooled accumulator
        ],
        compiler_params=pltpu.CompilerParams(
            dimension_semantics=("parallel", "parallel"),
            vmem_limit_bytes=32 * 1024 * 1024,
        ),
    )(xt, w_taps, shift)

    # Output is already compact (C_out, Ho*Wo); this reshape is metadata-only.
    return out_flat.reshape(n, c_out, ho, wo)


# --------------------------- pure-JAX reference ------------------------------
def down_block_reference(x_nchw, w_kio, conv_bias, gamma, beta, run_mean,
                         run_var, eps=1e-5, pool_k=2):
    w_oihw = jnp.transpose(w_kio, (3, 2, 0, 1))
    out = jax.lax.conv_general_dilated(
        x_nchw, w_oihw, window_strides=(1, 1), padding="SAME",
        dimension_numbers=("NCHW", "OIHW", "NCHW"))
    out = out + conv_bias[None, :, None, None]
    out = (gamma[None, :, None, None] * (out - run_mean[None, :, None, None])
           / jnp.sqrt(run_var[None, :, None, None] + eps)
           + beta[None, :, None, None])
    out = jnp.maximum(out, 0.0)
    n, c, hh, ww = out.shape
    out = out.reshape(n, c, hh // pool_k, pool_k, ww // pool_k, pool_k)
    return out.mean(axis=(3, 5))


# ---------------------------------- main -------------------------------------
if __name__ == "__main__":
    N, C_IN, C_OUT, H, W = 2, 4, 8, 16, 16
    POOL_K = 2

    key = jax.random.PRNGKey(0)
    kx, kw, kb, kg, kbe, km, kv = jax.random.split(key, 7)

    x = jax.random.normal(kx, (N, C_IN, H, W), jnp.float32)
    # conv weight in (kh, kw, C_in, C_out) layout
    w = jax.random.normal(kw, (3, 3, C_IN, C_OUT), jnp.float32) * 0.2
    b = jax.random.normal(kb, (C_OUT,), jnp.float32) * 0.1
    gamma = 1.0 + 0.1 * jax.random.normal(kg, (C_OUT,), jnp.float32)
    beta = 0.1 * jax.random.normal(kbe, (C_OUT,), jnp.float32)
    run_mean = 0.1 * jax.random.normal(km, (C_OUT,), jnp.float32)
    run_var = jnp.abs(jax.random.normal(kv, (C_OUT,), jnp.float32)) + 0.5

    out = down_block_pallas(x, w, b, gamma, beta, run_mean, run_var,
                            pool_k=POOL_K)
    out = jax.block_until_ready(out)

    ref = down_block_reference(x, w, b, gamma, beta, run_mean, run_var,
                               pool_k=POOL_K)
    err = float(jnp.max(jnp.abs(out - ref)))
    assert out.shape == (N, C_OUT, H // POOL_K, W // POOL_K), out.shape
    # bf16 MXU operands (weights AND activations) with f32 accumulation.
    assert err < 1e-1, f"max abs err {err}"
    print("KERNEL_OK")
</pallas_src>

<mosaic_0001>
module attributes {stable_mosaic.version = 11 : i64} {
  func.func @_down_block_kernel(%arg0: i32, %arg1: i32, %arg2: memref<1x1x4x16x82xbf16, #tpu.memory_space<vmem>>, %arg3: memref<9x8x16xbf16, #tpu.memory_space<vmem>>, %arg4: memref<8x1xf32, #tpu.memory_space<vmem>>, %arg5: memref<1x8x64xf32, #tpu.memory_space<vmem>>, %arg6: memref<8x64xf32, #tpu.memory_space<vmem>>, %arg7: memref<8x64xf32, #tpu.memory_space<vmem>>) attributes {dimension_semantics = [#tpu.dimension_semantics<parallel>, #tpu.dimension_semantics<parallel>], iteration_bounds = array<i64: 2, 1>, scalar_prefetch = 0 : i64, scratch_operands = 2 : i64, tpu.core_type = #tpu.core_type<tc>, window_params = [{transform_indices = @transform_0, window_bounds = array<i64: 1, 1, 4, 16, 82>}, {pipeline_mode = #tpu.pipeline_mode<synchronous>, transform_indices = @transform_1, window_bounds = array<i64: 9, 8, 16>}, {pipeline_mode = #tpu.pipeline_mode<synchronous>, transform_indices = @transform_2, window_bounds = array<i64: 8, 1>}, {transform_indices = @transform_3, window_bounds = array<i64: 1, 8, 64>}]} {
    %0 = tpu.iota {dimensions = array<i32: 1>} : vector<1x64xi32>
    %c8_i32 = arith.constant 8 : i32
    %c0_i32 = arith.constant 0 : i32
    %1 = arith.cmpi eq, %c8_i32, %c0_i32 : i32
    %c1_i32 = arith.constant 1 : i32
    %2 = arith.select %1, %c1_i32, %c8_i32 : i32
    %3 = vector.broadcast %2 : i32 to vector<1x64xi32>
    %4 = arith.remsi %0, %3 : vector<1x64xi32>
    %c0_i32_0 = arith.constant 0 : i32
    %5 = vector.broadcast %c0_i32_0 : i32 to vector<1x64xi32>
    %6 = arith.cmpi ne, %4, %5 : vector<1x64xi32>
    %c0_i32_1 = arith.constant 0 : i32
    %7 = vector.broadcast %c0_i32_1 : i32 to vector<1x64xi32>
    %8 = arith.cmpi slt, %4, %7 : vector<1x64xi32>
    %c0_i32_2 = arith.constant 0 : i32
    %9 = arith.cmpi slt, %2, %c0_i32_2 : i32
    %10 = vector.broadcast %9 : i1 to vector<1x64xi1>
    %11 = vector.broadcast %10 : vector<1x64xi1> to vector<1x64xi1>
    %12 = arith.xori %8, %11 : vector<1x64xi1>
    %13 = arith.andi %12, %6 : vector<1x64xi1>
    %14 = vector.broadcast %2 : i32 to vector<1x64xi32>
    %15 = arith.addi %4, %14 : vector<1x64xi32>
    %16 = arith.select %13, %15, %4 : vector<1x64xi1>, vector<1x64xi32>
    %c0_i32_3 = arith.constant 0 : i32
    %17 = vector.broadcast %c0_i32_3 : i32 to vector<1x64xi32>
    %18 = arith.cmpi eq, %16, %17 : vector<1x64xi32>
    %c7_i32 = arith.constant 7 : i32
    %19 = vector.broadcast %c7_i32 : i32 to vector<1x64xi32>
    %20 = arith.cmpi eq, %16, %19 : vector<1x64xi32>
    %c0 = arith.constant 0 : index
    %c0_4 = arith.constant 0 : index
    %21 = vector.load %arg4[%c0, %c0_4] : memref<8x1xf32, #tpu.memory_space<vmem>>, vector<8x1xf32>
    %c0_5 = arith.constant 0 : index
    %c0_6 = arith.constant 0 : index
    %c3 = arith.constant 3 : index
    %c0_7 = arith.constant 0 : index
    %c0_8 = arith.constant 0 : index
    %22 = vector.load %arg2[%c0_5, %c0_6, %c3, %c0_7, %c0_8] : memref<1x1x4x16x82xbf16, #tpu.memory_space<vmem>>, vector<1x1x1x16x64xbf16>
    %23 = vector.shape_cast %22 : vector<1x1x1x16x64xbf16> to vector<16x64xbf16>
    %cst = arith.constant 0.000000e+00 : bf16
    %24 = vector.broadcast %cst : bf16 to vector<16x64xbf16>
    %25 = vector.shape_cast %18 : vector<1x64xi1> to vector<1x64xi1>
    %26 = vector.broadcast %25 : vector<1x64xi1> to vector<16x64xi1>
    %27 = arith.select %26, %24, %23 : vector<16x64xi1>, vector<16x64xbf16>
    %c0_9 = arith.constant 0 : index
    %c0_10 = arith.constant 0 : index
    %c0_11 = arith.constant 0 : index
    %28 = vector.load %arg3[%c0_9, %c0_10, %c0_11] : memref<9x8x16xbf16, #tpu.memory_space<vmem>>, vector<1x8x16xbf16>
    %29 = vector.shape_cast %28 : vector<1x8x16xbf16> to vector<8x16xbf16>
    %cst_12 = arith.constant dense<0.000000e+00> : vector<8x64xf32>
    %30 = tpu.matmul %29, %27, %cst_12 {dimension_numbers = #tpu.dot_dimension_numbers<[1], [0], [0], [1], [0, 0, 1, 1], [], []>} : vector<8x16xbf16>, vector<16x64xbf16>, vector<8x64xf32> -> vector<8x64xf32>
    %c0_13 = arith.constant 0 : index
    %c0_14 = arith.constant 0 : index
    %31 = vector.load %arg6[%c0_13, %c0_14] : memref<8x64xf32, #tpu.memory_space<vmem>>, vector<8x64xf32>
    tpu.vector_store %arg6[%c0_13, %c0_14], %30 {strides = array<i32>} : memref<8x64xf32, #tpu.memory_space<vmem>>, vector<8x64xf32>,
    %c0_15 = arith.constant 0 : index
    %c0_16 = arith.constant 0 : index
    %c2 = arith.constant 2 : index
    %c0_17 = arith.constant 0 : index
    %c1 = arith.constant 1 : index
    %32 = vector.load %arg2[%c0_15, %c0_16, %c2, %c0_17, %c1] : memref<1x1x4x16x82xbf16, #tpu.memory_space<vmem>>, vector<1x1x1x16x64xbf16>
    %33 = vector.shape_cast %32 : vector<1x1x1x16x64xbf16> to vector<16x64xbf16>
    %c1_18 = arith.constant 1 : index
    %c0_19 = arith.constant 0 : index
    %c0_20 = arith.constant 0 : index
    %34 = vector.load %arg3[%c1_18, %c0_19, %c0_20] : memref<9x8x16xbf16, #tpu.memory_space<vmem>>, vector<1x8x16xbf16>
    %35 = vector.shape_cast %34 : vector<1x8x16xbf16> to vector<8x16xbf16>
    %cst_21 = arith.constant dense<0.000000e+00> : vector<8x64xf32>
    %36 = tpu.matmul %35, %33, %cst_21 {dimension_numbers = #tpu.dot_dimension_numbers<[1], [0], [0], [1], [0, 0, 1, 1], [], []>} : vector<8x16xbf16>, vector<16x64xbf16>, vector<8x64xf32> -> vector<8x64xf32>
    %c0_22 = arith.constant 0 : index
    %c0_23 = arith.constant 0 : index
    %37 = vector.load %arg6[%c0_22, %c0_23] : memref<8x64xf32, #tpu.memory_space<vmem>>, vector<8x64xf32>
    %38 = arith.addf %37, %36 : vector<8x64xf32>
    %c0_24 = arith.constant 0 : index
    %c0_25 = arith.constant 0 : index
    %39 = vector.load %arg6[%c0_24, %c0_25] : memref<8x64xf32, #tpu.memory_space<vmem>>, vector<8x64xf32>
    tpu.vector_store %arg6[%c0_24, %c0_25], %38 {strides = array<i32>} : memref<8x64xf32, #tpu.memory_space<vmem>>, vector<8x64xf32>,
    %c0_26 = arith.constant 0 : index
    %c0_27 = arith.constant 0 : index
    %c3_28 = arith.constant 3 : index
    %c0_29 = arith.constant 0 : index
    %c1_30 = arith.constant 1 : index
    %40 = vector.load %arg2[%c0_26, %c0_27, %c3_28, %c0_29, %c1_30] : memref<1x1x4x16x82xbf16, #tpu.memory_space<vmem>>, vector<1x1x1x16x64xbf16>
    %41 = vector.shape_cast %40 : vector<1x1x1x16x64xbf16> to vector<16x64xbf16>
    %c2_31 = arith.constant 2 : index
    %c0_32 = arith.constant 0 : index
    %c0_33 = arith.constant 0 : index
    %42 = vector.load %arg3[%c2_31, %c0_32, %c0_33] : memref<9x8x16xbf16, #tpu.memory_space<vmem>>, vector<1x8x16xbf16>
    %43 = vector.shape_cast %42 : vector<1x8x16xbf16> to vector<8x16xbf16>
    %cst_34 = arith.constant dense<0.000000e+00> : vector<8x64xf32>
    %44 = tpu.matmul %43, %41, %cst_34 {dimension_numbers = #tpu.dot_dimension_numbers<[1], [0], [0], [1], [0, 0, 1, 1], [], []>} : vector<8x16xbf16>, vector<16x64xbf16>, vector<8x64xf32> -> vector<8x64xf32>
    %c0_35 = arith.constant 0 : index
    %c0_36 = arith.constant 0 : index
    %45 = vector.load %arg6[%c0_35, %c0_36] : memref<8x64xf32, #tpu.memory_space<vmem>>, vector<8x64xf32>
    %46 = arith.addf %45, %44 : vector<8x64xf32>
    %c0_37 = arith.constant 0 : index
    %c0_38 = arith.constant 0 : index
    %47 = vector.load %arg6[%c0_37, %c0_38] : memref<8x64xf32, #tpu.memory_space<vmem>>, vector<8x64xf32>
    tpu.vector_store %arg6[%c0_37, %c0_38], %46 {strides = array<i32>} : memref<8x64xf32, #tpu.memory_space<vmem>>, vector<8x64xf32>,
    %c0_39 = arith.constant 0 : index
    %c0_40 = arith.constant 0 : index
    %c1_41 = arith.constant 1 : index
    %c0_42 = arith.constant 0 : index
    %c8 = arith.constant 8 : index
    %48 = vector.load %arg2[%c0_39, %c0_40, %c1_41, %c0_42, %c8] : memref<1x1x4x16x82xbf16, #tpu.memory_space<vmem>>, vector<1x1x1x16x64xbf16>
    %49 = vector.shape_cast %48 : vector<1x1x1x16x64xbf16> to vector<16x64xbf16>
    %cst_43 = arith.constant 0.000000e+00 : bf16
    %50 = vector.broadcast %cst_43 : bf16 to vector<16x64xbf16>
    %51 = vector.shape_cast %18 : vector<1x64xi1> to vector<1x64xi1>
    %52 = vector.broadcast %51 : vector<1x64xi1> to vector<16x64xi1>
    %53 = arith.select %52, %50, %49 : vector<16x64xi1>, vector<16x64xbf16>
    %c3_44 = arith.constant 3 : index
    %c0_45 = arith.constant 0 : index
    %c0_46 = arith.constant 0 : index
    %54 = vector.load %arg3[%c3_44, %c0_45, %c0_46] : memref<9x8x16xbf16, #tpu.memory_space<vmem>>, vector<1x8x16xbf16>
    %55 = vector.shape_cast %54 : vector<1x8x16xbf16> to vector<8x16xbf16>
    %cst_47 = arith.constant dense<0.000000e+00> : vector<8x64xf32>
    %56 = tpu.matmul %55, %53, %cst_47 {dimension_numbers = #tpu.dot_dimension_numbers<[1], [0], [0], [1], [0, 0, 1, 1], [], []>} : vector<8x16xbf16>, vector<16x64xbf16>, vector<8x64xf32> -> vector<8x64xf32>
    %c0_48 = arith.constant 0 : index
    %c0_49 = arith.constant 0 : index
    %57 = vector.load %arg6[%c0_48, %c0_49] : memref<8x64xf32, #tpu.memory_space<vmem>>, vector<8x64xf32>
    %58 = arith.addf %57, %56 : vector<8x64xf32>
    %c0_50 = arith.constant 0 : index
    %c0_51 = arith.constant 0 : index
    %59 = vector.load %arg6[%c0_50, %c0_51] : memref<8x64xf32, #tpu.memory_space<vmem>>, vector<8x64xf32>
    tpu.vector_store %arg6[%c0_50, %c0_51], %58 {strides = array<i32>} : memref<8x64xf32, #tpu.memory_space<vmem>>, vector<8x64xf32>,
    %c0_52 = arith.constant 0 : index
    %c0_53 = arith.constant 0 : index
    %c0_54 = arith.constant 0 : index
    %c0_55 = arith.constant 0 : index
    %c9 = arith.constant 9 : index
    %60 = vector.load %arg2[%c0_52, %c0_53, %c0_54, %c0_55, %c9] : memref<1x1x4x16x82xbf16, #tpu.memory_space<vmem>>, vector<1x1x1x16x64xbf16>
    %61 = vector.shape_cast %60 : vector<1x1x1x16x64xbf16> to vector<16x64xbf16>
    %c4 = arith.constant 4 : index
    %c0_56 = arith.constant 0 : index
    %c0_57 = arith.constant 0 : index
    %62 = vector.load %arg3[%c4, %c0_56, %c0_57] : memref<9x8x16xbf16, #tpu.memory_space<vmem>>, vector<1x8x16xbf16>
    %63 = vector.shape_cast %62 : vector<1x8x16xbf16> to vector<8x16xbf16>
    %cst_58 = arith.constant dense<0.000000e+00> : vector<8x64xf32>
    %64 = tpu.matmul %63, %61, %cst_58 {dimension_numbers = #tpu.dot_dimension_numbers<[1], [0], [0], [1], [0, 0, 1, 1], [], []>} : vector<8x16xbf16>, vector<16x64xbf16>, vector<8x64xf32> -> vector<8x64xf32>
    %c0_59 = arith.constant 0 : index
    %c0_60 = arith.constant 0 : index
    %65 = vector.load %arg6[%c0_59, %c0_60] : memref<8x64xf32, #tpu.memory_space<vmem>>, vector<8x64xf32>
    %66 = arith.addf %65, %64 : vector<8x64xf32>
    %c0_61 = arith.constant 0 : index
    %c0_62 = arith.constant 0 : index
    %67 = vector.load %arg6[%c0_61, %c0_62] : memref<8x64xf32, #tpu.memory_space<vmem>>, vector<8x64xf32>
    tpu.vector_store %arg6[%c0_61, %c0_62], %66 {strides = array<i32>} : memref<8x64xf32, #tpu.memory_space<vmem>>, vector<8x64xf32>,
    %c0_63 = arith.constant 0 : index
    %c0_64 = arith.constant 0 : index
    %c1_65 = arith.constant 1 : index
    %c0_66 = arith.constant 0 : index
    %c9_67 = arith.constant 9 : index
    %68 = vector.load %arg2[%c0_63, %c0_64, %c1_65, %c0_66, %c9_67] : memref<1x1x4x16x82xbf16, #tpu.memory_space<vmem>>, vector<1x1x1x16x64xbf16>
    %69 = vector.shape_cast %68 : vector<1x1x1x16x64xbf16> to vector<16x64xbf16>
    %c5 = arith.constant 5 : index
    %c0_68 = arith.constant 0 : index
    %c0_69 = arith.constant 0 : index
    %70 = vector.load %arg3[%c5, %c0_68, %c0_69] : memref<9x8x16xbf16, #tpu.memory_space<vmem>>, vector<1x8x16xbf16>
    %71 = vector.shape_cast %70 : vector<1x8x16xbf16> to vector<8x16xbf16>
    %cst_70 = arith.constant dense<0.000000e+00> : vector<8x64xf32>
    %72 = tpu.matmul %71, %69, %cst_70 {dimension_numbers = #tpu.dot_dimension_numbers<[1], [0], [0], [1], [0, 0, 1, 1], [], []>} : vector<8x16xbf16>, vector<16x64xbf16>, vector<8x64xf32> -> vector<8x64xf32>
    %c0_71 = arith.constant 0 : index
    %c0_72 = arith.constant 0 : index
    %73 = vector.load %arg6[%c0_71, %c0_72] : memref<8x64xf32, #tpu.memory_space<vmem>>, vector<8x64xf32>
    %74 = arith.addf %73, %72 : vector<8x64xf32>
    %c0_73 = arith.constant 0 : index
    %c0_74 = arith.constant 0 : index
    %75 = vector.load %arg6[%c0_73, %c0_74] : memref<8x64xf32, #tpu.memory_space<vmem>>, vector<8x64xf32>
    tpu.vector_store %arg6[%c0_73, %c0_74], %74 {strides = array<i32>} : memref<8x64xf32, #tpu.memory_space<vmem>>, vector<8x64xf32>,
    %c0_75 = arith.constant 0 : index
    %c0_76 = arith.constant 0 : index
    %c3_77 = arith.constant 3 : index
    %c0_78 = arith.constant 0 : index
    %c8_79 = arith.constant 8 : index
    %76 = vector.load %arg2[%c0_75, %c0_76, %c3_77, %c0_78, %c8_79] : memref<1x1x4x16x82xbf16, #tpu.memory_space<vmem>>, vector<1x1x1x16x64xbf16>
    %77 = vector.shape_cast %76 : vector<1x1x1x16x64xbf16> to vector<16x64xbf16>
    %cst_80 = arith.constant 0.000000e+00 : bf16
    %78 = vector.broadcast %cst_80 : bf16 to vector<16x64xbf16>
    %79 = vector.shape_cast %18 : vector<1x64xi1> to vector<1x64xi1>
    %80 = vector.broadcast %79 : vector<1x64xi1> to vector<16x64xi1>
    %81 = arith.select %80, %78, %77 : vector<16x64xi1>, vector<16x64xbf16>
    %c6 = arith.constant 6 : index
    %c0_81 = arith.constant 0 : index
    %c0_82 = arith.constant 0 : index
    %82 = vector.load %arg3[%c6, %c0_81, %c0_82] : memref<9x8x16xbf16, #tpu.memory_space<vmem>>, vector<1x8x16xbf16>
    %83 = vector.shape_cast %82 : vector<1x8x16xbf16> to vector<8x16xbf16>
    %cst_83 = arith.constant dense<0.000000e+00> : vector<8x64xf32>
    %84 = tpu.matmul %83, %81, %cst_83 {dimension_numbers = #tpu.dot_dimension_numbers<[1], [0], [0], [1], [0, 0, 1, 1], [], []>} : vector<8x16xbf16>, vector<16x64xbf16>, vector<8x64xf32> -> vector<8x64xf32>
    %c0_84 = arith.constant 0 : index
    %c0_85 = arith.constant 0 : index
    %85 = vector.load %arg6[%c0_84, %c0_85] : memref<8x64xf32, #tpu.memory_space<vmem>>, vector<8x64xf32>
    %86 = arith.addf %85, %84 : vector<8x64xf32>
    %c0_86 = arith.constant 0 : index
    %c0_87 = arith.constant 0 : index
    %87 = vector.load %arg6[%c0_86, %c0_87] : memref<8x64xf32, #tpu.memory_space<vmem>>, vector<8x64xf32>
    tpu.vector_store %arg6[%c0_86, %c0_87], %86 {strides = array<i32>} : memref<8x64xf32, #tpu.memory_space<vmem>>, vector<8x64xf32>,
    %c0_88 = arith.constant 0 : index
    %c0_89 = arith.constant 0 : index
    %c2_90 = arith.constant 2 : index
    %c0_91 = arith.constant 0 : index
    %c9_92 = arith.constant 9 : index
    %88 = vector.load %arg2[%c0_88, %c0_89, %c2_90, %c0_91, %c9_92] : memref<1x1x4x16x82xbf16, #tpu.memory_space<vmem>>, vector<1x1x1x16x64xbf16>
    %89 = vector.shape_cast %88 : vector<1x1x1x16x64xbf16> to vector<16x64xbf16>
    %c7 = arith.constant 7 : index
    %c0_93 = arith.constant 0 : index
    %c0_94 = arith.constant 0 : index
    %90 = vector.load %arg3[%c7, %c0_93, %c0_94] : memref<9x8x16xbf16, #tpu.memory_space<vmem>>, vector<1x8x16xbf16>
    %91 = vector.shape_cast %90 : vector<1x8x16xbf16> to vector<8x16xbf16>
    %cst_95 = arith.constant dense<0.000000e+00> : vector<8x64xf32>
    %92 = tpu.matmul %91, %89, %cst_95 {dimension_numbers = #tpu.dot_dimension_numbers<[1], [0], [0], [1], [0, 0, 1, 1], [], []>} : vector<8x16xbf16>, vector<16x64xbf16>, vector<8x64xf32> -> vector<8x64xf32>
    %c0_96 = arith.constant 0 : index
    %c0_97 = arith.constant 0 : index
    %93 = vector.load %arg6[%c0_96, %c0_97] : memref<8x64xf32, #tpu.memory_space<vmem>>, vector<8x64xf32>
    %94 = arith.addf %93, %92 : vector<8x64xf32>
    %c0_98 = arith.constant 0 : index
    %c0_99 = arith.constant 0 : index
    %95 = vector.load %arg6[%c0_98, %c0_99] : memref<8x64xf32, #tpu.memory_space<vmem>>, vector<8x64xf32>
    tpu.vector_store %arg6[%c0_98, %c0_99], %94 {strides = array<i32>} : memref<8x64xf32, #tpu.memory_space<vmem>>, vector<8x64xf32>,
    %c0_100 = arith.constant 0 : index
    %c0_101 = arith.constant 0 : index
    %c3_102 = arith.constant 3 : index
    %c0_103 = arith.constant 0 : index
    %c9_104 = arith.constant 9 : index
    %96 = vector.load %arg2[%c0_100, %c0_101, %c3_102, %c0_103, %c9_104] : memref<1x1x4x16x82xbf16, #tpu.memory_space<vmem>>, vector<1x1x1x16x64xbf16>
    %97 = vector.shape_cast %96 : vector<1x1x1x16x64xbf16> to vector<16x64xbf16>
    %c8_105 = arith.constant 8 : index
    %c0_106 = arith.constant 0 : index
    %c0_107 = arith.constant 0 : index
    %98 = vector.load %arg3[%c8_105, %c0_106, %c0_107] : memref<9x8x16xbf16, #tpu.memory_space<vmem>>, vector<1x8x16xbf16>
    %99 = vector.shape_cast %98 : vector<1x8x16xbf16> to vector<8x16xbf16>
    %cst_108 = arith.constant dense<0.000000e+00> : vector<8x64xf32>
    %100 = tpu.matmul %99, %97, %cst_108 {dimension_numbers = #tpu.dot_dimension_numbers<[1], [0], [0], [1], [0, 0, 1, 1], [], []>} : vector<8x16xbf16>, vector<16x64xbf16>, vector<8x64xf32> -> vector<8x64xf32>
    %c0_109 = arith.constant 0 : index
    %c0_110 = arith.constant 0 : index
    %101 = vector.load %arg6[%c0_109, %c0_110] : memref<8x64xf32, #tpu.memory_space<vmem>>, vector<8x64xf32>
    %102 = arith.addf %101, %100 : vector<8x64xf32>
    %c0_111 = arith.constant 0 : index
    %c0_112 = arith.constant 0 : index
    %103 = vector.load %arg6[%c0_111, %c0_112] : memref<8x64xf32, #tpu.memory_space<vmem>>, vector<8x64xf32>
    tpu.vector_store %arg6[%c0_111, %c0_112], %102 {strides = array<i32>} : memref<8x64xf32, #tpu.memory_space<vmem>>, vector<8x64xf32>,
    %c0_113 = arith.constant 0 : index
    %c0_114 = arith.constant 0 : index
    %104 = vector.load %arg6[%c0_113, %c0_114] : memref<8x64xf32, #tpu.memory_space<vmem>>, vector<8x64xf32>
    %105 = vector.broadcast %21 : vector<8x1xf32> to vector<8x64xf32>
    %106 = arith.addf %104, %105 : vector<8x64xf32>
    %cst_115 = arith.constant 0.000000e+00 : f32
    %107 = vector.broadcast %cst_115 : f32 to vector<8x64xf32>
    %108 = arith.maximumf %106, %107 : vector<8x64xf32>
    %c0_116 = arith.constant 0 : index
    %c0_117 = arith.constant 0 : index
    %109 = vector.load %arg7[%c0_116, %c0_117] : memref<8x64xf32, #tpu.memory_space<vmem>>, vector<8x64xf32>
    tpu.vector_store %arg7[%c0_116, %c0_117], %108 {strides = array<i32>} : memref<8x64xf32, #tpu.memory_space<vmem>>, vector<8x64xf32>,
    %c0_118 = arith.constant 0 : index
    %c0_119 = arith.constant 0 : index
    %c2_120 = arith.constant 2 : index
    %c0_121 = arith.constant 0 : index
    %c1_122 = arith.constant 1 : index
    %110 = vector.load %arg2[%c0_118, %c0_119, %c2_120, %c0_121, %c1_122] : memref<1x1x4x16x82xbf16, #tpu.memory_space<vmem>>, vector<1x1x1x16x64xbf16>
    %111 = vector.shape_cast %110 : vector<1x1x1x16x64xbf16> to vector<16x64xbf16>
    %c0_123 = arith.constant 0 : index
    %c0_124 = arith.constant 0 : index
    %c0_125 = arith.constant 0 : index
    %112 = vector.load %arg3[%c0_123, %c0_124, %c0_125] : memref<9x8x16xbf16, #tpu.memory_space<vmem>>, vector<1x8x16xbf16>
    %113 = vector.shape_cast %112 : vector<1x8x16xbf16> to vector<8x16xbf16>
    %cst_126 = arith.constant dense<0.000000e+00> : vector<8x64xf32>
    %114 = tpu.matmul %113, %111, %cst_126 {dimension_numbers = #tpu.dot_dimension_numbers<[1], [0], [0], [1], [0, 0, 1, 1], [], []>} : vector<8x16xbf16>, vector<16x64xbf16>, vector<8x64xf32> -> vector<8x64xf32>
    %c0_127 = arith.constant 0 : index
    %c0_128 = arith.constant 0 : index
    %115 = vector.load %arg6[%c0_127, %c0_128] : memref<8x64xf32, #tpu.memory_space<vmem>>, vector<8x64xf32>
    tpu.vector_store %arg6[%c0_127, %c0_128], %114 {strides = array<i32>} : memref<8x64xf32, #tpu.memory_space<vmem>>, vector<8x64xf32>,
    %c0_129 = arith.constant 0 : index
    %c0_130 = arith.constant 0 : index
    %c3_131 = arith.constant 3 : index
    %c0_132 = arith.constant 0 : index
    %c1_133 = arith.constant 1 : index
    %116 = vector.load %arg2[%c0_129, %c0_130, %c3_131, %c0_132, %c1_133] : memref<1x1x4x16x82xbf16, #tpu.memory_space<vmem>>, vector<1x1x1x16x64xbf16>
    %117 = vector.shape_cast %116 : vector<1x1x1x16x64xbf16> to vector<16x64xbf16>
    %c1_134 = arith.constant 1 : index
    %c0_135 = arith.constant 0 : index
    %c0_136 = arith.constant 0 : index
    %118 = vector.load %arg3[%c1_134, %c0_135, %c0_136] : memref<9x8x16xbf16, #tpu.memory_space<vmem>>, vector<1x8x16xbf16>
    %119 = vector.shape_cast %118 : vector<1x8x16xbf16> to vector<8x16xbf16>
    %cst_137 = arith.constant dense<0.000000e+00> : vector<8x64xf32>
    %120 = tpu.matmul %119, %117, %cst_137 {dimension_numbers = #tpu.dot_dimension_numbers<[1], [0], [0], [1], [0, 0, 1, 1], [], []>} : vector<8x16xbf16>, vector<16x64xbf16>, vector<8x64xf32> -> vector<8x64xf32>
    %c0_138 = arith.constant 0 : index
    %c0_139 = arith.constant 0 : index
    %121 = vector.load %arg6[%c0_138, %c0_139] : memref<8x64xf32, #tpu.memory_space<vmem>>, vector<8x64xf32>
    %122 = arith.addf %121, %120 : vector<8x64xf32>
    %c0_140 = arith.constant 0 : index
    %c0_141 = arith.constant 0 : index
    %123 = vector.load %arg6[%c0_140, %c0_141] : memref<8x64xf32, #tpu.memory_space<vmem>>, vector<8x64xf32>
    tpu.vector_store %arg6[%c0_140, %c0_141], %122 {strides = array<i32>} : memref<8x64xf32, #tpu.memory_space<vmem>>, vector<8x64xf32>,
    %c0_142 = arith.constant 0 : index
    %c0_143 = arith.constant 0 : index
    %c2_144 = arith.constant 2 : index
    %c0_145 = arith.constant 0 : index
    %c2_146 = arith.constant 2 : index
    %124 = vector.load %arg2[%c0_142, %c0_143, %c2_144, %c0_145, %c2_146] : memref<1x1x4x16x82xbf16, #tpu.memory_space<vmem>>, vector<1x1x1x16x64xbf16>
    %125 = vector.shape_cast %124 : vector<1x1x1x16x64xbf16> to vector<16x64xbf16>
    %cst_147 = arith.constant 0.000000e+00 : bf16
    %126 = vector.broadcast %cst_147 : bf16 to vector<16x64xbf16>
    %127 = vector.shape_cast %20 : vector<1x64xi1> to vector<1x64xi1>
    %128 = vector.broadcast %127 : vector<1x64xi1> to vector<16x64xi1>
    %129 = arith.select %128, %126, %125 : vector<16x64xi1>, vector<16x64xbf16>
    %c2_148 = arith.constant 2 : index
    %c0_149 = arith.constant 0 : index
    %c0_150 = arith.constant 0 : index
    %130 = vector.load %arg3[%c2_148, %c0_149, %c0_150] : memref<9x8x16xbf16, #tpu.memory_space<vmem>>, vector<1x8x16xbf16>
    %131 = vector.shape_cast %130 : vector<1x8x16xbf16> to vector<8x16xbf16>
    %cst_151 = arith.constant dense<0.000000e+00> : vector<8x64xf32>
    %132 = tpu.matmul %131, %129, %cst_151 {dimension_numbers = #tpu.dot_dimension_numbers<[1], [0], [0], [1], [0, 0, 1, 1], [], []>} : vector<8x16xbf16>, vector<16x64xbf16>, vector<8x64xf32> -> vector<8x64xf32>
    %c0_152 = arith.constant 0 : index
    %c0_153 = arith.constant 0 : index
    %133 = vector.load %arg6[%c0_152, %c0_153] : memref<8x64xf32, #tpu.memory_space<vmem>>, vector<8x64xf32>
    %134 = arith.addf %133, %132 : vector<8x64xf32>
    %c0_154 = arith.constant 0 : index
    %c0_155 = arith.constant 0 : index
    %135 = vector.load %arg6[%c0_154, %c0_155] : memref<8x64xf32, #tpu.memory_space<vmem>>, vector<8x64xf32>
    tpu.vector_store %arg6[%c0_154, %c0_155], %134 {strides = array<i32>} : memref<8x64xf32, #tpu.memory_space<vmem>>, vector<8x64xf32>,
    %c0_156 = arith.constant 0 : index
    %c0_157 = arith.constant 0 : index
    %c0_158 = arith.constant 0 : index
    %c0_159 = arith.constant 0 : index
    %c9_160 = arith.constant 9 : index
    %136 = vector.load %arg2[%c0_156, %c0_157, %c0_158, %c0_159, %c9_160] : memref<1x1x4x16x82xbf16, #tpu.memory_space<vmem>>, vector<1x1x1x16x64xbf16>
    %137 = vector.shape_cast %136 : vector<1x1x1x16x64xbf16> to vector<16x64xbf16>
    %c3_161 = arith.constant 3 : index
    %c0_162 = arith.constant 0 : index
    %c0_163 = arith.constant 0 : index
    %138 = vector.load %arg3[%c3_161, %c0_162, %c0_163] : memref<9x8x16xbf16, #tpu.memory_space<vmem>>, vector<1x8x16xbf16>
    %139 = vector.shape_cast %138 : vector<1x8x16xbf16> to vector<8x16xbf16>
    %cst_164 = arith.constant dense<0.000000e+00> : vector<8x64xf32>
    %140 = tpu.matmul %139, %137, %cst_164 {dimension_numbers = #tpu.dot_dimension_numbers<[1], [0], [0], [1], [0, 0, 1, 1], [], []>} : vector<8x16xbf16>, vector<16x64xbf16>, vector<8x64xf32> -> vector<8x64xf32>
    %c0_165 = arith.constant 0 : index
    %c0_166 = arith.constant 0 : index
    %141 = vector.load %arg6[%c0_165, %c0_166] : memref<8x64xf32, #tpu.memory_space<vmem>>, vector<8x64xf32>
    %142 = arith.addf %141, %140 : vector<8x64xf32>
    %c0_167 = arith.constant 0 : index
    %c0_168 = arith.constant 0 : index
    %143 = vector.load %arg6[%c0_167, %c0_168] : memref<8x64xf32, #tpu.memory_space<vmem>>, vector<8x64xf32>
    tpu.vector_store %arg6[%c0_167, %c0_168], %142 {strides = array<i32>} : memref<8x64xf32, #tpu.memory_space<vmem>>, vector<8x64xf32>,
    %c0_169 = arith.constant 0 : index
    %c0_170 = arith.constant 0 : index
    %c1_171 = arith.constant 1 : index
    %c0_172 = arith.constant 0 : index
    %c9_173 = arith.constant 9 : index
    %144 = vector.load %arg2[%c0_169, %c0_170, %c1_171, %c0_172, %c9_173] : memref<1x1x4x16x82xbf16, #tpu.memory_space<vmem>>, vector<1x1x1x16x64xbf16>
    %145 = vector.shape_cast %144 : vector<1x1x1x16x64xbf16> to vector<16x64xbf16>
    %c4_174 = arith.constant 4 : index
    %c0_175 = arith.constant 0 : index
    %c0_176 = arith.constant 0 : index
    %146 = vector.load %arg3[%c4_174, %c0_175, %c0_176] : memref<9x8x16xbf16, #tpu.memory_space<vmem>>, vector<1x8x16xbf16>
    %147 = vector.shape_cast %146 : vector<1x8x16xbf16> to vector<8x16xbf16>
    %cst_177 = arith.constant dense<0.000000e+00> : vector<8x64xf32>
    %148 = tpu.matmul %147, %145, %cst_177 {dimension_numbers = #tpu.dot_dimension_numbers<[1], [0], [0], [1], [0, 0, 1, 1], [], []>} : vector<8x16xbf16>, vector<16x64xbf16>, vector<8x64xf32> -> vector<8x64xf32>
    %c0_178 = arith.constant 0 : index
    %c0_179 = arith.constant 0 : index
    %149 = vector.load %arg6[%c0_178, %c0_179] : memref<8x64xf32, #tpu.memory_space<vmem>>, vector<8x64xf32>
    %150 = arith.addf %149, %148 : vector<8x64xf32>
    %c0_180 = arith.constant 0 : index
    %c0_181 = arith.constant 0 : index
    %151 = vector.load %arg6[%c0_180, %c0_181] : memref<8x64xf32, #tpu.memory_space<vmem>>, vector<8x64xf32>
    tpu.vector_store %arg6[%c0_180, %c0_181], %150 {strides = array<i32>} : memref<8x64xf32, #tpu.memory_space<vmem>>, vector<8x64xf32>,
    %c0_182 = arith.constant 0 : index
    %c0_183 = arith.constant 0 : index
    %c0_184 = arith.constant 0 : index
    %c0_185 = arith.constant 0 : index
    %c10 = arith.constant 10 : index
    %152 = vector.load %arg2[%c0_182, %c0_183, %c0_184, %c0_185, %c10] : memref<1x1x4x16x82xbf16, #tpu.memory_space<vmem>>, vector<1x1x1x16x64xbf16>
    %153 = vector.shape_cast %152 : vector<1x1x1x16x64xbf16> to vector<16x64xbf16>
    %cst_186 = arith.constant 0.000000e+00 : bf16
    %154 = vector.broadcast %cst_186 : bf16 to vector<16x64xbf16>
    %155 = vector.shape_cast %20 : vector<1x64xi1> to vector<1x64xi1>
    %156 = vector.broadcast %155 : vector<1x64xi1> to vector<16x64xi1>
    %157 = arith.select %156, %154, %153 : vector<16x64xi1>, vector<16x64xbf16>
    %c5_187 = arith.constant 5 : index
    %c0_188 = arith.constant 0 : index
    %c0_189 = arith.constant 0 : index
    %158 = vector.load %arg3[%c5_187, %c0_188, %c0_189] : memref<9x8x16xbf16, #tpu.memory_space<vmem>>, vector<1x8x16xbf16>
    %159 = vector.shape_cast %158 : vector<1x8x16xbf16> to vector<8x16xbf16>
    %cst_190 = arith.constant dense<0.000000e+00> : vector<8x64xf32>
    %160 = tpu.matmul %159, %157, %cst_190 {dimension_numbers = #tpu.dot_dimension_numbers<[1], [0], [0], [1], [0, 0, 1, 1], [], []>} : vector<8x16xbf16>, vector<16x64xbf16>, vector<8x64xf32> -> vector<8x64xf32>
    %c0_191 = arith.constant 0 : index
    %c0_192 = arith.constant 0 : index
    %161 = vector.load %arg6[%c0_191, %c0_192] : memref<8x64xf32, #tpu.memory_space<vmem>>, vector<8x64xf32>
    %162 = arith.addf %161, %160 : vector<8x64xf32>
    %c0_193 = arith.constant 0 : index
    %c0_194 = arith.constant 0 : index
    %163 = vector.load %arg6[%c0_193, %c0_194] : memref<8x64xf32, #tpu.memory_space<vmem>>, vector<8x64xf32>
    tpu.vector_store %arg6[%c0_193, %c0_194], %162 {strides = array<i32>} : memref<8x64xf32, #tpu.memory_space<vmem>>, vector<8x64xf32>,
    %c0_195 = arith.constant 0 : index
    %c0_196 = arith.constant 0 : index
    %c2_197 = arith.constant 2 : index
    %c0_198 = arith.constant 0 : index
    %c9_199 = arith.constant 9 : index
    %164 = vector.load %arg2[%c0_195, %c0_196, %c2_197, %c0_198, %c9_199] : memref<1x1x4x16x82xbf16, #tpu.memory_space<vmem>>, vector<1x1x1x16x64xbf16>
    %165 = vector.shape_cast %164 : vector<1x1x1x16x64xbf16> to vector<16x64xbf16>
    %c6_200 = arith.constant 6 : index
    %c0_201 = arith.constant 0 : index
    %c0_202 = arith.constant 0 : index
    %166 = vector.load %arg3[%c6_200, %c0_201, %c0_202] : memref<9x8x16xbf16, #tpu.memory_space<vmem>>, vector<1x8x16xbf16>
    %167 = vector.shape_cast %166 : vector<1x8x16xbf16> to vector<8x16xbf16>
    %cst_203 = arith.constant dense<0.000000e+00> : vector<8x64xf32>
    %168 = tpu.matmul %167, %165, %cst_203 {dimension_numbers = #tpu.dot_dimension_numbers<[1], [0], [0], [1], [0, 0, 1, 1], [], []>} : vector<8x16xbf16>, vector<16x64xbf16>, vector<8x64xf32> -> vector<8x64xf32>
    %c0_204 = arith.constant 0 : index
    %c0_205 = arith.constant 0 : index
    %169 = vector.load %arg6[%c0_204, %c0_205] : memref<8x64xf32, #tpu.memory_space<vmem>>, vector<8x64xf32>
    %170 = arith.addf %169, %168 : vector<8x64xf32>
    %c0_206 = arith.constant 0 : index
    %c0_207 = arith.constant 0 : index
    %171 = vector.load %arg6[%c0_206, %c0_207] : memref<8x64xf32, #tpu.memory_space<vmem>>, vector<8x64xf32>
    tpu.vector_store %arg6[%c0_206, %c0_207], %170 {strides = array<i32>} : memref<8x64xf32, #tpu.memory_space<vmem>>, vector<8x64xf32>,
    %c0_208 = arith.constant 0 : index
    %c0_209 = arith.constant 0 : index
    %c3_210 = arith.constant 3 : index
    %c0_211 = arith.constant 0 : index
    %c9_212 = arith.constant 9 : index
    %172 = vector.load %arg2[%c0_208, %c0_209, %c3_210, %c0_211, %c9_212] : memref<1x1x4x16x82xbf16, #tpu.memory_space<vmem>>, vector<1x1x1x16x64xbf16>
    %173 = vector.shape_cast %172 : vector<1x1x1x16x64xbf16> to vector<16x64xbf16>
    %c7_213 = arith.constant 7 : index
    %c0_214 = arith.constant 0 : index
    %c0_215 = arith.constant 0 : index
    %174 = vector.load %arg3[%c7_213, %c0_214, %c0_215] : memref<9x8x16xbf16, #tpu.memory_space<vmem>>, vector<1x8x16xbf16>
    %175 = vector.shape_cast %174 : vector<1x8x16xbf16> to vector<8x16xbf16>
    %cst_216 = arith.constant dense<0.000000e+00> : vector<8x64xf32>
    %176 = tpu.matmul %175, %173, %cst_216 {dimension_numbers = #tpu.dot_dimension_numbers<[1], [0], [0], [1], [0, 0, 1, 1], [], []>} : vector<8x16xbf16>, vector<16x64xbf16>, vector<8x64xf32> -> vector<8x64xf32>
    %c0_217 = arith.constant 0 : index
    %c0_218 = arith.constant 0 : index
    %177 = vector.load %arg6[%c0_217, %c0_218] : memref<8x64xf32, #tpu.memory_space<vmem>>, vector<8x64xf32>
    %178 = arith.addf %177, %176 : vector<8x64xf32>
    %c0_219 = arith.constant 0 : index
    %c0_220 = arith.constant 0 : index
    %179 = vector.load %arg6[%c0_219, %c0_220] : memref<8x64xf32, #tpu.memory_space<vmem>>, vector<8x64xf32>
    tpu.vector_store %arg6[%c0_219, %c0_220], %178 {strides = array<i32>} : memref<8x64xf32, #tpu.memory_space<vmem>>, vector<8x64xf32>,
    %c0_221 = arith.constant 0 : index
    %c0_222 = arith.constant 0 : index
    %c2_223 = arith.constant 2 : index
    %c0_224 = arith.constant 0 : index
    %c10_225 = arith.constant 10 : index
    %180 = vector.load %arg2[%c0_221, %c0_222, %c2_223, %c0_224, %c10_225] : memref<1x1x4x16x82xbf16, #tpu.memory_space<vmem>>, vector<1x1x1x16x64xbf16>
    %181 = vector.shape_cast %180 : vector<1x1x1x16x64xbf16> to vector<16x64xbf16>
    %cst_226 = arith.constant 0.000000e+00 : bf16
    %182 = vector.broadcast %cst_226 : bf16 to vector<16x64xbf16>
    %183 = vector.shape_cast %20 : vector<1x64xi1> to vector<1x64xi1>
    %184 = vector.broadcast %183 : vector<1x64xi1> to vector<16x64xi1>
    %185 = arith.select %184, %182, %181 : vector<16x64xi1>, vector<16x64xbf16>
    %c8_227 = arith.constant 8 : index
    %c0_228 = arith.constant 0 : index
    %c0_229 = arith.constant 0 : index
    %186 = vector.load %arg3[%c8_227, %c0_228, %c0_229] : memref<9x8x16xbf16, #tpu.memory_space<vmem>>, vector<1x8x16xbf16>
    %187 = vector.shape_cast %186 : vector<1x8x16xbf16> to vector<8x16xbf16>
    %cst_230 = arith.constant dense<0.000000e+00> : vector<8x64xf32>
    %188 = tpu.matmul %187, %185, %cst_230 {dimension_numbers = #tpu.dot_dimension_numbers<[1], [0], [0], [1], [0, 0, 1, 1], [], []>} : vector<8x16xbf16>, vector<16x64xbf16>, vector<8x64xf32> -> vector<8x64xf32>
    %c0_231 = arith.constant 0 : index
    %c0_232 = arith.constant 0 : index
    %189 = vector.load %arg6[%c0_231, %c0_232] : memref<8x64xf32, #tpu.memory_space<vmem>>, vector<8x64xf32>
    %190 = arith.addf %189, %188 : vector<8x64xf32>
    %c0_233 = arith.constant 0 : index
    %c0_234 = arith.constant 0 : index
    %191 = vector.load %arg6[%c0_233, %c0_234] : memref<8x64xf32, #tpu.memory_space<vmem>>, vector<8x64xf32>
    tpu.vector_store %arg6[%c0_233, %c0_234], %190 {strides = array<i32>} : memref<8x64xf32, #tpu.memory_space<vmem>>, vector<8x64xf32>,
    %c0_235 = arith.constant 0 : index
    %c0_236 = arith.constant 0 : index
    %192 = vector.load %arg6[%c0_235, %c0_236] : memref<8x64xf32, #tpu.memory_space<vmem>>, vector<8x64xf32>
    %193 = vector.broadcast %21 : vector<8x1xf32> to vector<8x64xf32>
    %194 = arith.addf %192, %193 : vector<8x64xf32>
    %cst_237 = arith.constant 0.000000e+00 : f32
    %195 = vector.broadcast %cst_237 : f32 to vector<8x64xf32>
    %196 = arith.maximumf %194, %195 : vector<8x64xf32>
    %c0_238 = arith.constant 0 : index
    %c0_239 = arith.constant 0 : index
    %197 = vector.load %arg7[%c0_238, %c0_239] : memref<8x64xf32, #tpu.memory_space<vmem>>, vector<8x64xf32>
    %198 = arith.addf %197, %196 : vector<8x64xf32>
    %c0_240 = arith.constant 0 : index
    %c0_241 = arith.constant 0 : index
    %199 = vector.load %arg7[%c0_240, %c0_241] : memref<8x64xf32, #tpu.memory_space<vmem>>, vector<8x64xf32>
    tpu.vector_store %arg7[%c0_240, %c0_241], %198 {strides = array<i32>} : memref<8x64xf32, #tpu.memory_space<vmem>>, vector<8x64xf32>,
    %c0_242 = arith.constant 0 : index
    %c0_243 = arith.constant 0 : index
    %c1_244 = arith.constant 1 : index
    %c0_245 = arith.constant 0 : index
    %c8_246 = arith.constant 8 : index
    %200 = vector.load %arg2[%c0_242, %c0_243, %c1_244, %c0_245, %c8_246] : memref<1x1x4x16x82xbf16, #tpu.memory_space<vmem>>, vector<1x1x1x16x64xbf16>
    %201 = vector.shape_cast %200 : vector<1x1x1x16x64xbf16> to vector<16x64xbf16>
    %cst_247 = arith.constant 0.000000e+00 : bf16
    %202 = vector.broadcast %cst_247 : bf16 to vector<16x64xbf16>
    %203 = vector.shape_cast %18 : vector<1x64xi1> to vector<1x64xi1>
    %204 = vector.broadcast %203 : vector<1x64xi1> to vector<16x64xi1>
    %205 = arith.select %204, %202, %201 : vector<16x64xi1>, vector<16x64xbf16>
    %c0_248 = arith.constant 0 : index
    %c0_249 = arith.constant 0 : index
    %c0_250 = arith.constant 0 : index
    %206 = vector.load %arg3[%c0_248, %c0_249, %c0_250] : memref<9x8x16xbf16, #tpu.memory_space<vmem>>, vector<1x8x16xbf16>
    %207 = vector.shape_cast %206 : vector<1x8x16xbf16> to vector<8x16xbf16>
    %cst_251 = arith.constant dense<0.000000e+00> : vector<8x64xf32>
    %208 = tpu.matmul %207, %205, %cst_251 {dimension_numbers = #tpu.dot_dimension_numbers<[1], [0], [0], [1], [0, 0, 1, 1], [], []>} : vector<8x16xbf16>, vector<16x64xbf16>, vector<8x64xf32> -> vector<8x64xf32>
    %c0_252 = arith.constant 0 : index
    %c0_253 = arith.constant 0 : index
    %209 = vector.load %arg6[%c0_252, %c0_253] : memref<8x64xf32, #tpu.memory_space<vmem>>, vector<8x64xf32>
    tpu.vector_store %arg6[%c0_252, %c0_253], %208 {strides = array<i32>} : memref<8x64xf32, #tpu.memory_space<vmem>>, vector<8x64xf32>,
    %c0_254 = arith.constant 0 : index
    %c0_255 = arith.constant 0 : index
    %c0_256 = arith.constant 0 : index
    %c0_257 = arith.constant 0 : index
    %c9_258 = arith.constant 9 : index
    %210 = vector.load %arg2[%c0_254, %c0_255, %c0_256, %c0_257, %c9_258] : memref<1x1x4x16x82xbf16, #tpu.memory_space<vmem>>, vector<1x1x1x16x64xbf16>
    %211 = vector.shape_cast %210 : vector<1x1x1x16x64xbf16> to vector<16x64xbf16>
    %c1_259 = arith.constant 1 : index
    %c0_260 = arith.constant 0 : index
    %c0_261 = arith.constant 0 : index
    %212 = vector.load %arg3[%c1_259, %c0_260, %c0_261] : memref<9x8x16xbf16, #tpu.memory_space<vmem>>, vector<1x8x16xbf16>
    %213 = vector.shape_cast %212 : vector<1x8x16xbf16> to vector<8x16xbf16>
    %cst_262 = arith.constant dense<0.000000e+00> : vector<8x64xf32>
    %214 = tpu.matmul %213, %211, %cst_262 {dimension_numbers = #tpu.dot_dimension_numbers<[1], [0], [0], [1], [0, 0, 1, 1], [], []>} : vector<8x16xbf16>, vector<16x64xbf16>, vector<8x64xf32> -> vector<8x64xf32>
    %c0_263 = arith.constant 0 : index
    %c0_264 = arith.constant 0 : index
    %215 = vector.load %arg6[%c0_263, %c0_264] : memref<8x64xf32, #tpu.memory_space<vmem>>, vector<8x64xf32>
    %216 = arith.addf %215, %214 : vector<8x64xf32>
    %c0_265 = arith.constant 0 : index
    %c0_266 = arith.constant 0 : index
    %217 = vector.load %arg6[%c0_265, %c0_266] : memref<8x64xf32, #tpu.memory_space<vmem>>, vector<8x64xf32>
    tpu.vector_store %arg6[%c0_265, %c0_266], %216 {strides = array<i32>} : memref<8x64xf32, #tpu.memory_space<vmem>>, vector<8x64xf32>,
    %c0_267 = arith.constant 0 : index
    %c0_268 = arith.constant 0 : index
    %c1_269 = arith.constant 1 : index
    %c0_270 = arith.constant 0 : index
    %c9_271 = arith.constant 9 : index
    %218 = vector.load %arg2[%c0_267, %c0_268, %c1_269, %c0_270, %c9_271] : memref<1x1x4x16x82xbf16, #tpu.memory_space<vmem>>, vector<1x1x1x16x64xbf16>
    %219 = vector.shape_cast %218 : vector<1x1x1x16x64xbf16> to vector<16x64xbf16>
    %c2_272 = arith.constant 2 : index
    %c0_273 = arith.constant 0 : index
    %c0_274 = arith.constant 0 : index
    %220 = vector.load %arg3[%c2_272, %c0_273, %c0_274] : memref<9x8x16xbf16, #tpu.memory_space<vmem>>, vector<1x8x16xbf16>
    %221 = vector.shape_cast %220 : vector<1x8x16xbf16> to vector<8x16xbf16>
    %cst_275 = arith.constant dense<0.000000e+00> : vector<8x64xf32>
    %222 = tpu.matmul %221, %219, %cst_275 {dimension_numbers = #tpu.dot_dimension_numbers<[1], [0], [0], [1], [0, 0, 1, 1], [], []>} : vector<8x16xbf16>, vector<16x64xbf16>, vector<8x64xf32> -> vector<8x64xf32>
    %c0_276 = arith.constant 0 : index
    %c0_277 = arith.constant 0 : index
    %223 = vector.load %arg6[%c0_276, %c0_277] : memref<8x64xf32, #tpu.memory_space<vmem>>, vector<8x64xf32>
    %224 = arith.addf %223, %222 : vector<8x64xf32>
    %c0_278 = arith.constant 0 : index
    %c0_279 = arith.constant 0 : index
    %225 = vector.load %arg6[%c0_278, %c0_279] : memref<8x64xf32, #tpu.memory_space<vmem>>, vector<8x64xf32>
    tpu.vector_store %arg6[%c0_278, %c0_279], %224 {strides = array<i32>} : memref<8x64xf32, #tpu.memory_space<vmem>>, vector<8x64xf32>,
    %c0_280 = arith.constant 0 : index
    %c0_281 = arith.constant 0 : index
    %c3_282 = arith.constant 3 : index
    %c0_283 = arith.constant 0 : index
    %c8_284 = arith.constant 8 : index
    %226 = vector.load %arg2[%c0_280, %c0_281, %c3_282, %c0_283, %c8_284] : memref<1x1x4x16x82xbf16, #tpu.memory_space<vmem>>, vector<1x1x1x16x64xbf16>
    %227 = vector.shape_cast %226 : vector<1x1x1x16x64xbf16> to vector<16x64xbf16>
    %cst_285 = arith.constant 0.000000e+00 : bf16
    %228 = vector.broadcast %cst_285 : bf16 to vector<16x64xbf16>
    %229 = vector.shape_cast %18 : vector<1x64xi1> to vector<1x64xi1>
    %230 = vector.broadcast %229 : vector<1x64xi1> to vector<16x64xi1>
    %231 = arith.select %230, %228, %227 : vector<16x64xi1>, vector<16x64xbf16>
    %c3_286 = arith.constant 3 : index
    %c0_287 = arith.constant 0 : index
    %c0_288 = arith.constant 0 : index
    %232 = vector.load %arg3[%c3_286, %c0_287, %c0_288] : memref<9x8x16xbf16, #tpu.memory_space<vmem>>, vector<1x8x16xbf16>
    %233 = vector.shape_cast %232 : vector<1x8x16xbf16> to vector<8x16xbf16>
    %cst_289 = arith.constant dense<0.000000e+00> : vector<8x64xf32>
    %234 = tpu.matmul %233, %231, %cst_289 {dimension_numbers = #tpu.dot_dimension_numbers<[1], [0], [0], [1], [0, 0, 1, 1], [], []>} : vector<8x16xbf16>, vector<16x64xbf16>, vector<8x64xf32> -> vector<8x64xf32>
    %c0_290 = arith.constant 0 : index
    %c0_291 = arith.constant 0 : index
    %235 = vector.load %arg6[%c0_290, %c0_291] : memref<8x64xf32, #tpu.memory_space<vmem>>, vector<8x64xf32>
    %236 = arith.addf %235, %234 : vector<8x64xf32>
    %c0_292 = arith.constant 0 : index
    %c0_293 = arith.constant 0 : index
    %237 = vector.load %arg6[%c0_292, %c0_293] : memref<8x64xf32, #tpu.memory_space<vmem>>, vector<8x64xf32>
    tpu.vector_store %arg6[%c0_292, %c0_293], %236 {strides = array<i32>} : memref<8x64xf32, #tpu.memory_space<vmem>>, vector<8x64xf32>,
    %c0_294 = arith.constant 0 : index
    %c0_295 = arith.constant 0 : index
    %c2_296 = arith.constant 2 : index
    %c0_297 = arith.constant 0 : index
    %c9_298 = arith.constant 9 : index
    %238 = vector.load %arg2[%c0_294, %c0_295, %c2_296, %c0_297, %c9_298] : memref<1x1x4x16x82xbf16, #tpu.memory_space<vmem>>, vector<1x1x1x16x64xbf16>
    %239 = vector.shape_cast %238 : vector<1x1x1x16x64xbf16> to vector<16x64xbf16>
    %c4_299 = arith.constant 4 : index
    %c0_300 = arith.constant 0 : index
    %c0_301 = arith.constant 0 : index
    %240 = vector.load %arg3[%c4_299, %c0_300, %c0_301] : memref<9x8x16xbf16, #tpu.memory_space<vmem>>, vector<1x8x16xbf16>
    %241 = vector.shape_cast %240 : vector<1x8x16xbf16> to vector<8x16xbf16>
    %cst_302 = arith.constant dense<0.000000e+00> : vector<8x64xf32>
    %242 = tpu.matmul %241, %239, %cst_302 {dimension_numbers = #tpu.dot_dimension_numbers<[1], [0], [0], [1], [0, 0, 1, 1], [], []>} : vector<8x16xbf16>, vector<16x64xbf16>, vector<8x64xf32> -> vector<8x64xf32>
    %c0_303 = arith.constant 0 : index
    %c0_304 = arith.constant 0 : index
    %243 = vector.load %arg6[%c0_303, %c0_304] : memref<8x64xf32, #tpu.memory_space<vmem>>, vector<8x64xf32>
    %244 = arith.addf %243, %242 : vector<8x64xf32>
    %c0_305 = arith.constant 0 : index
    %c0_306 = arith.constant 0 : index
    %245 = vector.load %arg6[%c0_305, %c0_306] : memref<8x64xf32, #tpu.memory_space<vmem>>, vector<8x64xf32>
    tpu.vector_store %arg6[%c0_305, %c0_306], %244 {strides = array<i32>} : memref<8x64xf32, #tpu.memory_space<vmem>>, vector<8x64xf32>,
    %c0_307 = arith.constant 0 : index
    %c0_308 = arith.constant 0 : index
    %c3_309 = arith.constant 3 : index
    %c0_310 = arith.constant 0 : index
    %c9_311 = arith.constant 9 : index
    %246 = vector.load %arg2[%c0_307, %c0_308, %c3_309, %c0_310, %c9_311] : memref<1x1x4x16x82xbf16, #tpu.memory_space<vmem>>, vector<1x1x1x16x64xbf16>
    %247 = vector.shape_cast %246 : vector<1x1x1x16x64xbf16> to vector<16x64xbf16>
    %c5_312 = arith.constant 5 : index
    %c0_313 = arith.constant 0 : index
    %c0_314 = arith.constant 0 : index
    %248 = vector.load %arg3[%c5_312, %c0_313, %c0_314] : memref<9x8x16xbf16, #tpu.memory_space<vmem>>, vector<1x8x16xbf16>
    %249 = vector.shape_cast %248 : vector<1x8x16xbf16> to vector<8x16xbf16>
    %cst_315 = arith.constant dense<0.000000e+00> : vector<8x64xf32>
    %250 = tpu.matmul %249, %247, %cst_315 {dimension_numbers = #tpu.dot_dimension_numbers<[1], [0], [0], [1], [0, 0, 1, 1], [], []>} : vector<8x16xbf16>, vector<16x64xbf16>, vector<8x64xf32> -> vector<8x64xf32>
    %c0_316 = arith.constant 0 : index
    %c0_317 = arith.constant 0 : index
    %251 = vector.load %arg6[%c0_316, %c0_317] : memref<8x64xf32, #tpu.memory_space<vmem>>, vector<8x64xf32>
    %252 = arith.addf %251, %250 : vector<8x64xf32>
    %c0_318 = arith.constant 0 : index
    %c0_319 = arith.constant 0 : index
    %253 = vector.load %arg6[%c0_318, %c0_319] : memref<8x64xf32, #tpu.memory_space<vmem>>, vector<8x64xf32>
    tpu.vector_store %arg6[%c0_318, %c0_319], %252 {strides = array<i32>} : memref<8x64xf32, #tpu.memory_space<vmem>>, vector<8x64xf32>,
    %c0_320 = arith.constant 0 : index
    %c0_321 = arith.constant 0 : index
    %c1_322 = arith.constant 1 : index
    %c0_323 = arith.constant 0 : index
    %c16 = arith.constant 16 : index
    %254 = vector.load %arg2[%c0_320, %c0_321, %c1_322, %c0_323, %c16] : memref<1x1x4x16x82xbf16, #tpu.memory_space<vmem>>, vector<1x1x1x16x64xbf16>
    %255 = vector.shape_cast %254 : vector<1x1x1x16x64xbf16> to vector<16x64xbf16>
    %cst_324 = arith.constant 0.000000e+00 : bf16
    %256 = vector.broadcast %cst_324 : bf16 to vector<16x64xbf16>
    %257 = vector.shape_cast %18 : vector<1x64xi1> to vector<1x64xi1>
    %258 = vector.broadcast %257 : vector<1x64xi1> to vector<16x64xi1>
    %259 = arith.select %258, %256, %255 : vector<16x64xi1>, vector<16x64xbf16>
    %c6_325 = arith.constant 6 : index
    %c0_326 = arith.constant 0 : index
    %c0_327 = arith.constant 0 : index
    %260 = vector.load %arg3[%c6_325, %c0_326, %c0_327] : memref<9x8x16xbf16, #tpu.memory_space<vmem>>, vector<1x8x16xbf16>
    %261 = vector.shape_cast %260 : vector<1x8x16xbf16> to vector<8x16xbf16>
    %cst_328 = arith.constant dense<0.000000e+00> : vector<8x64xf32>
    %262 = tpu.matmul %261, %259, %cst_328 {dimension_numbers = #tpu.dot_dimension_numbers<[1], [0], [0], [1], [0, 0, 1, 1], [], []>} : vector<8x16xbf16>, vector<16x64xbf16>, vector<8x64xf32> -> vector<8x64xf32>
    %c0_329 = arith.constant 0 : index
    %c0_330 = arith.constant 0 : index
    %263 = vector.load %arg6[%c0_329, %c0_330] : memref<8x64xf32, #tpu.memory_space<vmem>>, vector<8x64xf32>
    %264 = arith.addf %263, %262 : vector<8x64xf32>
    %c0_331 = arith.constant 0 : index
    %c0_332 = arith.constant 0 : index
    %265 = vector.load %arg6[%c0_331, %c0_332] : memref<8x64xf32, #tpu.memory_space<vmem>>, vector<8x64xf32>
    tpu.vector_store %arg6[%c0_331, %c0_332], %264 {strides = array<i32>} : memref<8x64xf32, #tpu.memory_space<vmem>>, vector<8x64xf32>,
    %c0_333 = arith.constant 0 : index
    %c0_334 = arith.constant 0 : index
    %c0_335 = arith.constant 0 : index
    %c0_336 = arith.constant 0 : index
    %c17 = arith.constant 17 : index
    %266 = vector.load %arg2[%c0_333, %c0_334, %c0_335, %c0_336, %c17] : memref<1x1x4x16x82xbf16, #tpu.memory_space<vmem>>, vector<1x1x1x16x64xbf16>
    %267 = vector.shape_cast %266 : vector<1x1x1x16x64xbf16> to vector<16x64xbf16>
    %c7_337 = arith.constant 7 : index
    %c0_338 = arith.constant 0 : index
    %c0_339 = arith.constant 0 : index
    %268 = vector.load %arg3[%c7_337, %c0_338, %c0_339] : memref<9x8x16xbf16, #tpu.memory_space<vmem>>, vector<1x8x16xbf16>
    %269 = vector.shape_cast %268 : vector<1x8x16xbf16> to vector<8x16xbf16>
    %cst_340 = arith.constant dense<0.000000e+00> : vector<8x64xf32>
    %270 = tpu.matmul %269, %267, %cst_340 {dimension_numbers = #tpu.dot_dimension_numbers<[1], [0], [0], [1], [0, 0, 1, 1], [], []>} : vector<8x16xbf16>, vector<16x64xbf16>, vector<8x64xf32> -> vector<8x64xf32>
    %c0_341 = arith.constant 0 : index
    %c0_342 = arith.constant 0 : index
    %271 = vector.load %arg6[%c0_341, %c0_342] : memref<8x64xf32, #tpu.memory_space<vmem>>, vector<8x64xf32>
    %272 = arith.addf %271, %270 : vector<8x64xf32>
    %c0_343 = arith.constant 0 : index
    %c0_344 = arith.constant 0 : index
    %273 = vector.load %arg6[%c0_343, %c0_344] : memref<8x64xf32, #tpu.memory_space<vmem>>, vector<8x64xf32>
    tpu.vector_store %arg6[%c0_343, %c0_344], %272 {strides = array<i32>} : memref<8x64xf32, #tpu.memory_space<vmem>>, vector<8x64xf32>,
    %c0_345 = arith.constant 0 : index
    %c0_346 = arith.constant 0 : index
    %c1_347 = arith.constant 1 : index
    %c0_348 = arith.constant 0 : index
    %c17_349 = arith.constant 17 : index
    %274 = vector.load %arg2[%c0_345, %c0_346, %c1_347, %c0_348, %c17_349] : memref<1x1x4x16x82xbf16, #tpu.memory_space<vmem>>, vector<1x1x1x16x64xbf16>
    %275 = vector.shape_cast %274 : vector<1x1x1x16x64xbf16> to vector<16x64xbf16>
    %c8_350 = arith.constant 8 : index
    %c0_351 = arith.constant 0 : index
    %c0_352 = arith.constant 0 : index
    %276 = vector.load %arg3[%c8_350, %c0_351, %c0_352] : memref<9x8x16xbf16, #tpu.memory_space<vmem>>, vector<1x8x16xbf16>
    %277 = vector.shape_cast %276 : vector<1x8x16xbf16> to vector<8x16xbf16>
    %cst_353 = arith.constant dense<0.000000e+00> : vector<8x64xf32>
    %278 = tpu.matmul %277, %275, %cst_353 {dimension_numbers = #tpu.dot_dimension_numbers<[1], [0], [0], [1], [0, 0, 1, 1], [], []>} : vector<8x16xbf16>, vector<16x64xbf16>, vector<8x64xf32> -> vector<8x64xf32>
    %c0_354 = arith.constant 0 : index
    %c0_355 = arith.constant 0 : index
    %279 = vector.load %arg6[%c0_354, %c0_355] : memref<8x64xf32, #tpu.memory_space<vmem>>, vector<8x64xf32>
    %280 = arith.addf %279, %278 : vector<8x64xf32>
    %c0_356 = arith.constant 0 : index
    %c0_357 = arith.constant 0 : index
    %281 = vector.load %arg6[%c0_356, %c0_357] : memref<8x64xf32, #tpu.memory_space<vmem>>, vector<8x64xf32>
    tpu.vector_store %arg6[%c0_356, %c0_357], %280 {strides = array<i32>} : memref<8x64xf32, #tpu.memory_space<vmem>>, vector<8x64xf32>,
    %c0_358 = arith.constant 0 : index
    %c0_359 = arith.constant 0 : index
    %282 = vector.load %arg6[%c0_358, %c0_359] : memref<8x64xf32, #tpu.memory_space<vmem>>, vector<8x64xf32>
    %283 = vector.broadcast %21 : vector<8x1xf32> to vector<8x64xf32>
    %284 = arith.addf %282, %283 : vector<8x64xf32>
    %cst_360 = arith.constant 0.000000e+00 : f32
    %285 = vector.broadcast %cst_360 : f32 to vector<8x64xf32>
    %286 = arith.maximumf %284, %285 : vector<8x64xf32>
    %c0_361 = arith.constant 0 : index
    %c0_362 = arith.constant 0 : index
    %287 = vector.load %arg7[%c0_361, %c0_362] : memref<8x64xf32, #tpu.memory_space<vmem>>, vector<8x64xf32>
    %288 = arith.addf %287, %286 : vector<8x64xf32>
    %c0_363 = arith.constant 0 : index
    %c0_364 = arith.constant 0 : index
    %289 = vector.load %arg7[%c0_363, %c0_364] : memref<8x64xf32, #tpu.memory_space<vmem>>, vector<8x64xf32>
    tpu.vector_store %arg7[%c0_363, %c0_364], %288 {strides = array<i32>} : memref<8x64xf32, #tpu.memory_space<vmem>>, vector<8x64xf32>,
    %c0_365 = arith.constant 0 : index
    %c0_366 = arith.constant 0 : index
    %c0_367 = arith.constant 0 : index
    %c0_368 = arith.constant 0 : index
    %c9_369 = arith.constant 9 : index
    %290 = vector.load %arg2[%c0_365, %c0_366, %c0_367, %c0_368, %c9_369] : memref<1x1x4x16x82xbf16, #tpu.memory_space<vmem>>, vector<1x1x1x16x64xbf16>
    %291 = vector.shape_cast %290 : vector<1x1x1x16x64xbf16> to vector<16x64xbf16>
    %c0_370 = arith.constant 0 : index
    %c0_371 = arith.constant 0 : index
    %c0_372 = arith.constant 0 : index
    %292 = vector.load %arg3[%c0_370, %c0_371, %c0_372] : memref<9x8x16xbf16, #tpu.memory_space<vmem>>, vector<1x8x16xbf16>
    %293 = vector.shape_cast %292 : vector<1x8x16xbf16> to vector<8x16xbf16>
    %cst_373 = arith.constant dense<0.000000e+00> : vector<8x64xf32>
    %294 = tpu.matmul %293, %291, %cst_373 {dimension_numbers = #tpu.dot_dimension_numbers<[1], [0], [0], [1], [0, 0, 1, 1], [], []>} : vector<8x16xbf16>, vector<16x64xbf16>, vector<8x64xf32> -> vector<8x64xf32>
    %c0_374 = arith.constant 0 : index
    %c0_375 = arith.constant 0 : index
    %295 = vector.load %arg6[%c0_374, %c0_375] : memref<8x64xf32, #tpu.memory_space<vmem>>, vector<8x64xf32>
    tpu.vector_store %arg6[%c0_374, %c0_375], %294 {strides = array<i32>} : memref<8x64xf32, #tpu.memory_space<vmem>>, vector<8x64xf32>,
    %c0_376 = arith.constant 0 : index
    %c0_377 = arith.constant 0 : index
    %c1_378 = arith.constant 1 : index
    %c0_379 = arith.constant 0 : index
    %c9_380 = arith.constant 9 : index
    %296 = vector.load %arg2[%c0_376, %c0_377, %c1_378, %c0_379, %c9_380] : memref<1x1x4x16x82xbf16, #tpu.memory_space<vmem>>, vector<1x1x1x16x64xbf16>
    %297 = vector.shape_cast %296 : vector<1x1x1x16x64xbf16> to vector<16x64xbf16>
    %c1_381 = arith.constant 1 : index
    %c0_382 = arith.constant 0 : index
    %c0_383 = arith.constant 0 : index
    %298 = vector.load %arg3[%c1_381, %c0_382, %c0_383] : memref<9x8x16xbf16, #tpu.memory_space<vmem>>, vector<1x8x16xbf16>
    %299 = vector.shape_cast %298 : vector<1x8x16xbf16> to vector<8x16xbf16>
    %cst_384 = arith.constant dense<0.000000e+00> : vector<8x64xf32>
    %300 = tpu.matmul %299, %297, %cst_384 {dimension_numbers = #tpu.dot_dimension_numbers<[1], [0], [0], [1], [0, 0, 1, 1], [], []>} : vector<8x16xbf16>, vector<16x64xbf16>, vector<8x64xf32> -> vector<8x64xf32>
    %c0_385 = arith.constant 0 : index
    %c0_386 = arith.constant 0 : index
    %301 = vector.load %arg6[%c0_385, %c0_386] : memref<8x64xf32, #tpu.memory_space<vmem>>, vector<8x64xf32>
    %302 = arith.addf %301, %300 : vector<8x64xf32>
    %c0_387 = arith.constant 0 : index
    %c0_388 = arith.constant 0 : index
    %303 = vector.load %arg6[%c0_387, %c0_388] : memref<8x64xf32, #tpu.memory_space<vmem>>, vector<8x64xf32>
    tpu.vector_store %arg6[%c0_387, %c0_388], %302 {strides = array<i32>} : memref<8x64xf32, #tpu.memory_space<vmem>>, vector<8x64xf32>,
    %c0_389 = arith.constant 0 : index
    %c0_390 = arith.constant 0 : index
    %c0_391 = arith.constant 0 : index
    %c0_392 = arith.constant 0 : index
    %c10_393 = arith.constant 10 : index
    %304 = vector.load %arg2[%c0_389, %c0_390, %c0_391, %c0_392, %c10_393] : memref<1x1x4x16x82xbf16, #tpu.memory_space<vmem>>, vector<1x1x1x16x64xbf16>
    %305 = vector.shape_cast %304 : vector<1x1x1x16x64xbf16> to vector<16x64xbf16>
    %cst_394 = arith.constant 0.000000e+00 : bf16
    %306 = vector.broadcast %cst_394 : bf16 to vector<16x64xbf16>
    %307 = vector.shape_cast %20 : vector<1x64xi1> to vector<1x64xi1>
    %308 = vector.broadcast %307 : vector<1x64xi1> to vector<16x64xi1>
    %309 = arith.select %308, %306, %305 : vector<16x64xi1>, vector<16x64xbf16>
    %c2_395 = arith.constant 2 : index
    %c0_396 = arith.constant 0 : index
    %c0_397 = arith.constant 0 : index
    %310 = vector.load %arg3[%c2_395, %c0_396, %c0_397] : memref<9x8x16xbf16, #tpu.memory_space<vmem>>, vector<1x8x16xbf16>
    %311 = vector.shape_cast %310 : vector<1x8x16xbf16> to vector<8x16xbf16>
    %cst_398 = arith.constant dense<0.000000e+00> : vector<8x64xf32>
    %312 = tpu.matmul %311, %309, %cst_398 {dimension_numbers = #tpu.dot_dimension_numbers<[1], [0], [0], [1], [0, 0, 1, 1], [], []>} : vector<8x16xbf16>, vector<16x64xbf16>, vector<8x64xf32> -> vector<8x64xf32>
    %c0_399 = arith.constant 0 : index
    %c0_400 = arith.constant 0 : index
    %313 = vector.load %arg6[%c0_399, %c0_400] : memref<8x64xf32, #tpu.memory_space<vmem>>, vector<8x64xf32>
    %314 = arith.addf %313, %312 : vector<8x64xf32>
    %c0_401 = arith.constant 0 : index
    %c0_402 = arith.constant 0 : index
    %315 = vector.load %arg6[%c0_401, %c0_402] : memref<8x64xf32, #tpu.memory_space<vmem>>, vector<8x64xf32>
    tpu.vector_store %arg6[%c0_401, %c0_402], %314 {strides = array<i32>} : memref<8x64xf32, #tpu.memory_space<vmem>>, vector<8x64xf32>,
    %c0_403 = arith.constant 0 : index
    %c0_404 = arith.constant 0 : index
    %c2_405 = arith.constant 2 : index
    %c0_406 = arith.constant 0 : index
    %c9_407 = arith.constant 9 : index
    %316 = vector.load %arg2[%c0_403, %c0_404, %c2_405, %c0_406, %c9_407] : memref<1x1x4x16x82xbf16, #tpu.memory_space<vmem>>, vector<1x1x1x16x64xbf16>
    %317 = vector.shape_cast %316 : vector<1x1x1x16x64xbf16> to vector<16x64xbf16>
    %c3_408 = arith.constant 3 : index
    %c0_409 = arith.constant 0 : index
    %c0_410 = arith.constant 0 : index
    %318 = vector.load %arg3[%c3_408, %c0_409, %c0_410] : memref<9x8x16xbf16, #tpu.memory_space<vmem>>, vector<1x8x16xbf16>
    %319 = vector.shape_cast %318 : vector<1x8x16xbf16> to vector<8x16xbf16>
    %cst_411 = arith.constant dense<0.000000e+00> : vector<8x64xf32>
    %320 = tpu.matmul %319, %317, %cst_411 {dimension_numbers = #tpu.dot_dimension_numbers<[1], [0], [0], [1], [0, 0, 1, 1], [], []>} : vector<8x16xbf16>, vector<16x64xbf16>, vector<8x64xf32> -> vector<8x64xf32>
    %c0_412 = arith.constant 0 : index
    %c0_413 = arith.constant 0 : index
    %321 = vector.load %arg6[%c0_412, %c0_413] : memref<8x64xf32, #tpu.memory_space<vmem>>, vector<8x64xf32>
    %322 = arith.addf %321, %320 : vector<8x64xf32>
    %c0_414 = arith.constant 0 : index
    %c0_415 = arith.constant 0 : index
    %323 = vector.load %arg6[%c0_414, %c0_415] : memref<8x64xf32, #tpu.memory_space<vmem>>, vector<8x64xf32>
    tpu.vector_store %arg6[%c0_414, %c0_415], %322 {strides = array<i32>} : memref<8x64xf32, #tpu.memory_space<vmem>>, vector<8x64xf32>,
    %c0_416 = arith.constant 0 : index
    %c0_417 = arith.constant 0 : index
    %c3_418 = arith.constant 3 : index
    %c0_419 = arith.constant 0 : index
    %c9_420 = arith.constant 9 : index
    %324 = vector.load %arg2[%c0_416, %c0_417, %c3_418, %c0_419, %c9_420] : memref<1x1x4x16x82xbf16, #tpu.memory_space<vmem>>, vector<1x1x1x16x64xbf16>
    %325 = vector.shape_cast %324 : vector<1x1x1x16x64xbf16> to vector<16x64xbf16>
    %c4_421 = arith.constant 4 : index
    %c0_422 = arith.constant 0 : index
    %c0_423 = arith.constant 0 : index
    %326 = vector.load %arg3[%c4_421, %c0_422, %c0_423] : memref<9x8x16xbf16, #tpu.memory_space<vmem>>, vector<1x8x16xbf16>
    %327 = vector.shape_cast %326 : vector<1x8x16xbf16> to vector<8x16xbf16>
    %cst_424 = arith.constant dense<0.000000e+00> : vector<8x64xf32>
    %328 = tpu.matmul %327, %325, %cst_424 {dimension_numbers = #tpu.dot_dimension_numbers<[1], [0], [0], [1], [0, 0, 1, 1], [], []>} : vector<8x16xbf16>, vector<16x64xbf16>, vector<8x64xf32> -> vector<8x64xf32>
    %c0_425 = arith.constant 0 : index
    %c0_426 = arith.constant 0 : index
    %329 = vector.load %arg6[%c0_425, %c0_426] : memref<8x64xf32, #tpu.memory_space<vmem>>, vector<8x64xf32>
    %330 = arith.addf %329, %328 : vector<8x64xf32>
    %c0_427 = arith.constant 0 : index
    %c0_428 = arith.constant 0 : index
    %331 = vector.load %arg6[%c0_427, %c0_428] : memref<8x64xf32, #tpu.memory_space<vmem>>, vector<8x64xf32>
    tpu.vector_store %arg6[%c0_427, %c0_428], %330 {strides = array<i32>} : memref<8x64xf32, #tpu.memory_space<vmem>>, vector<8x64xf32>,
    %c0_429 = arith.constant 0 : index
    %c0_430 = arith.constant 0 : index
    %c2_431 = arith.constant 2 : index
    %c0_432 = arith.constant 0 : index
    %c10_433 = arith.constant 10 : index
    %332 = vector.load %arg2[%c0_429, %c0_430, %c2_431, %c0_432, %c10_433] : memref<1x1x4x16x82xbf16, #tpu.memory_space<vmem>>, vector<1x1x1x16x64xbf16>
    %333 = vector.shape_cast %332 : vector<1x1x1x16x64xbf16> to vector<16x64xbf16>
    %cst_434 = arith.constant 0.000000e+00 : bf16
    %334 = vector.broadcast %cst_434 : bf16 to vector<16x64xbf16>
    %335 = vector.shape_cast %20 : vector<1x64xi1> to vector<1x64xi1>
    %336 = vector.broadcast %335 : vector<1x64xi1> to vector<16x64xi1>
    %337 = arith.select %336, %334, %333 : vector<16x64xi1>, vector<16x64xbf16>
    %c5_435 = arith.constant 5 : index
    %c0_436 = arith.constant 0 : index
    %c0_437 = arith.constant 0 : index
    %338 = vector.load %arg3[%c5_435, %c0_436, %c0_437] : memref<9x8x16xbf16, #tpu.memory_space<vmem>>, vector<1x8x16xbf16>
    %339 = vector.shape_cast %338 : vector<1x8x16xbf16> to vector<8x16xbf16>
    %cst_438 = arith.constant dense<0.000000e+00> : vector<8x64xf32>
    %340 = tpu.matmul %339, %337, %cst_438 {dimension_numbers = #tpu.dot_dimension_numbers<[1], [0], [0], [1], [0, 0, 1, 1], [], []>} : vector<8x16xbf16>, vector<16x64xbf16>, vector<8x64xf32> -> vector<8x64xf32>
    %c0_439 = arith.constant 0 : index
    %c0_440 = arith.constant 0 : index
    %341 = vector.load %arg6[%c0_439, %c0_440] : memref<8x64xf32, #tpu.memory_space<vmem>>, vector<8x64xf32>
    %342 = arith.addf %341, %340 : vector<8x64xf32>
    %c0_441 = arith.constant 0 : index
    %c0_442 = arith.constant 0 : index
    %343 = vector.load %arg6[%c0_441, %c0_442] : memref<8x64xf32, #tpu.memory_space<vmem>>, vector<8x64xf32>
    tpu.vector_store %arg6[%c0_441, %c0_442], %342 {strides = array<i32>} : memref<8x64xf32, #tpu.memory_space<vmem>>, vector<8x64xf32>,
    %c0_443 = arith.constant 0 : index
    %c0_444 = arith.constant 0 : index
    %c0_445 = arith.constant 0 : index
    %c0_446 = arith.constant 0 : index
    %c17_447 = arith.constant 17 : index
    %344 = vector.load %arg2[%c0_443, %c0_444, %c0_445, %c0_446, %c17_447] : memref<1x1x4x16x82xbf16, #tpu.memory_space<vmem>>, vector<1x1x1x16x64xbf16>
    %345 = vector.shape_cast %344 : vector<1x1x1x16x64xbf16> to vector<16x64xbf16>
    %c6_448 = arith.constant 6 : index
    %c0_449 = arith.constant 0 : index
    %c0_450 = arith.constant 0 : index
    %346 = vector.load %arg3[%c6_448, %c0_449, %c0_450] : memref<9x8x16xbf16, #tpu.memory_space<vmem>>, vector<1x8x16xbf16>
    %347 = vector.shape_cast %346 : vector<1x8x16xbf16> to vector<8x16xbf16>
    %cst_451 = arith.constant dense<0.000000e+00> : vector<8x64xf32>
    %348 = tpu.matmul %347, %345, %cst_451 {dimension_numbers = #tpu.dot_dimension_numbers<[1], [0], [0], [1], [0, 0, 1, 1], [], []>} : vector<8x16xbf16>, vector<16x64xbf16>, vector<8x64xf32> -> vector<8x64xf32>
    %c0_452 = arith.constant 0 : index
    %c0_453 = arith.constant 0 : index
    %349 = vector.load %arg6[%c0_452, %c0_453] : memref<8x64xf32, #tpu.memory_space<vmem>>, vector<8x64xf32>
    %350 = arith.addf %349, %348 : vector<8x64xf32>
    %c0_454 = arith.constant 0 : index
    %c0_455 = arith.constant 0 : index
    %351 = vector.load %arg6[%c0_454, %c0_455] : memref<8x64xf32, #tpu.memory_space<vmem>>, vector<8x64xf32>
    tpu.vector_store %arg6[%c0_454, %c0_455], %350 {strides = array<i32>} : memref<8x64xf32, #tpu.memory_space<vmem>>, vector<8x64xf32>,
    %c0_456 = arith.constant 0 : index
    %c0_457 = arith.constant 0 : index
    %c1_458 = arith.constant 1 : index
    %c0_459 = arith.constant 0 : index
    %c17_460 = arith.constant 17 : index
    %352 = vector.load %arg2[%c0_456, %c0_457, %c1_458, %c0_459, %c17_460] : memref<1x1x4x16x82xbf16, #tpu.memory_space<vmem>>, vector<1x1x1x16x64xbf16>
    %353 = vector.shape_cast %352 : vector<1x1x1x16x64xbf16> to vector<16x64xbf16>
    %c7_461 = arith.constant 7 : index
    %c0_462 = arith.constant 0 : index
    %c0_463 = arith.constant 0 : index
    %354 = vector.load %arg3[%c7_461, %c0_462, %c0_463] : memref<9x8x16xbf16, #tpu.memory_space<vmem>>, vector<1x8x16xbf16>
    %355 = vector.shape_cast %354 : vector<1x8x16xbf16> to vector<8x16xbf16>
    %cst_464 = arith.constant dense<0.000000e+00> : vector<8x64xf32>
    %356 = tpu.matmul %355, %353, %cst_464 {dimension_numbers = #tpu.dot_dimension_numbers<[1], [0], [0], [1], [0, 0, 1, 1], [], []>} : vector<8x16xbf16>, vector<16x64xbf16>, vector<8x64xf32> -> vector<8x64xf32>
    %c0_465 = arith.constant 0 : index
    %c0_466 = arith.constant 0 : index
    %357 = vector.load %arg6[%c0_465, %c0_466] : memref<8x64xf32, #tpu.memory_space<vmem>>, vector<8x64xf32>
    %358 = arith.addf %357, %356 : vector<8x64xf32>
    %c0_467 = arith.constant 0 : index
    %c0_468 = arith.constant 0 : index
    %359 = vector.load %arg6[%c0_467, %c0_468] : memref<8x64xf32, #tpu.memory_space<vmem>>, vector<8x64xf32>
    tpu.vector_store %arg6[%c0_467, %c0_468], %358 {strides = array<i32>} : memref<8x64xf32, #tpu.memory_space<vmem>>, vector<8x64xf32>,
    %c0_469 = arith.constant 0 : index
    %c0_470 = arith.constant 0 : index
    %c0_471 = arith.constant 0 : index
    %c0_472 = arith.constant 0 : index
    %c18 = arith.constant 18 : index
    %360 = vector.load %arg2[%c0_469, %c0_470, %c0_471, %c0_472, %c18] : memref<1x1x4x16x82xbf16, #tpu.memory_space<vmem>>, vector<1x1x1x16x64xbf16>
    %361 = vector.shape_cast %360 : vector<1x1x1x16x64xbf16> to vector<16x64xbf16>
    %cst_473 = arith.constant 0.000000e+00 : bf16
    %362 = vector.broadcast %cst_473 : bf16 to vector<16x64xbf16>
    %363 = vector.shape_cast %20 : vector<1x64xi1> to vector<1x64xi1>
    %364 = vector.broadcast %363 : vector<1x64xi1> to vector<16x64xi1>
    %365 = arith.select %364, %362, %361 : vector<16x64xi1>, vector<16x64xbf16>
    %c8_474 = arith.constant 8 : index
    %c0_475 = arith.constant 0 : index
    %c0_476 = arith.constant 0 : index
    %366 = vector.load %arg3[%c8_474, %c0_475, %c0_476] : memref<9x8x16xbf16, #tpu.memory_space<vmem>>, vector<1x8x16xbf16>
    %367 = vector.shape_cast %366 : vector<1x8x16xbf16> to vector<8x16xbf16>
    %cst_477 = arith.constant dense<0.000000e+00> : vector<8x64xf32>
    %368 = tpu.matmul %367, %365, %cst_477 {dimension_numbers = #tpu.dot_dimension_numbers<[1], [0], [0], [1], [0, 0, 1, 1], [], []>} : vector<8x16xbf16>, vector<16x64xbf16>, vector<8x64xf32> -> vector<8x64xf32>
    %c0_478 = arith.constant 0 : index
    %c0_479 = arith.constant 0 : index
    %369 = vector.load %arg6[%c0_478, %c0_479] : memref<8x64xf32, #tpu.memory_space<vmem>>, vector<8x64xf32>
    %370 = arith.addf %369, %368 : vector<8x64xf32>
    %c0_480 = arith.constant 0 : index
    %c0_481 = arith.constant 0 : index
    %371 = vector.load %arg6[%c0_480, %c0_481] : memref<8x64xf32, #tpu.memory_space<vmem>>, vector<8x64xf32>
    tpu.vector_store %arg6[%c0_480, %c0_481], %370 {strides = array<i32>} : memref<8x64xf32, #tpu.memory_space<vmem>>, vector<8x64xf32>,
    %c0_482 = arith.constant 0 : index
    %c0_483 = arith.constant 0 : index
    %372 = vector.load %arg6[%c0_482, %c0_483] : memref<8x64xf32, #tpu.memory_space<vmem>>, vector<8x64xf32>
    %373 = vector.broadcast %21 : vector<8x1xf32> to vector<8x64xf32>
    %374 = arith.addf %372, %373 : vector<8x64xf32>
    %cst_484 = arith.constant 0.000000e+00 : f32
    %375 = vector.broadcast %cst_484 : f32 to vector<8x64xf32>
    %376 = arith.maximumf %374, %375 : vector<8x64xf32>
    %c0_485 = arith.constant 0 : index
    %c0_486 = arith.constant 0 : index
    %377 = vector.load %arg7[%c0_485, %c0_486] : memref<8x64xf32, #tpu.memory_space<vmem>>, vector<8x64xf32>
    %378 = arith.addf %377, %376 : vector<8x64xf32>
    %c0_487 = arith.constant 0 : index
    %c0_488 = arith.constant 0 : index
    %379 = vector.load %arg7[%c0_487, %c0_488] : memref<8x64xf32, #tpu.memory_space<vmem>>, vector<8x64xf32>
    tpu.vector_store %arg7[%c0_487, %c0_488], %378 {strides = array<i32>} : memref<8x64xf32, #tpu.memory_space<vmem>>, vector<8x64xf32>,
    %c0_489 = arith.constant 0 : index
    %c0_490 = arith.constant 0 : index
    %380 = vector.load %arg7[%c0_489, %c0_490] : memref<8x64xf32, #tpu.memory_space<vmem>>, vector<8x64xf32>
    %c0_491 = arith.constant 0 : index
    %c0_492 = arith.constant 0 : index
    %c0_493 = arith.constant 0 : index
    %381 = vector.load %arg5[%c0_491, %c0_492, %c0_493] : memref<1x8x64xf32, #tpu.memory_space<vmem>>, vector<1x8x64xf32>
    %382 = vector.shape_cast %381 : vector<1x8x64xf32> to vector<8x64xf32>
    %383 = vector.shape_cast %380 : vector<8x64xf32> to vector<1x8x64xf32>
    tpu.vector_store %arg5[%c0_491, %c0_492, %c0_493], %383 {strides = array<i32>} : memref<1x8x64xf32, #tpu.memory_space<vmem>>, vector<1x8x64xf32>,
    return
  }
  func.func @transform_0(%arg0: i32, %arg1: i32) -> (i32, i32, i32, i32, i32) {
    %c0_i32 = arith.constant 0 : i32
    %c0_i32_0 = arith.constant 0 : i32
    %c0_i32_1 = arith.constant 0 : i32
    %c0_i32_2 = arith.constant 0 : i32
    return %arg0, %arg1, %c0_i32, %c0_i32_0, %c0_i32_1 : i32, i32, i32, i32, i32
  }
  func.func @transform_1(%arg0: i32, %arg1: i32) -> (i32, i32, i32) {
    %c0_i32 = arith.constant 0 : i32
    %c0_i32_0 = arith.constant 0 : i32
    %c0_i32_1 = arith.constant 0 : i32
    %c0_i32_2 = arith.constant 0 : i32
    return %c0_i32, %c0_i32_0, %c0_i32_1 : i32, i32, i32
  }
  func.func @transform_2(%arg0: i32, %arg1: i32) -> (i32, i32) {
    %c0_i32 = arith.constant 0 : i32
    %c0_i32_0 = arith.constant 0 : i32
    %c0_i32_1 = arith.constant 0 : i32
    return %c0_i32, %c0_i32_0 : i32, i32
  }
  func.func @transform_3(%arg0: i32, %arg1: i32) -> (i32, i32, i32) {
    %c0_i32 = arith.constant 0 : i32
    %c0_i32_0 = arith.constant 0 : i32
    return %arg0, %c0_i32, %arg1 : i32, i32, i32
  }
}

</mosaic_0001>

<llo_original>
// kernel: down_block_pallas.1
$region0: #{down_block_pallas.1}
  #allocation0 [shape = 'u32[]', space=smem, size = 0x4, offset = 0x4, fixed_abs, tag = 'smem constant byte address 0x4 - core index']
  #allocation1 [shape = 'u32[144,128]{1,0:T(1,128)}', space=vmem, size = 0x12000, scoped, tag = 'internal scratch']
  #allocation2 [shape = 'f32[8,64]{1,0:T(8,128)}', space=vmem, size = 0x1000, scoped, tag = 'scratch operand']
  #allocation3 [shape = 'f32[8,64]{1,0:T(8,128)}', space=vmem, size = 0x1000, scoped, tag = 'scratch operand']
  %s0 = inlined_call_operand.vmem [shape: bf16[2,1,4,16,82], index: 0, kind: input, shape index: {}]
  %s1 = inlined_call_operand.vmem [shape: bf16[9,8,16], index: 1, kind: input, shape index: {}]
  %s2 = inlined_call_operand.vmem [shape: f32[8,1], index: 2, kind: input, shape index: {}]
  %s3 = inlined_call_operand.vmem [shape: f32[2,8,64], index: 3, kind: output, shape index: {}]
  %s4 = sld [smem:[#allocation0]]
  $region45: #{down_block_pallas.1} parent=0
    _
  %s6 = ssub.s32 1, %s4
  %s7 = scalar_select 0, %s6, %s4
  loop: start=0, step=1, limit=4
  $region2: #{down_block_pallas.1} parent=0 // loop_pre_header
    _
  $region3: #{down_block_pallas.1} parent=0 // loop_header
    %s9 = sphi 0, %s13
    %p10 = scmp.ge.s32.totalorder %s9, 4
    %s16 = sphi 0, %s28
    %s17 = sphi 0, %s24
    %s18 = sphi 0, %s16
    %s19 = sphi 0, %s17
    %s20 = sphi 0, %s18
    %s21 = sphi 0, %s19
    %s33 = sphi 0, %s35
    %s36 = sphi 0, %s33
    %s37 = sphi 0, %s36
    %s53 = sphi 0, %s37
    %s57 = sphi 0, %s57
    %s59 = sphi 0, %s57
    %s60 = sphi 0, %s59
    %s74 = sphi 0, %s60
    %s78 = sphi 0, %s78
    %s80 = sphi 0, %s78
    %s81 = sphi 0, %s80
    %s95 = sphi 0, %s81
    %s103 = sphi 0, %s105
    %s106 = sphi 0, %s103
    %s107 = sphi 0, %s106
    %s123 = sphi 0, %s107
  $region4: #{down_block_pallas.1} parent=0 // loop_header_branch
    %12 = sbr.rel (%p10) target = $region8
  $region5: #{down_block_pallas.1} parent=0 // loop_body
    %s14 = ssub.s32 %s9, 1
    %s15 = ssub.s32 %s9, 2
    %s22 = sadd.s32 1, %s17
    %p23 = scmp.ge.s32.totalorder %s22, 1
    %s24 = scalar_select %p23, 0, %s22
    %s25 = sadd.s32 1, %s16
    %s26 = scalar_select %p23, %s25, %s16
    %p27 = scmp.ge.s32.totalorder %s26, 2
    %s28 = scalar_select %p27, 0, %s26
    %s29 = ssub.s32 %s16, %s28
    %s30 = ssub.s32 %s17, %s24
    %s31 = sor.u32 %s29, %s30
    %p32 = scmp.eq.s32.totalorder %s31, 0
    %s34 = sadd.s32 %s33, 1
    %s35 = scalar_select %p32, %s33, %s34
    %p38 = pneg %p32
    %p39 = scmp.eq.s32.totalorder %s9, 1
    %p40 = por %p38, %p39
    %p41 = scmp.ne.s32.totalorder %s33, %s36
    %p42 = scmp.eq.s32.totalorder %s9, 0
    %p43 = por %p41, %p42
    %p44 = scmp.ne.s32.totalorder %s33, %s36
    %p45 = scmp.eq.s32.totalorder %s14, 1
    %p46 = por %p44, %p45
    %p47 = scmp.ne.s32.totalorder %s36, %s37
    %p48 = scmp.eq.s32.totalorder %s14, 0
    %p49 = por %p47, %p48
    %p50 = scmp.ne.s32.totalorder %s36, %s37
    %p51 = scmp.eq.s32.totalorder %s15, 1
    %p52 = por %p50, %p51
    %p54 = scmp.ne.s32.totalorder %s37, %s53
    %p55 = scmp.eq.s32.totalorder %s15, 0
    %p56 = por %p54, %p55
    %s58 = sadd.s32 %s57, 1
    %p61 = scmp.eq.s32.totalorder %s9, 1
    %p62 = scmp.ne.s32.totalorder %s57, %s59
    %p63 = scmp.eq.s32.totalorder %s9, 0
    %p64 = por %p62, %p63
    %p65 = scmp.ne.s32.totalorder %s57, %s59
    %p66 = scmp.eq.s32.totalorder %s14, 1
    %p67 = por %p65, %p66
    %p68 = scmp.ne.s32.totalorder %s59, %s60
    %p69 = scmp.eq.s32.totalorder %s14, 0
    %p70 = por %p68, %p69
    %p71 = scmp.ne.s32.totalorder %s59, %s60
    %p72 = scmp.eq.s32.totalorder %s15, 1
    %p73 = por %p71, %p72
    %p75 = scmp.ne.s32.totalorder %s60, %s74
    %p76 = scmp.eq.s32.totalorder %s15, 0
    %p77 = por %p75, %p76
    %s79 = sadd.s32 %s78, 1
    %p82 = scmp.eq.s32.totalorder %s9, 1
    %p83 = scmp.ne.s32.totalorder %s78, %s80
    %p84 = scmp.eq.s32.totalorder %s9, 0
    %p85 = por %p83, %p84
    %p86 = scmp.ne.s32.totalorder %s78, %s80
    %p87 = scmp.eq.s32.totalorder %s14, 1
    %p88 = por %p86, %p87
    %p89 = scmp.ne.s32.totalorder %s80, %s81
    %p90 = scmp.eq.s32.totalorder %s14, 0
    %p91 = por %p89, %p90
    %p92 = scmp.ne.s32.totalorder %s80, %s81
    %p93 = scmp.eq.s32.totalorder %s15, 1
    %p94 = por %p92, %p93
    %p96 = scmp.ne.s32.totalorder %s81, %s95
    %p97 = scmp.eq.s32.totalorder %s15, 0
    %p98 = por %p96, %p97
    %s99 = ssub.s32 %s16, %s28
    %s100 = ssub.s32 %s17, %s24
    %s101 = sor.u32 %s99, %s100
    %p102 = scmp.eq.s32.totalorder %s101, 0
    %s104 = sadd.s32 %s103, 1
    %s105 = scalar_select %p102, %s103, %s104
    %p108 = pneg %p102
    %p109 = scmp.eq.s32.totalorder %s9, 1
    %p110 = por %p108, %p109
    %p111 = scmp.ne.s32.totalorder %s103, %s106
    %p112 = scmp.eq.s32.totalorder %s9, 0
    %p113 = por %p111, %p112
    %p114 = scmp.ne.s32.totalorder %s103, %s106
    %p115 = scmp.eq.s32.totalorder %s14, 1
    %p116 = por %p114, %p115
    %p117 = scmp.ne.s32.totalorder %s106, %s107
    %p118 = scmp.eq.s32.totalorder %s14, 0
    %p119 = por %p117, %p118
    %p120 = scmp.ne.s32.totalorder %s106, %s107
    %p121 = scmp.eq.s32.totalorder %s15, 1
    %p122 = por %p120, %p121
    %p124 = scmp.ne.s32.totalorder %s107, %s123
    %p125 = scmp.eq.s32.totalorder %s15, 0
    %p126 = por %p124, %p125
    %p127 = scmp.le.s32.totalorder 1, %s9
    %p128 = scmp.lt.s32.totalorder %s9, 3
    %p129 = pnand %p127, %p128
    %p130 = pneg %p129
    // Predicated region
    $region9: #{down_block_pallas.1} parent=5 // pred_check
      _
    $region10: #{down_block_pallas.1} parent=5 // pred_check_branch
      %132 = sbr.rel (%p129) target = $region12
    $region11: #{down_block_pallas.1} parent=5 // pred_region
      %s133 = ssub.s32 %s9, 1
      // Predicated region
      $region13: #{down_block_pallas.1} parent=11 // pred_check
        %p134 = pneg %p70
      $region14: #{down_block_pallas.1} parent=11 // pred_check_branch
        %136 = sbr.rel (%p134) target = $region16
      $region15: #{down_block_pallas.1} parent=11 // pred_region
        _
      $region16: #{down_block_pallas.1} parent=11 // pred_fallthru
        _
      // Predicated region
      $region17: #{down_block_pallas.1} parent=11 // pred_check
        %p137 = pneg %p91
      $region18: #{down_block_pallas.1} parent=11 // pred_check_branch
        %139 = sbr.rel (%p137) target = $region20
      $region19: #{down_block_pallas.1} parent=11 // pred_region
        _
      $region20: #{down_block_pallas.1} parent=11 // pred_fallthru
        _
    $region12: #{down_block_pallas.1} parent=5 // pred_fallthru
      _
    %p140 = scmp.lt.s32.totalorder %s9, 2
    // Predicated region
    $region21: #{down_block_pallas.1} parent=5 // pred_check
      %p141 = pneg %p140
    $region22: #{down_block_pallas.1} parent=5 // pred_check_branch
      %143 = sbr.rel (%p141) target = $region24
    $region23: #{down_block_pallas.1} parent=5 // pred_region
      // Predicated region
      $region25: #{down_block_pallas.1} parent=23 // pred_check
        %p144 = pneg %p43
      $region26: #{down_block_pallas.1} parent=23 // pred_check_branch
        %146 = sbr.rel (%p144) target = $region28
      $region27: #{down_block_pallas.1} parent=23 // pred_region
        %p147 = scmp.lt.s32.totalorder %s16, 1
        %s148 = scalar_select %p147, %s16, 1
        %p149 = scmp.lt.s32.totalorder %s17, 0
        %s150 = scalar_select %p149, %s17, 0
        %s151 = smul.addr %s150, 8
        %s152 = smul.addr %s148, 8
        %s153 = sadd.s32 %s151, %s152
        %s154 = smul.addr %s153, 4
        %s155 = scalar_lea.vmem %s0, %s154
      $region28: #{down_block_pallas.1} parent=23 // pred_fallthru
        _
    $region24: #{down_block_pallas.1} parent=5 // pred_fallthru
      _
    %p156 = scmp.le.s32.totalorder 1, %s9
    %p157 = scmp.lt.s32.totalorder %s9, 3
    %p158 = pnand %p156, %p157
    %p159 = pneg %p158
    // Predicated region
    $region29: #{down_block_pallas.1} parent=5 // pred_check
      _
    $region30: #{down_block_pallas.1} parent=5 // pred_check_branch
      %161 = sbr.rel (%p158) target = $region32
    $region31: #{down_block_pallas.1} parent=5 // pred_region
      %s162 = ssub.s32 %s9, 1
      %p163 = scmp.lt.s32.totalorder %s18, 1
      %s164 = scalar_select %p163, %s18, 1
      %p165 = scmp.lt.s32.totalorder %s19, 0
      %s166 = scalar_select %p165, %s19, 0
      %s167 = smul.addr %s166, 8
      %s168 = smul.addr %s164, 8
      %s169 = sadd.s32 %s167, %s168
      %s170 = smul.addr %s169, 4
      %s171 = scalar_lea.vmem %s0, %s170
      %p172 = pneg %p49
      %p173 = pneg %p46
      %p174 = pneg %p70
      %p175 = pneg %p67
      %p176 = pneg %p91
      %p177 = pneg %p88
      %p178 = pneg %p119
      %p179 = pneg %p116
      %p180 = scmp.lt.s32.totalorder %s18, 1
      %s181 = scalar_select %p180, %s18, 1
      %p182 = scmp.lt.s32.totalorder %s19, 0
      %s183 = scalar_select %p182, %s19, 0
      %s184 = sadd.s32 %s183, %s181
      %s185 = smul.addr %s184, 8
      %s186 = scalar_lea.vmem %s3, %s185
      %p187 = scmp.lt.s32.totalorder %s18, 1
      %s188 = scalar_select %p187, %s18, 1
      %p189 = scmp.lt.s32.totalorder %s19, 0
      %s190 = scalar_select %p189, %s19, 0
      %s191 = smul.addr %s190, 8
      %s192 = smul.addr %s188, 8
      %s193 = sadd.s32 %s191, %s192
      %s194 = smul.addr %s193, 4
      %s195 = scalar_lea.vmem %s0, %s194
      %p196 = scmp.lt.s32.totalorder %s18, 1
      %s197 = scalar_select %p196, %s18, 1
      %p198 = scmp.lt.s32.totalorder %s19, 0
      %s199 = scalar_select %p198, %s19, 0
      %s200 = sadd.s32 %s199, %s197
      %s201 = smul.addr %s200, 8
      %s202 = scalar_lea.vmem %s3, %s201
      %v206 = vlaneseq
      %v207 = vand.u32 %v206, 127
      %vm208 = vcmp.lt.s32.totalorder %v207, 0
      %v209 = vsub.s32 0, %v207
      %v210 = vsel %vm208, %v209, %v207
      %v211 = vshrl.u32 %v210, 3
      %v212 = vand.u32 %v210, 7
      %v213 = vsub.s32 0, %v212
      %v214 = vsel %vm208, %v213, %v212
      %vm215 = vcmp.ne.s32.totalorder %v214, 0
      %vm216 = vcmp.lt.s32.totalorder %v214, 0
      %vm217 = vmand %vm216, %vm215
      %v218 = vadd.s32 %v214, 8
      %v219 = vsel %vm217, %v218, %v214
      %vm220 = vcmp.eq.s32.totalorder %v219, 0
      %vm221 = vcmp.eq.s32.totalorder %v219, 7
      %v222 = vld [vmem:[%s2] sm:$0xff]
      %s223 = scalar_lea.vmem %s195, 24
      %v224 = vld [vmem:[%s223] sm:$0xf]
      %v225 = vld [vmem:[%s223 + $0x4] sm:$0xf]
      %v226 = vsel %vm220, 1, 0
      %vm227 = vcmp.eq.s32.totalorder %v226, 1
      %vm228 = vmpackc.low %vm227, %vm227
      %v229 = vsel %vm228, 0, %v224
      %v230 = vsel %vm228, 0, %v225
      %v231 = vld [vmem:[%s1] sm:$0xf]
      %v234 = vunpack.c.l.b16 %v229
      %v235 = vunpack.c.l.b16 %v230
      %v236 = vpack.c.b16 %v235, %v234
      %vm238 = vcmask 130048
      %v240 = vsel %vm238, %v231, 0
      %242 = vmatprep.subr.bf16.mxu0 0
      %243 = vmatpush1.bf16.msra.mxu0 %v236
      %244 = vmatprep.subr.bf16.mxu0 0
      %245 = vmatpush1.bf16.msra.mxu0 0
      %246 = vmatprep.subr.bf16.mxu0 0
      %247 = vmatpush1.bf16.msra.mxu0 0
      %248 = vmatprep.subr.bf16.mxu0 0
      %249 = vmatpush1.bf16.msra.mxu0 0
      %250 = vmatprep.subr.bf16.mxu0 0
      %251 = vmatpush1.bf16.msra.mxu0 0
      %252 = vmatprep.subr.bf16.mxu0 0
      %253 = vmatpush1.bf16.msra.mxu0 0
      %254 = vmatprep.subr.bf16.mxu0 0
      %255 = vmatpush1.bf16.msra.mxu0 0
      %256 = vmatprep.subr.bf16.mxu0 0
      %257 = vmatpush1.bf16.msra.mxu0 0
      %258 = vmatprep.subr.bf16.mxu0 0
      %259 = vmatpush1.bf16.msra.mxu0 0
      %260 = vmatprep.subr.bf16.mxu0 0
      %261 = vmatpush1.bf16.msra.mxu0 0
      %262 = vmatprep.subr.bf16.mxu0 0
      %263 = vmatpush1.bf16.msra.mxu0 0
      %264 = vmatprep.subr.bf16.mxu0 0
      %265 = vmatpush1.bf16.msra.mxu0 0
      %266 = vmatprep.subr.bf16.mxu0 0
      %267 = vmatpush1.bf16.msra.mxu0 0
      %268 = vmatprep.subr.bf16.mxu0 0
      %269 = vmatpush1.bf16.msra.mxu0 0
      %270 = vmatprep.subr.bf16.mxu0 0
      %271 = vmatpush1.bf16.msra.mxu0 0
      %272 = vmatprep.subr.bf16.mxu0 0
      %273 = vmatpush1.bf16.msra.mxu0 0
      %274 = vmatprep.mubr.bf16.mxu0 0
      %275 = vmatmul.mubr.bf16.gmra.mrb[0].mxu0 %v240
      %v276 = vpop.f32.mrb[0].mxu0
      %v277 = vadd.f32 0.0, %v276
      %v278 = vpop.f32.mrb[0].mxu0
      %v279 = vpop.f32.mrb[0].mxu0
      %v280 = vpop.f32.mrb[0].mxu0
      %281 = vdwg.mxu0
      %vm282 = vcmask 523264
      %283 = vst.msk [vmem:[#allocation2] sm:$0xff] %vm282, %v277
      %s284 = scalar_lea.vmem %s195, 16
      %v285 = vld [vmem:[%s284] sm:$0xf]
      %v286 = vld [vmem:[%s284 + $0x4] sm:$0xf]
      %s287 = scalar_lea.vmem %s1, 4
      %v288 = vld [vmem:[%s287] sm:$0xf]
      %v291 = vunpack.c.l.b16 %v285
      %v292 = vunpack.c.l.b16 %v286
      %v293 = vpack.c.b16 %v292, %v291
      %294 = vrot.lane.b32.xlu0 %v293, 127
      %v295 = vpop.permute.xlu0 %294
      %v298 = vsel %vm238, %v288, 0
      %300 = vmatprep.subr.bf16.mxu0 0
      %301 = vmatpush1.bf16.msra.mxu0 %v295
      %302 = vmatprep.subr.bf16.mxu0 0
      %303 = vmatpush1.bf16.msra.mxu0 0
      %304 = vmatprep.subr.bf16.mxu0 0
      %305 = vmatpush1.bf16.msra.mxu0 0
      %306 = vmatprep.subr.bf16.mxu0 0
      %307 = vmatpush1.bf16.msra.mxu0 0
      %308 = vmatprep.subr.bf16.mxu0 0
      %309 = vmatpush1.bf16.msra.mxu0 0
      %310 = vmatprep.subr.bf16.mxu0 0
      %311 = vmatpush1.bf16.msra.mxu0 0
      %312 = vmatprep.subr.bf16.mxu0 0
      %313 = vmatpush1.bf16.msra.mxu0 0
      %314 = vmatprep.subr.bf16.mxu0 0
      %315 = vmatpush1.bf16.msra.mxu0 0
      %316 = vmatprep.subr.bf16.mxu0 0
      %317 = vmatpush1.bf16.msra.mxu0 0
      %318 = vmatprep.subr.bf16.mxu0 0
      %319 = vmatpush1.bf16.msra.mxu0 0
      %320 = vmatprep.subr.bf16.mxu0 0
      %321 = vmatpush1.bf16.msra.mxu0 0
      %322 = vmatprep.subr.bf16.mxu0 0
      %323 = vmatpush1.bf16.msra.mxu0 0
      %324 = vmatprep.subr.bf16.mxu0 0
      %325 = vmatpush1.bf16.msra.mxu0 0
      %326 = vmatprep.subr.bf16.mxu0 0
      %327 = vmatpush1.bf16.msra.mxu0 0
      %328 = vmatprep.subr.bf16.mxu0 0
      %329 = vmatpush1.bf16.msra.mxu0 0
      %330 = vmatprep.subr.bf16.mxu0 0
      %331 = vmatpush1.bf16.msra.mxu0 0
      %332 = vmatprep.mubr.bf16.mxu0 0
      %333 = vmatmul.mubr.bf16.gmra.mrb[0].mxu0 %v298
      %v334 = vpop.f32.mrb[0].mxu0
      %v335 = vadd.f32 0.0, %v334
      %v336 = vpop.f32.mrb[0].mxu0
      %v337 = vpop.f32.mrb[0].mxu0
      %v338 = vpop.f32.mrb[0].mxu0
      %339 = vdwg.mxu0
      %v340 = vld [vmem:[#allocation2] sm:$0xff]
      %v341 = vadd.f32 %v340, %v335
      %342 = vst.msk [vmem:[#allocation2] sm:$0xff] %vm282, %v341
      %v343 = vld [vmem:[%s223] sm:$0xf]
      %v344 = vld [vmem:[%s223 + $0x4] sm:$0xf]
      %s345 = scalar_lea.vmem %s1, 8
      %v346 = vld [vmem:[%s345] sm:$0xf]
      %v349 = vunpack.c.l.b16 %v343
      %v350 = vunpack.c.l.b16 %v344
      %v351 = vpack.c.b16 %v350, %v349
      %352 = vrot.lane.b32.xlu0 %v351, 127
      %v353 = vpop.permute.xlu0 %352
      %v356 = vsel %vm238, %v346, 0
      %358 = vmatprep.subr.bf16.mxu0 0
      %359 = vmatpush1.bf16.msra.mxu0 %v353
      %360 = vmatprep.subr.bf16.mxu0 0
      %361 = vmatpush1.bf16.msra.mxu0 0
      %362 = vmatprep.subr.bf16.mxu0 0
      %363 = vmatpush1.bf16.msra.mxu0 0
      %364 = vmatprep.subr.bf16.mxu0 0
      %365 = vmatpush1.bf16.msra.mxu0 0
      %366 = vmatprep.subr.bf16.mxu0 0
      %367 = vmatpush1.bf16.msra.mxu0 0
      %368 = vmatprep.subr.bf16.mxu0 0
      %369 = vmatpush1.bf16.msra.mxu0 0
      %370 = vmatprep.subr.bf16.mxu0 0
      %371 = vmatpush1.bf16.msra.mxu0 0
      %372 = vmatprep.subr.bf16.mxu0 0
      %373 = vmatpush1.bf16.msra.mxu0 0
      %374 = vmatprep.subr.bf16.mxu0 0
      %375 = vmatpush1.bf16.msra.mxu0 0
      %376 = vmatprep.subr.bf16.mxu0 0
      %377 = vmatpush1.bf16.msra.mxu0 0
      %378 = vmatprep.subr.bf16.mxu0 0
      %379 = vmatpush1.bf16.msra.mxu0 0
      %380 = vmatprep.subr.bf16.mxu0 0
      %381 = vmatpush1.bf16.msra.mxu0 0
      %382 = vmatprep.subr.bf16.mxu0 0
      %383 = vmatpush1.bf16.msra.mxu0 0
      %384 = vmatprep.subr.bf16.mxu0 0
      %385 = vmatpush1.bf16.msra.mxu0 0
      %386 = vmatprep.subr.bf16.mxu0 0
      %387 = vmatpush1.bf16.msra.mxu0 0
      %388 = vmatprep.subr.bf16.mxu0 0
      %389 = vmatpush1.bf16.msra.mxu0 0
      %390 = vmatprep.mubr.bf16.mxu0 0
      %391 = vmatmul.mubr.bf16.gmra.mrb[0].mxu0 %v356
      %v392 = vpop.f32.mrb[0].mxu0
      %v393 = vadd.f32 0.0, %v392
      %v394 = vpop.f32.mrb[0].mxu0
      %v395 = vpop.f32.mrb[0].mxu0
      %v396 = vpop.f32.mrb[0].mxu0
      %397 = vdwg.mxu0
      %v398 = vld [vmem:[#allocation2] sm:$0xff]
      %v399 = vadd.f32 %v398, %v393
      %400 = vst.msk [vmem:[#allocation2] sm:$0xff] %vm282, %v399
      %s401 = scalar_lea.vmem %s195, 8
      %v402 = vld [vmem:[%s401] sm:$0xf]
      %v403 = vld [vmem:[%s401 + $0x4] sm:$0xf]
      %v404 = vsel %vm228, 65537, 0
      %405 = vrot.lane.b32.xlu0 %v404, 8
      %v406 = vpop.permute.xlu0 %405
      %vm407 = vcmp.ne.s16.totalorder %v406, 0
      %v408 = vsel %vm407, 0, %v402
      %v409 = vsel %vm407, 0, %v403
      %s410 = scalar_lea.vmem %s1, 12
      %v411 = vld [vmem:[%s410] sm:$0xf]
      %v414 = vunpack.c.l.b16 %v408
      %v415 = vunpack.c.l.b16 %v409
      %v416 = vpack.c.b16 %v415, %v414
      %417 = vrot.lane.b32.xlu0 %v416, 120
      %v418 = vpop.permute.xlu0 %417
      %v421 = vsel %vm238, %v411, 0
      %423 = vmatprep.subr.bf16.mxu0 0
      %424 = vmatpush1.bf16.msra.mxu0 %v418
      %425 = vmatprep.subr.bf16.mxu0 0
      %426 = vmatpush1.bf16.msra.mxu0 0
      %427 = vmatprep.subr.bf16.mxu0 0
      %428 = vmatpush1.bf16.msra.mxu0 0
      %429 = vmatprep.subr.bf16.mxu0 0
      %430 = vmatpush1.bf16.msra.mxu0 0
      %431 = vmatprep.subr.bf16.mxu0 0
      %432 = vmatpush1.bf16.msra.mxu0 0
      %433 = vmatprep.subr.bf16.mxu0 0
      %434 = vmatpush1.bf16.msra.mxu0 0
      %435 = vmatprep.subr.bf16.mxu0 0
      %436 = vmatpush1.bf16.msra.mxu0 0
      %437 = vmatprep.subr.bf16.mxu0 0
      %438 = vmatpush1.bf16.msra.mxu0 0
      %439 = vmatprep.subr.bf16.mxu0 0
      %440 = vmatpush1.bf16.msra.mxu0 0
      %441 = vmatprep.subr.bf16.mxu0 0
      %442 = vmatpush1.bf16.msra.mxu0 0
      %443 = vmatprep.subr.bf16.mxu0 0
      %444 = vmatpush1.bf16.msra.mxu0 0
      %445 = vmatprep.subr.bf16.mxu0 0
      %446 = vmatpush1.bf16.msra.mxu0 0
      %447 = vmatprep.subr.bf16.mxu0 0
      %448 = vmatpush1.bf16.msra.mxu0 0
      %449 = vmatprep.subr.bf16.mxu0 0
      %450 = vmatpush1.bf16.msra.mxu0 0
      %451 = vmatprep.subr.bf16.mxu0 0
      %452 = vmatpush1.bf16.msra.mxu0 0
      %453 = vmatprep.subr.bf16.mxu0 0
      %454 = vmatpush1.bf16.msra.mxu0 0
      %455 = vmatprep.mubr.bf16.mxu0 0
      %456 = vmatmul.mubr.bf16.gmra.mrb[0].mxu0 %v421
      %v457 = vpop.f32.mrb[0].mxu0
      %v458 = vadd.f32 0.0, %v457
      %v459 = vpop.f32.mrb[0].mxu0
      %v460 = vpop.f32.mrb[0].mxu0
      %v461 = vpop.f32.mrb[0].mxu0
      %462 = vdwg.mxu0
      %v463 = vld [vmem:[#allocation2] sm:$0xff]
      %v464 = vadd.f32 %v463, %v458
      %465 = vst.msk [vmem:[#allocation2] sm:$0xff] %vm282, %v464
      %v466 = vld [vmem:[%s195] sm:$0xf]
      %v467 = vld [vmem:[%s195 + $0x4] sm:$0xf]
      %s468 = scalar_lea.vmem %s1, 16
      %v469 = vld [vmem:[%s468] sm:$0xf]
      %v472 = vunpack.c.l.b16 %v466
      %v473 = vunpack.c.l.b16 %v467
      %v474 = vpack.c.b16 %v473, %v472
      %475 = vrot.lane.b32.xlu0 %v474, 119
      %v476 = vpop.permute.xlu0 %475
      %v479 = vsel %vm238, %v469, 0
      %481 = vmatprep.subr.bf16.mxu0 0
      %482 = vmatpush1.bf16.msra.mxu0 %v476
      %483 = vmatprep.subr.bf16.mxu0 0
      %484 = vmatpush1.bf16.msra.mxu0 0
      %485 = vmatprep.subr.bf16.mxu0 0
      %486 = vmatpush1.bf16.msra.mxu0 0
      %487 = vmatprep.subr.bf16.mxu0 0
      %488 = vmatpush1.bf16.msra.mxu0 0
      %489 = vmatprep.subr.bf16.mxu0 0
      %490 = vmatpush1.bf16.msra.mxu0 0
      %491 = vmatprep.subr.bf16.mxu0 0
      %492 = vmatpush1.bf16.msra.mxu0 0
      %493 = vmatprep.subr.bf16.mxu0 0
      %494 = vmatpush1.bf16.msra.mxu0 0
      %495 = vmatprep.subr.bf16.mxu0 0
      %496 = vmatpush1.bf16.msra.mxu0 0
      %497 = vmatprep.subr.bf16.mxu0 0
      %498 = vmatpush1.bf16.msra.mxu0 0
      %499 = vmatprep.subr.bf16.mxu0 0
      %500 = vmatpush1.bf16.msra.mxu0 0
      %501 = vmatprep.subr.bf16.mxu0 0
      %502 = vmatpush1.bf16.msra.mxu0 0
      %503 = vmatprep.subr.bf16.mxu0 0
      %504 = vmatpush1.bf16.msra.mxu0 0
      %505 = vmatprep.subr.bf16.mxu0 0
      %506 = vmatpush1.bf16.msra.mxu0 0
      %507 = vmatprep.subr.bf16.mxu0 0
      %508 = vmatpush1.bf16.msra.mxu0 0
      %509 = vmatprep.subr.bf16.mxu0 0
      %510 = vmatpush1.bf16.msra.mxu0 0
      %511 = vmatprep.subr.bf16.mxu0 0
      %512 = vmatpush1.bf16.msra.mxu0 0
      %513 = vmatprep.mubr.bf16.mxu0 0
      %514 = vmatmul.mubr.bf16.gmra.mrb[0].mxu0 %v479
      %v515 = vpop.f32.mrb[0].mxu0
      %v516 = vadd.f32 0.0, %v515
      %v517 = vpop.f32.mrb[0].mxu0
      %v518 = vpop.f32.mrb[0].mxu0
      %v519 = vpop.f32.mrb[0].mxu0
      %520 = vdwg.mxu0
      %v521 = vld [vmem:[#allocation2] sm:$0xff]
      %v522 = vadd.f32 %v521, %v516
      %523 = vst.msk [vmem:[#allocation2] sm:$0xff] %vm282, %v522
      %v524 = vld [vmem:[%s401] sm:$0xf]
      %v525 = vld [vmem:[%s401 + $0x4] sm:$0xf]
      %s526 = scalar_lea.vmem %s1, 20
      %v527 = vld [vmem:[%s526] sm:$0xf]
      %v530 = vunpack.c.l.b16 %v524
      %v531 = vunpack.c.l.b16 %v525
      %v532 = vpack.c.b16 %v531, %v530
      %533 = vrot.lane.b32.xlu0 %v532, 119
      %v534 = vpop.permute.xlu0 %533
      %v537 = vsel %vm238, %v527, 0
      %539 = vmatprep.subr.bf16.mxu0 0
      %540 = vmatpush1.bf16.msra.mxu0 %v534
      %541 = vmatprep.subr.bf16.mxu0 0
      %542 = vmatpush1.bf16.msra.mxu0 0
      %543 = vmatprep.subr.bf16.mxu0 0
      %544 = vmatpush1.bf16.msra.mxu0 0
      %545 = vmatprep.subr.bf16.mxu0 0
      %546 = vmatpush1.bf16.msra.mxu0 0
      %547 = vmatprep.subr.bf16.mxu0 0
      %548 = vmatpush1.bf16.msra.mxu0 0
      %549 = vmatprep.subr.bf16.mxu0 0
      %550 = vmatpush1.bf16.msra.mxu0 0
      %551 = vmatprep.subr.bf16.mxu0 0
      %552 = vmatpush1.bf16.msra.mxu0 0
      %553 = vmatprep.subr.bf16.mxu0 0
      %554 = vmatpush1.bf16.msra.mxu0 0
      %555 = vmatprep.subr.bf16.mxu0 0
      %556 = vmatpush1.bf16.msra.mxu0 0
      %557 = vmatprep.subr.bf16.mxu0 0
      %558 = vmatpush1.bf16.msra.mxu0 0
      %559 = vmatprep.subr.bf16.mxu0 0
      %560 = vmatpush1.bf16.msra.mxu0 0
      %561 = vmatprep.subr.bf16.mxu0 0
      %562 = vmatpush1.bf16.msra.mxu0 0
      %563 = vmatprep.subr.bf16.mxu0 0
      %564 = vmatpush1.bf16.msra.mxu0 0
      %565 = vmatprep.subr.bf16.mxu0 0
      %566 = vmatpush1.bf16.msra.mxu0 0
      %567 = vmatprep.subr.bf16.mxu0 0
      %568 = vmatpush1.bf16.msra.mxu0 0
      %569 = vmatprep.subr.bf16.mxu0 0
      %570 = vmatpush1.bf16.msra.mxu0 0
      %571 = vmatprep.mubr.bf16.mxu0 0
      %572 = vmatmul.mubr.bf16.gmra.mrb[0].mxu0 %v537
      %v573 = vpop.f32.mrb[0].mxu0
      %v574 = vadd.f32 0.0, %v573
      %v575 = vpop.f32.mrb[0].mxu0
      %v576 = vpop.f32.mrb[0].mxu0
      %v577 = vpop.f32.mrb[0].mxu0
      %578 = vdwg.mxu0
      %v579 = vld [vmem:[#allocation2] sm:$0xff]
      %v580 = vadd.f32 %v579, %v574
      %581 = vst.msk [vmem:[#allocation2] sm:$0xff] %vm282, %v580
      %v582 = vld [vmem:[%s223] sm:$0xf]
      %v583 = vld [vmem:[%s223 + $0x4] sm:$0xf]
      %v584 = vsel %vm407, 0, %v582
      %v585 = vsel %vm407, 0, %v583
      %s586 = scalar_lea.vmem %s1, 24
      %v587 = vld [vmem:[%s586] sm:$0xf]
      %v590 = vunpack.c.l.b16 %v584
      %v591 = vunpack.c.l.b16 %v585
      %v592 = vpack.c.b16 %v591, %v590
      %593 = vrot.lane.b32.xlu0 %v592, 120
      %v594 = vpop.permute.xlu0 %593
      %v597 = vsel %vm238, %v587, 0
      %599 = vmatprep.subr.bf16.mxu0 0
      %600 = vmatpush1.bf16.msra.mxu0 %v594
      %601 = vmatprep.subr.bf16.mxu0 0
      %602 = vmatpush1.bf16.msra.mxu0 0
      %603 = vmatprep.subr.bf16.mxu0 0
      %604 = vmatpush1.bf16.msra.mxu0 0
      %605 = vmatprep.subr.bf16.mxu0 0
      %606 = vmatpush1.bf16.msra.mxu0 0
      %607 = vmatprep.subr.bf16.mxu0 0
      %608 = vmatpush1.bf16.msra.mxu0 0
      %609 = vmatprep.subr.bf16.mxu0 0
      %610 = vmatpush1.bf16.msra.mxu0 0
      %611 = vmatprep.subr.bf16.mxu0 0
      %612 = vmatpush1.bf16.msra.mxu0 0
      %613 = vmatprep.subr.bf16.mxu0 0
      %614 = vmatpush1.bf16.msra.mxu0 0
      %615 = vmatprep.subr.bf16.mxu0 0
      %616 = vmatpush1.bf16.msra.mxu0 0
      %617 = vmatprep.subr.bf16.mxu0 0
      %618 = vmatpush1.bf16.msra.mxu0 0
      %619 = vmatprep.subr.bf16.mxu0 0
      %620 = vmatpush1.bf16.msra.mxu0 0
      %621 = vmatprep.subr.bf16.mxu0 0
      %622 = vmatpush1.bf16.msra.mxu0 0
      %623 = vmatprep.subr.bf16.mxu0 0
      %624 = vmatpush1.bf16.msra.mxu0 0
      %625 = vmatprep.subr.bf16.mxu0 0
      %626 = vmatpush1.bf16.msra.mxu0 0
      %627 = vmatprep.subr.bf16.mxu0 0
      %628 = vmatpush1.bf16.msra.mxu0 0
      %629 = vmatprep.subr.bf16.mxu0 0
      %630 = vmatpush1.bf16.msra.mxu0 0
      %631 = vmatprep.mubr.bf16.mxu0 0
      %632 = vmatmul.mubr.bf16.gmra.mrb[0].mxu0 %v597
      %v633 = vpop.f32.mrb[0].mxu0
      %v634 = vadd.f32 0.0, %v633
      %v635 = vpop.f32.mrb[0].mxu0
      %v636 = vpop.f32.mrb[0].mxu0
      %v637 = vpop.f32.mrb[0].mxu0
      %638 = vdwg.mxu0
      %v639 = vld [vmem:[#allocation2] sm:$0xff]
      %v640 = vadd.f32 %v639, %v634
      %641 = vst.msk [vmem:[#allocation2] sm:$0xff] %vm282, %v640
      %v642 = vld [vmem:[%s284] sm:$0xf]
      %v643 = vld [vmem:[%s284 + $0x4] sm:$0xf]
      %s644 = scalar_lea.vmem %s1, 28
      %v645 = vld [vmem:[%s644] sm:$0xf]
      %v648 = vunpack.c.l.b16 %v642
      %v649 = vunpack.c.l.b16 %v643
      %v650 = vpack.c.b16 %v649, %v648
      %651 = vrot.lane.b32.xlu0 %v650, 119
      %v652 = vpop.permute.xlu0 %651
      %v655 = vsel %vm238, %v645, 0
      %657 = vmatprep.subr.bf16.mxu0 0
      %658 = vmatpush1.bf16.msra.mxu0 %v652
      %659 = vmatprep.subr.bf16.mxu0 0
      %660 = vmatpush1.bf16.msra.mxu0 0
      %661 = vmatprep.subr.bf16.mxu0 0
      %662 = vmatpush1.bf16.msra.mxu0 0
      %663 = vmatprep.subr.bf16.mxu0 0
      %664 = vmatpush1.bf16.msra.mxu0 0
      %665 = vmatprep.subr.bf16.mxu0 0
      %666 = vmatpush1.bf16.msra.mxu0 0
      %667 = vmatprep.subr.bf16.mxu0 0
      %668 = vmatpush1.bf16.msra.mxu0 0
      %669 = vmatprep.subr.bf16.mxu0 0
      %670 = vmatpush1.bf16.msra.mxu0 0
      %671 = vmatprep.subr.bf16.mxu0 0
      %672 = vmatpush1.bf16.msra.mxu0 0
      %673 = vmatprep.subr.bf16.mxu0 0
      %674 = vmatpush1.bf16.msra.mxu0 0
      %675 = vmatprep.subr.bf16.mxu0 0
      %676 = vmatpush1.bf16.msra.mxu0 0
      %677 = vmatprep.subr.bf16.mxu0 0
      %678 = vmatpush1.bf16.msra.mxu0 0
      %679 = vmatprep.subr.bf16.mxu0 0
      %680 = vmatpush1.bf16.msra.mxu0 0
      %681 = vmatprep.subr.bf16.mxu0 0
      %682 = vmatpush1.bf16.msra.mxu0 0
      %683 = vmatprep.subr.bf16.mxu0 0
      %684 = vmatpush1.bf16.msra.mxu0 0
      %685 = vmatprep.subr.bf16.mxu0 0
      %686 = vmatpush1.bf16.msra.mxu0 0
      %687 = vmatprep.subr.bf16.mxu0 0
      %688 = vmatpush1.bf16.msra.mxu0 0
      %689 = vmatprep.mubr.bf16.mxu0 0
      %690 = vmatmul.mubr.bf16.gmra.mrb[0].mxu0 %v655
      %v691 = vpop.f32.mrb[0].mxu0
      %v692 = vadd.f32 0.0, %v691
      %v693 = vpop.f32.mrb[0].mxu0
      %v694 = vpop.f32.mrb[0].mxu0
      %v695 = vpop.f32.mrb[0].mxu0
      %696 = vdwg.mxu0
      %v697 = vld [vmem:[#allocation2] sm:$0xff]
      %v698 = vadd.f32 %v697, %v692
      %699 = vst.msk [vmem:[#allocation2] sm:$0xff] %vm282, %v698
      %v700 = vld [vmem:[%s223] sm:$0xf]
      %v701 = vld [vmem:[%s223 + $0x4] sm:$0xf]
      %s702 = scalar_lea.vmem %s1, 32
      %v703 = vld [vmem:[%s702] sm:$0xf]
      %v706 = vunpack.c.l.b16 %v700
      %v707 = vunpack.c.l.b16 %v701
      %v708 = vpack.c.b16 %v707, %v706
      %709 = vrot.lane.b32.xlu0 %v708, 119
      %v710 = vpop.permute.xlu0 %709
      %v713 = vsel %vm238, %v703, 0
      %715 = vmatprep.subr.bf16.mxu0 0
      %716 = vmatpush1.bf16.msra.mxu0 %v710
      %717 = vmatprep.subr.bf16.mxu0 0
      %718 = vmatpush1.bf16.msra.mxu0 0
      %719 = vmatprep.subr.bf16.mxu0 0
      %720 = vmatpush1.bf16.msra.mxu0 0
      %721 = vmatprep.subr.bf16.mxu0 0
      %722 = vmatpush1.bf16.msra.mxu0 0
      %723 = vmatprep.subr.bf16.mxu0 0
      %724 = vmatpush1.bf16.msra.mxu0 0
      %725 = vmatprep.subr.bf16.mxu0 0
      %726 = vmatpush1.bf16.msra.mxu0 0
      %727 = vmatprep.subr.bf16.mxu0 0
      %728 = vmatpush1.bf16.msra.mxu0 0
      %729 = vmatprep.subr.bf16.mxu0 0
      %730 = vmatpush1.bf16.msra.mxu0 0
      %731 = vmatprep.subr.bf16.mxu0 0
      %732 = vmatpush1.bf16.msra.mxu0 0
      %733 = vmatprep.subr.bf16.mxu0 0
      %734 = vmatpush1.bf16.msra.mxu0 0
      %735 = vmatprep.subr.bf16.mxu0 0
      %736 = vmatpush1.bf16.msra.mxu0 0
      %737 = vmatprep.subr.bf16.mxu0 0
      %738 = vmatpush1.bf16.msra.mxu0 0
      %739 = vmatprep.subr.bf16.mxu0 0
      %740 = vmatpush1.bf16.msra.mxu0 0
      %741 = vmatprep.subr.bf16.mxu0 0
      %742 = vmatpush1.bf16.msra.mxu0 0
      %743 = vmatprep.subr.bf16.mxu0 0
      %744 = vmatpush1.bf16.msra.mxu0 0
      %745 = vmatprep.subr.bf16.mxu0 0
      %746 = vmatpush1.bf16.msra.mxu0 0
      %747 = vmatprep.mubr.bf16.mxu0 0
      %748 = vmatmul.mubr.bf16.gmra.mrb[0].mxu0 %v713
      %v749 = vpop.f32.mrb[0].mxu0
      %v750 = vadd.f32 0.0, %v749
      %v751 = vpop.f32.mrb[0].mxu0
      %v752 = vpop.f32.mrb[0].mxu0
      %v753 = vpop.f32.mrb[0].mxu0
      %754 = vdwg.mxu0
      %v755 = vld [vmem:[#allocation2] sm:$0xff]
      %v756 = vadd.f32 %v755, %v750
      %757 = vst.msk [vmem:[#allocation2] sm:$0xff] %vm282, %v756
      %v758 = vld [vmem:[#allocation2] sm:$0xff]
      %760 = vset.pattern.permute.xlu0 0
      %761 = vperm.xlu0 %760, %v222
      %v762 = vpop.permute.xlu0 %761
      %v764 = vadd.f32 %v758, %v762
      %v765 = vmax.f32 %v764, 0.0
      %766 = vst.msk [vmem:[#allocation3] sm:$0xff] %vm282, %v765
      %v767 = vld [vmem:[%s284] sm:$0xf]
      %v768 = vld [vmem:[%s284 + $0x4] sm:$0xf]
      %v769 = vld [vmem:[%s1] sm:$0xf]
      %v772 = vunpack.c.l.b16 %v767
      %v773 = vunpack.c.l.b16 %v768
      %v774 = vpack.c.b16 %v773, %v772
      %775 = vrot.lane.b32.xlu0 %v774, 127
      %v776 = vpop.permute.xlu0 %775
      %v779 = vsel %vm238, %v769, 0
      %781 = vmatprep.subr.bf16.mxu0 0
      %782 = vmatpush1.bf16.msra.mxu0 %v776
      %783 = vmatprep.subr.bf16.mxu0 0
      %784 = vmatpush1.bf16.msra.mxu0 0
      %785 = vmatprep.subr.bf16.mxu0 0
      %786 = vmatpush1.bf16.msra.mxu0 0
      %787 = vmatprep.subr.bf16.mxu0 0
      %788 = vmatpush1.bf16.msra.mxu0 0
      %789 = vmatprep.subr.bf16.mxu0 0
      %790 = vmatpush1.bf16.msra.mxu0 0
      %791 = vmatprep.subr.bf16.mxu0 0
      %792 = vmatpush1.bf16.msra.mxu0 0
      %793 = vmatprep.subr.bf16.mxu0 0
      %794 = vmatpush1.bf16.msra.mxu0 0
      %795 = vmatprep.subr.bf16.mxu0 0
      %796 = vmatpush1.bf16.msra.mxu0 0
      %797 = vmatprep.subr.bf16.mxu0 0
      %798 = vmatpush1.bf16.msra.mxu0 0
      %799 = vmatprep.subr.bf16.mxu0 0
      %800 = vmatpush1.bf16.msra.mxu0 0
      %801 = vmatprep.subr.bf16.mxu0 0
      %802 = vmatpush1.bf16.msra.mxu0 0
      %803 = vmatprep.subr.bf16.mxu0 0
      %804 = vmatpush1.bf16.msra.mxu0 0
      %805 = vmatprep.subr.bf16.mxu0 0
      %806 = vmatpush1.bf16.msra.mxu0 0
      %807 = vmatprep.subr.bf16.mxu0 0
      %808 = vmatpush1.bf16.msra.mxu0 0
      %809 = vmatprep.subr.bf16.mxu0 0
      %810 = vmatpush1.bf16.msra.mxu0 0
      %811 = vmatprep.subr.bf16.mxu0 0
      %812 = vmatpush1.bf16.msra.mxu0 0
      %813 = vmatprep.mubr.bf16.mxu0 0
      %814 = vmatmul.mubr.bf16.gmra.mrb[0].mxu0 %v779
      %v815 = vpop.f32.mrb[0].mxu0
      %v816 = vadd.f32 0.0, %v815
      %v817 = vpop.f32.mrb[0].mxu0
      %v818 = vpop.f32.mrb[0].mxu0
      %v819 = vpop.f32.mrb[0].mxu0
      %820 = vdwg.mxu0
      %821 = vst.msk [vmem:[#allocation2] sm:$0xff] %vm282, %v816
      %v822 = vld [vmem:[%s223] sm:$0xf]
      %v823 = vld [vmem:[%s223 + $0x4] sm:$0xf]
      %v824 = vld [vmem:[%s287] sm:$0xf]
      %v827 = vunpack.c.l.b16 %v822
      %v828 = vunpack.c.l.b16 %v823
      %v829 = vpack.c.b16 %v828, %v827
      %830 = vrot.lane.b32.xlu0 %v829, 127
      %v831 = vpop.permute.xlu0 %830
      %v834 = vsel %vm238, %v824, 0
      %836 = vmatprep.subr.bf16.mxu0 0
      %837 = vmatpush1.bf16.msra.mxu0 %v831
      %838 = vmatprep.subr.bf16.mxu0 0
      %839 = vmatpush1.bf16.msra.mxu0 0
      %840 = vmatprep.subr.bf16.mxu0 0
      %841 = vmatpush1.bf16.msra.mxu0 0
      %842 = vmatprep.subr.bf16.mxu0 0
      %843 = vmatpush1.bf16.msra.mxu0 0
      %844 = vmatprep.subr.bf16.mxu0 0
      %845 = vmatpush1.bf16.msra.mxu0 0
      %846 = vmatprep.subr.bf16.mxu0 0
      %847 = vmatpush1.bf16.msra.mxu0 0
      %848 = vmatprep.subr.bf16.mxu0 0
      %849 = vmatpush1.bf16.msra.mxu0 0
      %850 = vmatprep.subr.bf16.mxu0 0
      %851 = vmatpush1.bf16.msra.mxu0 0
      %852 = vmatprep.subr.bf16.mxu0 0
      %853 = vmatpush1.bf16.msra.mxu0 0
      %854 = vmatprep.subr.bf16.mxu0 0
      %855 = vmatpush1.bf16.msra.mxu0 0
      %856 = vmatprep.subr.bf16.mxu0 0
      %857 = vmatpush1.bf16.msra.mxu0 0
      %858 = vmatprep.subr.bf16.mxu0 0
      %859 = vmatpush1.bf16.msra.mxu0 0
      %860 = vmatprep.subr.bf16.mxu0 0
      %861 = vmatpush1.bf16.msra.mxu0 0
      %862 = vmatprep.subr.bf16.mxu0 0
      %863 = vmatpush1.bf16.msra.mxu0 0
      %864 = vmatprep.subr.bf16.mxu0 0
      %865 = vmatpush1.bf16.msra.mxu0 0
      %866 = vmatprep.subr.bf16.mxu0 0
      %867 = vmatpush1.bf16.msra.mxu0 0
      %868 = vmatprep.mubr.bf16.mxu0 0
      %869 = vmatmul.mubr.bf16.gmra.mrb[0].mxu0 %v834
      %v870 = vpop.f32.mrb[0].mxu0
      %v871 = vadd.f32 0.0, %v870
      %v872 = vpop.f32.mrb[0].mxu0
      %v873 = vpop.f32.mrb[0].mxu0
      %v874 = vpop.f32.mrb[0].mxu0
      %875 = vdwg.mxu0
      %v876 = vld [vmem:[#allocation2] sm:$0xff]
      %v877 = vadd.f32 %v876, %v871
      %878 = vst.msk [vmem:[#allocation2] sm:$0xff] %vm282, %v877
      %v879 = vld [vmem:[%s284] sm:$0xf]
      %v880 = vld [vmem:[%s284 + $0x4] sm:$0xf]
      %v881 = vsel %vm221, 1, 0
      %vm882 = vcmp.eq.s32.totalorder %v881, 1
      %vm883 = vmpackc.low %vm882, %vm882
      %v884 = vsel %vm883, 65537, 0
      %885 = vrot.lane.b32.xlu0 %v884, 2
      %v886 = vpop.permute.xlu0 %885
      %vm887 = vcmp.ne.s16.totalorder %v886, 0
      %v888 = vsel %vm887, 0, %v879
      %v889 = vsel %vm887, 0, %v880
      %v890 = vld [vmem:[%s345] sm:$0xf]
      %v893 = vunpack.c.l.b16 %v888
      %v894 = vunpack.c.l.b16 %v889
      %v895 = vpack.c.b16 %v894, %v893
      %896 = vrot.lane.b32.xlu0 %v895, 126
      %v897 = vpop.permute.xlu0 %896
      %v900 = vsel %vm238, %v890, 0
      %902 = vmatprep.subr.bf16.mxu0 0
      %903 = vmatpush1.bf16.msra.mxu0 %v897
      %904 = vmatprep.subr.bf16.mxu0 0
      %905 = vmatpush1.bf16.msra.mxu0 0
      %906 = vmatprep.subr.bf16.mxu0 0
      %907 = vmatpush1.bf16.msra.mxu0 0
      %908 = vmatprep.subr.bf16.mxu0 0
      %909 = vmatpush1.bf16.msra.mxu0 0
      %910 = vmatprep.subr.bf16.mxu0 0
      %911 = vmatpush1.bf16.msra.mxu0 0
      %912 = vmatprep.subr.bf16.mxu0 0
      %913 = vmatpush1.bf16.msra.mxu0 0
      %914 = vmatprep.subr.bf16.mxu0 0
      %915 = vmatpush1.bf16.msra.mxu0 0
      %916 = vmatprep.subr.bf16.mxu0 0
      %917 = vmatpush1.bf16.msra.mxu0 0
      %918 = vmatprep.subr.bf16.mxu0 0
      %919 = vmatpush1.bf16.msra.mxu0 0
      %920 = vmatprep.subr.bf16.mxu0 0
      %921 = vmatpush1.bf16.msra.mxu0 0
      %922 = vmatprep.subr.bf16.mxu0 0
      %923 = vmatpush1.bf16.msra.mxu0 0
      %924 = vmatprep.subr.bf16.mxu0 0
      %925 = vmatpush1.bf16.msra.mxu0 0
      %926 = vmatprep.subr.bf16.mxu0 0
      %927 = vmatpush1.bf16.msra.mxu0 0
      %928 = vmatprep.subr.bf16.mxu0 0
      %929 = vmatpush1.bf16.msra.mxu0 0
      %930 = vmatprep.subr.bf16.mxu0 0
      %931 = vmatpush1.bf16.msra.mxu0 0
      %932 = vmatprep.subr.bf16.mxu0 0
      %933 = vmatpush1.bf16.msra.mxu0 0
      %934 = vmatprep.mubr.bf16.mxu0 0
      %935 = vmatmul.mubr.bf16.gmra.mrb[0].mxu0 %v900
      %v936 = vpop.f32.mrb[0].mxu0
      %v937 = vadd.f32 0.0, %v936
      %v938 = vpop.f32.mrb[0].mxu0
      %v939 = vpop.f32.mrb[0].mxu0
      %v940 = vpop.f32.mrb[0].mxu0
      %941 = vdwg.mxu0
      %v942 = vld [vmem:[#allocation2] sm:$0xff]
      %v943 = vadd.f32 %v942, %v937
      %944 = vst.msk [vmem:[#allocation2] sm:$0xff] %vm282, %v943
      %v945 = vld [vmem:[%s195] sm:$0xf]
      %v946 = vld [vmem:[%s195 + $0x4] sm:$0xf]
      %v947 = vld [vmem:[%s410] sm:$0xf]
      %v950 = vunpack.c.l.b16 %v945
      %v951 = vunpack.c.l.b16 %v946
      %v952 = vpack.c.b16 %v951, %v950
      %953 = vrot.lane.b32.xlu0 %v952, 119
      %v954 = vpop.permute.xlu0 %953
      %v957 = vsel %vm238, %v947, 0
      %959 = vmatprep.subr.bf16.mxu0 0
      %960 = vmatpush1.bf16.msra.mxu0 %v954
      %961 = vmatprep.subr.bf16.mxu0 0
      %962 = vmatpush1.bf16.msra.mxu0 0
      %963 = vmatprep.subr.bf16.mxu0 0
      %964 = vmatpush1.bf16.msra.mxu0 0
      %965 = vmatprep.subr.bf16.mxu0 0
      %966 = vmatpush1.bf16.msra.mxu0 0
      %967 = vmatprep.subr.bf16.mxu0 0
      %968 = vmatpush1.bf16.msra.mxu0 0
      %969 = vmatprep.subr.bf16.mxu0 0
      %970 = vmatpush1.bf16.msra.mxu0 0
      %971 = vmatprep.subr.bf16.mxu0 0
      %972 = vmatpush1.bf16.msra.mxu0 0
      %973 = vmatprep.subr.bf16.mxu0 0
      %974 = vmatpush1.bf16.msra.mxu0 0
      %975 = vmatprep.subr.bf16.mxu0 0
      %976 = vmatpush1.bf16.msra.mxu0 0
      %977 = vmatprep.subr.bf16.mxu0 0
      %978 = vmatpush1.bf16.msra.mxu0 0
      %979 = vmatprep.subr.bf16.mxu0 0
      %980 = vmatpush1.bf16.msra.mxu0 0
      %981 = vmatprep.subr.bf16.mxu0 0
      %982 = vmatpush1.bf16.msra.mxu0 0
      %983 = vmatprep.subr.bf16.mxu0 0
      %984 = vmatpush1.bf16.msra.mxu0 0
      %985 = vmatprep.subr.bf16.mxu0 0
      %986 = vmatpush1.bf16.msra.mxu0 0
      %987 = vmatprep.subr.bf16.mxu0 0
      %988 = vmatpush1.bf16.msra.mxu0 0
      %989 = vmatprep.subr.bf16.mxu0 0
      %990 = vmatpush1.bf16.msra.mxu0 0
      %991 = vmatprep.mubr.bf16.mxu0 0
      %992 = vmatmul.mubr.bf16.gmra.mrb[0].mxu0 %v957
      %v993 = vpop.f32.mrb[0].mxu0
      %v994 = vadd.f32 0.0, %v993
      %v995 = vpop.f32.mrb[0].mxu0
      %v996 = vpop.f32.mrb[0].mxu0
      %v997 = vpop.f32.mrb[0].mxu0
      %998 = vdwg.mxu0
      %v999 = vld [vmem:[#allocation2] sm:$0xff]
      %v1000 = vadd.f32 %v999, %v994
      %1001 = vst.msk [vmem:[#allocation2] sm:$0xff] %vm282, %v1000
      %v1002 = vld [vmem:[%s401] sm:$0xf]
      %v1003 = vld [vmem:[%s401 + $0x4] sm:$0xf]
      %v1004 = vld [vmem:[%s468] sm:$0xf]
      %v1007 = vunpack.c.l.b16 %v1002
      %v1008 = vunpack.c.l.b16 %v1003
      %v1009 = vpack.c.b16 %v1008, %v1007
      %1010 = vrot.lane.b32.xlu0 %v1009, 119
      %v1011 = vpop.permute.xlu0 %1010
      %v1014 = vsel %vm238, %v1004, 0
      %1016 = vmatprep.subr.bf16.mxu0 0
      %1017 = vmatpush1.bf16.msra.mxu0 %v1011
      %1018 = vmatprep.subr.bf16.mxu0 0
      %1019 = vmatpush1.bf16.msra.mxu0 0
      %1020 = vmatprep.subr.bf16.mxu0 0
      %1021 = vmatpush1.bf16.msra.mxu0 0
      %1022 = vmatprep.subr.bf16.mxu0 0
      %1023 = vmatpush1.bf16.msra.mxu0 0
      %1024 = vmatprep.subr.bf16.mxu0 0
      %1025 = vmatpush1.bf16.msra.mxu0 0
      %1026 = vmatprep.subr.bf16.mxu0 0
      %1027 = vmatpush1.bf16.msra.mxu0 0
      %1028 = vmatprep.subr.bf16.mxu0 0
      %1029 = vmatpush1.bf16.msra.mxu0 0
      %1030 = vmatprep.subr.bf16.mxu0 0
      %1031 = vmatpush1.bf16.msra.mxu0 0
      %1032 = vmatprep.subr.bf16.mxu0 0
      %1033 = vmatpush1.bf16.msra.mxu0 0
      %1034 = vmatprep.subr.bf16.mxu0 0
      %1035 = vmatpush1.bf16.msra.mxu0 0
      %1036 = vmatprep.subr.bf16.mxu0 0
      %1037 = vmatpush1.bf16.msra.mxu0 0
      %1038 = vmatprep.subr.bf16.mxu0 0
      %1039 = vmatpush1.bf16.msra.mxu0 0
      %1040 = vmatprep.subr.bf16.mxu0 0
      %1041 = vmatpush1.bf16.msra.mxu0 0
      %1042 = vmatprep.subr.bf16.mxu0 0
      %1043 = vmatpush1.bf16.msra.mxu0 0
      %1044 = vmatprep.subr.bf16.mxu0 0
      %1045 = vmatpush1.bf16.msra.mxu0 0
      %1046 = vmatprep.subr.bf16.mxu0 0
      %1047 = vmatpush1.bf16.msra.mxu0 0
      %1048 = vmatprep.mubr.bf16.mxu0 0
      %1049 = vmatmul.mubr.bf16.gmra.mrb[0].mxu0 %v1014
      %v1050 = vpop.f32.mrb[0].mxu0
      %v1051 = vadd.f32 0.0, %v1050
      %v1052 = vpop.f32.mrb[0].mxu0
      %v1053 = vpop.f32.mrb[0].mxu0
      %v1054 = vpop.f32.mrb[0].mxu0
      %1055 = vdwg.mxu0
      %v1056 = vld [vmem:[#allocation2] sm:$0xff]
      %v1057 = vadd.f32 %v1056, %v1051
      %1058 = vst.msk [vmem:[#allocation2] sm:$0xff] %vm282, %v1057
      %v1059 = vld [vmem:[%s195] sm:$0xf]
      %v1060 = vld [vmem:[%s195 + $0x4] sm:$0xf]
      %1061 = vrot.lane.b32.xlu0 %v884, 10
      %v1062 = vpop.permute.xlu0 %1061
      %vm1063 = vcmp.ne.s16.totalorder %v1062, 0
      %v1064 = vsel %vm1063, 0, %v1059
      %v1065 = vsel %vm1063, 0, %v1060
      %v1066 = vld [vmem:[%s526] sm:$0xf]
      %v1069 = vunpack.c.l.b16 %v1064
      %v1070 = vunpack.c.l.b16 %v1065
      %v1071 = vpack.c.b16 %v1070, %v1069
      %1072 = vrot.lane.b32.xlu0 %v1071, 118
      %v1073 = vpop.permute.xlu0 %1072
      %v1076 = vsel %vm238, %v1066, 0
      %1078 = vmatprep.subr.bf16.mxu0 0
      %1079 = vmatpush1.bf16.msra.mxu0 %v1073
      %1080 = vmatprep.subr.bf16.mxu0 0
      %1081 = vmatpush1.bf16.msra.mxu0 0
      %1082 = vmatprep.subr.bf16.mxu0 0
      %1083 = vmatpush1.bf16.msra.mxu0 0
      %1084 = vmatprep.subr.bf16.mxu0 0
      %1085 = vmatpush1.bf16.msra.mxu0 0
      %1086 = vmatprep.subr.bf16.mxu0 0
      %1087 = vmatpush1.bf16.msra.mxu0 0
      %1088 = vmatprep.subr.bf16.mxu0 0
      %1089 = vmatpush1.bf16.msra.mxu0 0
      %1090 = vmatprep.subr.bf16.mxu0 0
      %1091 = vmatpush1.bf16.msra.mxu0 0
      %1092 = vmatprep.subr.bf16.mxu0 0
      %1093 = vmatpush1.bf16.msra.mxu0 0
      %1094 = vmatprep.subr.bf16.mxu0 0
      %1095 = vmatpush1.bf16.msra.mxu0 0
      %1096 = vmatprep.subr.bf16.mxu0 0
      %1097 = vmatpush1.bf16.msra.mxu0 0
      %1098 = vmatprep.subr.bf16.mxu0 0
      %1099 = vmatpush1.bf16.msra.mxu0 0
      %1100 = vmatprep.subr.bf16.mxu0 0
      %1101 = vmatpush1.bf16.msra.mxu0 0
      %1102 = vmatprep.subr.bf16.mxu0 0
      %1103 = vmatpush1.bf16.msra.mxu0 0
      %1104 = vmatprep.subr.bf16.mxu0 0
      %1105 = vmatpush1.bf16.msra.mxu0 0
      %1106 = vmatprep.subr.bf16.mxu0 0
      %1107 = vmatpush1.bf16.msra.mxu0 0
      %1108 = vmatprep.subr.bf16.mxu0 0
      %1109 = vmatpush1.bf16.msra.mxu0 0
      %1110 = vmatprep.mubr.bf16.mxu0 0
      %1111 = vmatmul.mubr.bf16.gmra.mrb[0].mxu0 %v1076
      %v1112 = vpop.f32.mrb[0].mxu0
      %v1113 = vadd.f32 0.0, %v1112
      %v1114 = vpop.f32.mrb[0].mxu0
      %v1115 = vpop.f32.mrb[0].mxu0
      %v1116 = vpop.f32.mrb[0].mxu0
      %1117 = vdwg.mxu0
      %v1118 = vld [vmem:[#allocation2] sm:$0xff]
      %v1119 = vadd.f32 %v1118, %v1113
      %1120 = vst.msk [vmem:[#allocation2] sm:$0xff] %vm282, %v1119
      %v1121 = vld [vmem:[%s284] sm:$0xf]
      %v1122 = vld [vmem:[%s284 + $0x4] sm:$0xf]
      %v1123 = vld [vmem:[%s586] sm:$0xf]
      %v1126 = vunpack.c.l.b16 %v1121
      %v1127 = vunpack.c.l.b16 %v1122
      %v1128 = vpack.c.b16 %v1127, %v1126
      %1129 = vrot.lane.b32.xlu0 %v1128, 119
      %v1130 = vpop.permute.xlu0 %1129
      %v1133 = vsel %vm238, %v1123, 0
      %1135 = vmatprep.subr.bf16.mxu0 0
      %1136 = vmatpush1.bf16.msra.mxu0 %v1130
      %1137 = vmatprep.subr.bf16.mxu0 0
      %1138 = vmatpush1.bf16.msra.mxu0 0
      %1139 = vmatprep.subr.bf16.mxu0 0
      %1140 = vmatpush1.bf16.msra.mxu0 0
      %1141 = vmatprep.subr.bf16.mxu0 0
      %1142 = vmatpush1.bf16.msra.mxu0 0
      %1143 = vmatprep.subr.bf16.mxu0 0
      %1144 = vmatpush1.bf16.msra.mxu0 0
      %1145 = vmatprep.subr.bf16.mxu0 0
      %1146 = vmatpush1.bf16.msra.mxu0 0
      %1147 = vmatprep.subr.bf16.mxu0 0
      %1148 = vmatpush1.bf16.msra.mxu0 0
      %1149 = vmatprep.subr.bf16.mxu0 0
      %1150 = vmatpush1.bf16.msra.mxu0 0
      %1151 = vmatprep.subr.bf16.mxu0 0
      %1152 = vmatpush1.bf16.msra.mxu0 0
      %1153 = vmatprep.subr.bf16.mxu0 0
      %1154 = vmatpush1.bf16.msra.mxu0 0
      %1155 = vmatprep.subr.bf16.mxu0 0
      %1156 = vmatpush1.bf16.msra.mxu0 0
      %1157 = vmatprep.subr.bf16.mxu0 0
      %1158 = vmatpush1.bf16.msra.mxu0 0
      %1159 = vmatprep.subr.bf16.mxu0 0
      %1160 = vmatpush1.bf16.msra.mxu0 0
      %1161 = vmatprep.subr.bf16.mxu0 0
      %1162 = vmatpush1.bf16.msra.mxu0 0
      %1163 = vmatprep.subr.bf16.mxu0 0
      %1164 = vmatpush1.bf16.msra.mxu0 0
      %1165 = vmatprep.subr.bf16.mxu0 0
      %1166 = vmatpush1.bf16.msra.mxu0 0
      %1167 = vmatprep.mubr.bf16.mxu0 0
      %1168 = vmatmul.mubr.bf16.gmra.mrb[0].mxu0 %v1133
      %v1169 = vpop.f32.mrb[0].mxu0
      %v1170 = vadd.f32 0.0, %v1169
      %v1171 = vpop.f32.mrb[0].mxu0
      %v1172 = vpop.f32.mrb[0].mxu0
      %v1173 = vpop.f32.mrb[0].mxu0
      %1174 = vdwg.mxu0
      %v1175 = vld [vmem:[#allocation2] sm:$0xff]
      %v1176 = vadd.f32 %v1175, %v1170
      %1177 = vst.msk [vmem:[#allocation2] sm:$0xff] %vm282, %v1176
      %v1178 = vld [vmem:[%s223] sm:$0xf]
      %v1179 = vld [vmem:[%s223 + $0x4] sm:$0xf]
      %v1180 = vld [vmem:[%s644] sm:$0xf]
      %v1183 = vunpack.c.l.b16 %v1178
      %v1184 = vunpack.c.l.b16 %v1179
      %v1185 = vpack.c.b16 %v1184, %v1183
      %1186 = vrot.lane.b32.xlu0 %v1185, 119
      %v1187 = vpop.permute.xlu0 %1186
      %v1190 = vsel %vm238, %v1180, 0
      %1192 = vmatprep.subr.bf16.mxu0 0
      %1193 = vmatpush1.bf16.msra.mxu0 %v1187
      %1194 = vmatprep.subr.bf16.mxu0 0
      %1195 = vmatpush1.bf16.msra.mxu0 0
      %1196 = vmatprep.subr.bf16.mxu0 0
      %1197 = vmatpush1.bf16.msra.mxu0 0
      %1198 = vmatprep.subr.bf16.mxu0 0
      %1199 = vmatpush1.bf16.msra.mxu0 0
      %1200 = vmatprep.subr.bf16.mxu0 0
      %1201 = vmatpush1.bf16.msra.mxu0 0
      %1202 = vmatprep.subr.bf16.mxu0 0
      %1203 = vmatpush1.bf16.msra.mxu0 0
      %1204 = vmatprep.subr.bf16.mxu0 0
      %1205 = vmatpush1.bf16.msra.mxu0 0
      %1206 = vmatprep.subr.bf16.mxu0 0
      %1207 = vmatpush1.bf16.msra.mxu0 0
      %1208 = vmatprep.subr.bf16.mxu0 0
      %1209 = vmatpush1.bf16.msra.mxu0 0
      %1210 = vmatprep.subr.bf16.mxu0 0
      %1211 = vmatpush1.bf16.msra.mxu0 0
      %1212 = vmatprep.subr.bf16.mxu0 0
      %1213 = vmatpush1.bf16.msra.mxu0 0
      %1214 = vmatprep.subr.bf16.mxu0 0
      %1215 = vmatpush1.bf16.msra.mxu0 0
      %1216 = vmatprep.subr.bf16.mxu0 0
      %1217 = vmatpush1.bf16.msra.mxu0 0
      %1218 = vmatprep.subr.bf16.mxu0 0
      %1219 = vmatpush1.bf16.msra.mxu0 0
      %1220 = vmatprep.subr.bf16.mxu0 0
      %1221 = vmatpush1.bf16.msra.mxu0 0
      %1222 = vmatprep.subr.bf16.mxu0 0
      %1223 = vmatpush1.bf16.msra.mxu0 0
      %1224 = vmatprep.mubr.bf16.mxu0 0
      %1225 = vmatmul.mubr.bf16.gmra.mrb[0].mxu0 %v1190
      %v1226 = vpop.f32.mrb[0].mxu0
      %v1227 = vadd.f32 0.0, %v1226
      %v1228 = vpop.f32.mrb[0].mxu0
      %v1229 = vpop.f32.mrb[0].mxu0
      %v1230 = vpop.f32.mrb[0].mxu0
      %1231 = vdwg.mxu0
      %v1232 = vld [vmem:[#allocation2] sm:$0xff]
      %v1233 = vadd.f32 %v1232, %v1227
      %1234 = vst.msk [vmem:[#allocation2] sm:$0xff] %vm282, %v1233
      %v1235 = vld [vmem:[%s284] sm:$0xf]
      %v1236 = vld [vmem:[%s284 + $0x4] sm:$0xf]
      %v1237 = vsel %vm1063, 0, %v1235
      %v1238 = vsel %vm1063, 0, %v1236
      %v1239 = vld [vmem:[%s702] sm:$0xf]
      %v1242 = vunpack.c.l.b16 %v1237
      %v1243 = vunpack.c.l.b16 %v1238
      %v1244 = vpack.c.b16 %v1243, %v1242
      %1245 = vrot.lane.b32.xlu0 %v1244, 118
      %v1246 = vpop.permute.xlu0 %1245
      %v1249 = vsel %vm238, %v1239, 0
      %1251 = vmatprep.subr.bf16.mxu0 0
      %1252 = vmatpush1.bf16.msra.mxu0 %v1246
      %1253 = vmatprep.subr.bf16.mxu0 0
      %1254 = vmatpush1.bf16.msra.mxu0 0
      %1255 = vmatprep.subr.bf16.mxu0 0
      %1256 = vmatpush1.bf16.msra.mxu0 0
      %1257 = vmatprep.subr.bf16.mxu0 0
      %1258 = vmatpush1.bf16.msra.mxu0 0
      %1259 = vmatprep.subr.bf16.mxu0 0
      %1260 = vmatpush1.bf16.msra.mxu0 0
      %1261 = vmatprep.subr.bf16.mxu0 0
      %1262 = vmatpush1.bf16.msra.mxu0 0
      %1263 = vmatprep.subr.bf16.mxu0 0
      %1264 = vmatpush1.bf16.msra.mxu0 0
      %1265 = vmatprep.subr.bf16.mxu0 0
      %1266 = vmatpush1.bf16.msra.mxu0 0
      %1267 = vmatprep.subr.bf16.mxu0 0
      %1268 = vmatpush1.bf16.msra.mxu0 0
      %1269 = vmatprep.subr.bf16.mxu0 0
      %1270 = vmatpush1.bf16.msra.mxu0 0
      %1271 = vmatprep.subr.bf16.mxu0 0
      %1272 = vmatpush1.bf16.msra.mxu0 0
      %1273 = vmatprep.subr.bf16.mxu0 0
      %1274 = vmatpush1.bf16.msra.mxu0 0
      %1275 = vmatprep.subr.bf16.mxu0 0
      %1276 = vmatpush1.bf16.msra.mxu0 0
      %1277 = vmatprep.subr.bf16.mxu0 0
      %1278 = vmatpush1.bf16.msra.mxu0 0
      %1279 = vmatprep.subr.bf16.mxu0 0
      %1280 = vmatpush1.bf16.msra.mxu0 0
      %1281 = vmatprep.subr.bf16.mxu0 0
      %1282 = vmatpush1.bf16.msra.mxu0 0
      %1283 = vmatprep.mubr.bf16.mxu0 0
      %1284 = vmatmul.mubr.bf16.gmra.mrb[0].mxu0 %v1249
      %v1285 = vpop.f32.mrb[0].mxu0
      %v1286 = vadd.f32 0.0, %v1285
      %v1287 = vpop.f32.mrb[0].mxu0
      %v1288 = vpop.f32.mrb[0].mxu0
      %v1289 = vpop.f32.mrb[0].mxu0
      %1290 = vdwg.mxu0
      %v1291 = vld [vmem:[#allocation2] sm:$0xff]
      %v1292 = vadd.f32 %v1291, %v1286
      %1293 = vst.msk [vmem:[#allocation2] sm:$0xff] %vm282, %v1292
      %v1294 = vld [vmem:[#allocation2] sm:$0xff]
      %v1295 = vadd.f32 %v1294, %v762
      %v1296 = vmax.f32 %v1295, 0.0
      %v1297 = vld [vmem:[#allocation3] sm:$0xff]
      %v1298 = vadd.f32 %v1297, %v1296
      %1299 = vst.msk [vmem:[#allocation3] sm:$0xff] %vm282, %v1298
      %v1300 = vld [vmem:[%s401] sm:$0xf]
      %v1301 = vld [vmem:[%s401 + $0x4] sm:$0xf]
      %v1302 = vsel %vm407, 0, %v1300
      %v1303 = vsel %vm407, 0, %v1301
      %v1304 = vld [vmem:[%s1] sm:$0xf]
      %v1307 = vunpack.c.l.b16 %v1302
      %v1308 = vunpack.c.l.b16 %v1303
      %v1309 = vpack.c.b16 %v1308, %v1307
      %1310 = vrot.lane.b32.xlu0 %v1309, 120
      %v1311 = vpop.permute.xlu0 %1310
      %v1314 = vsel %vm238, %v1304, 0
      %1316 = vmatprep.subr.bf16.mxu0 0
      %1317 = vmatpush1.bf16.msra.mxu0 %v1311
      %1318 = vmatprep.subr.bf16.mxu0 0
      %1319 = vmatpush1.bf16.msra.mxu0 0
      %1320 = vmatprep.subr.bf16.mxu0 0
      %1321 = vmatpush1.bf16.msra.mxu0 0
      %1322 = vmatprep.subr.bf16.mxu0 0
      %1323 = vmatpush1.bf16.msra.mxu0 0
      %1324 = vmatprep.subr.bf16.mxu0 0
      %1325 = vmatpush1.bf16.msra.mxu0 0
      %1326 = vmatprep.subr.bf16.mxu0 0
      %1327 = vmatpush1.bf16.msra.mxu0 0
      %1328 = vmatprep.subr.bf16.mxu0 0
      %1329 = vmatpush1.bf16.msra.mxu0 0
      %1330 = vmatprep.subr.bf16.mxu0 0
      %1331 = vmatpush1.bf16.msra.mxu0 0
      %1332 = vmatprep.subr.bf16.mxu0 0
      %1333 = vmatpush1.bf16.msra.mxu0 0
      %1334 = vmatprep.subr.bf16.mxu0 0
      %1335 = vmatpush1.bf16.msra.mxu0 0
      %1336 = vmatprep.subr.bf16.mxu0 0
      %1337 = vmatpush1.bf16.msra.mxu0 0
      %1338 = vmatprep.subr.bf16.mxu0 0
      %1339 = vmatpush1.bf16.msra.mxu0 0
      %1340 = vmatprep.subr.bf16.mxu0 0
      %1341 = vmatpush1.bf16.msra.mxu0 0
      %1342 = vmatprep.subr.bf16.mxu0 0
      %1343 = vmatpush1.bf16.msra.mxu0 0
      %1344 = vmatprep.subr.bf16.mxu0 0
      %1345 = vmatpush1.bf16.msra.mxu0 0
      %1346 = vmatprep.subr.bf16.mxu0 0
      %1347 = vmatpush1.bf16.msra.mxu0 0
      %1348 = vmatprep.mubr.bf16.mxu0 0
      %1349 = vmatmul.mubr.bf16.gmra.mrb[0].mxu0 %v1314
      %v1350 = vpop.f32.mrb[0].mxu0
      %v1351 = vadd.f32 0.0, %v1350
      %v1352 = vpop.f32.mrb[0].mxu0
      %v1353 = vpop.f32.mrb[0].mxu0
      %v1354 = vpop.f32.mrb[0].mxu0
      %1355 = vdwg.mxu0
      %1356 = vst.msk [vmem:[#allocation2] sm:$0xff] %vm282, %v1351
      %v1357 = vld [vmem:[%s195] sm:$0xf]
      %v1358 = vld [vmem:[%s195 + $0x4] sm:$0xf]
      %v1359 = vld [vmem:[%s287] sm:$0xf]
      %v1362 = vunpack.c.l.b16 %v1357
      %v1363 = vunpack.c.l.b16 %v1358
      %v1364 = vpack.c.b16 %v1363, %v1362
      %1365 = vrot.lane.b32.xlu0 %v1364, 119
      %v1366 = vpop.permute.xlu0 %1365
      %v1369 = vsel %vm238, %v1359, 0
      %1371 = vmatprep.subr.bf16.mxu0 0
      %1372 = vmatpush1.bf16.msra.mxu0 %v1366
      %1373 = vmatprep.subr.bf16.mxu0 0
      %1374 = vmatpush1.bf16.msra.mxu0 0
      %1375 = vmatprep.subr.bf16.mxu0 0
      %1376 = vmatpush1.bf16.msra.mxu0 0
      %1377 = vmatprep.subr.bf16.mxu0 0
      %1378 = vmatpush1.bf16.msra.mxu0 0
      %1379 = vmatprep.subr.bf16.mxu0 0
      %1380 = vmatpush1.bf16.msra.mxu0 0
      %1381 = vmatprep.subr.bf16.mxu0 0
      %1382 = vmatpush1.bf16.msra.mxu0 0
      %1383 = vmatprep.subr.bf16.mxu0 0
      %1384 = vmatpush1.bf16.msra.mxu0 0
      %1385 = vmatprep.subr.bf16.mxu0 0
      %1386 = vmatpush1.bf16.msra.mxu0 0
      %1387 = vmatprep.subr.bf16.mxu0 0
      %1388 = vmatpush1.bf16.msra.mxu0 0
      %1389 = vmatprep.subr.bf16.mxu0 0
      %1390 = vmatpush1.bf16.msra.mxu0 0
      %1391 = vmatprep.subr.bf16.mxu0 0
      %1392 = vmatpush1.bf16.msra.mxu0 0
      %1393 = vmatprep.subr.bf16.mxu0 0
      %1394 = vmatpush1.bf16.msra.mxu0 0
      %1395 = vmatprep.subr.bf16.mxu0 0
      %1396 = vmatpush1.bf16.msra.mxu0 0
      %1397 = vmatprep.subr.bf16.mxu0 0
      %1398 = vmatpush1.bf16.msra.mxu0 0
      %1399 = vmatprep.subr.bf16.mxu0 0
      %1400 = vmatpush1.bf16.msra.mxu0 0
      %1401 = vmatprep.subr.bf16.mxu0 0
      %1402 = vmatpush1.bf16.msra.mxu0 0
      %1403 = vmatprep.mubr.bf16.mxu0 0
      %1404 = vmatmul.mubr.bf16.gmra.mrb[0].mxu0 %v1369
      %v1405 = vpop.f32.mrb[0].mxu0
      %v1406 = vadd.f32 0.0, %v1405
      %v1407 = vpop.f32.mrb[0].mxu0
      %v1408 = vpop.f32.mrb[0].mxu0
      %v1409 = vpop.f32.mrb[0].mxu0
      %1410 = vdwg.mxu0
      %v1411 = vld [vmem:[#allocation2] sm:$0xff]
      %v1412 = vadd.f32 %v1411, %v1406
      %1413 = vst.msk [vmem:[#allocation2] sm:$0xff] %vm282, %v1412
      %v1414 = vld [vmem:[%s401] sm:$0xf]
      %v1415 = vld [vmem:[%s401 + $0x4] sm:$0xf]
      %v1416 = vld [vmem:[%s345] sm:$0xf]
      %v1419 = vunpack.c.l.b16 %v1414
      %v1420 = vunpack.c.l.b16 %v1415
      %v1421 = vpack.c.b16 %v1420, %v1419
      %1422 = vrot.lane.b32.xlu0 %v1421, 119
      %v1423 = vpop.permute.xlu0 %1422
      %v1426 = vsel %vm238, %v1416, 0
      %1428 = vmatprep.subr.bf16.mxu0 0
      %1429 = vmatpush1.bf16.msra.mxu0 %v1423
      %1430 = vmatprep.subr.bf16.mxu0 0
      %1431 = vmatpush1.bf16.msra.mxu0 0
      %1432 = vmatprep.subr.bf16.mxu0 0
      %1433 = vmatpush1.bf16.msra.mxu0 0
      %1434 = vmatprep.subr.bf16.mxu0 0
      %1435 = vmatpush1.bf16.msra.mxu0 0
      %1436 = vmatprep.subr.bf16.mxu0 0
      %1437 = vmatpush1.bf16.msra.mxu0 0
      %1438 = vmatprep.subr.bf16.mxu0 0
      %1439 = vmatpush1.bf16.msra.mxu0 0
      %1440 = vmatprep.subr.bf16.mxu0 0
      %1441 = vmatpush1.bf16.msra.mxu0 0
      %1442 = vmatprep.subr.bf16.mxu0 0
      %1443 = vmatpush1.bf16.msra.mxu0 0
      %1444 = vmatprep.subr.bf16.mxu0 0
      %1445 = vmatpush1.bf16.msra.mxu0 0
      %1446 = vmatprep.subr.bf16.mxu0 0
      %1447 = vmatpush1.bf16.msra.mxu0 0
      %1448 = vmatprep.subr.bf16.mxu0 0
      %1449 = vmatpush1.bf16.msra.mxu0 0
      %1450 = vmatprep.subr.bf16.mxu0 0
      %1451 = vmatpush1.bf16.msra.mxu0 0
      %1452 = vmatprep.subr.bf16.mxu0 0
      %1453 = vmatpush1.bf16.msra.mxu0 0
      %1454 = vmatprep.subr.bf16.mxu0 0
      %1455 = vmatpush1.bf16.msra.mxu0 0
      %1456 = vmatprep.subr.bf16.mxu0 0
      %1457 = vmatpush1.bf16.msra.mxu0 0
      %1458 = vmatprep.subr.bf16.mxu0 0
      %1459 = vmatpush1.bf16.msra.mxu0 0
      %1460 = vmatprep.mubr.bf16.mxu0 0
      %1461 = vmatmul.mubr.bf16.gmra.mrb[0].mxu0 %v1426
      %v1462 = vpop.f32.mrb[0].mxu0
      %v1463 = vadd.f32 0.0, %v1462
      %v1464 = vpop.f32.mrb[0].mxu0
      %v1465 = vpop.f32.mrb[0].mxu0
      %v1466 = vpop.f32.mrb[0].mxu0
      %1467 = vdwg.mxu0
      %v1468 = vld [vmem:[#allocation2] sm:$0xff]
      %v1469 = vadd.f32 %v1468, %v1463
      %1470 = vst.msk [vmem:[#allocation2] sm:$0xff] %vm282, %v1469
      %v1471 = vld [vmem:[%s223] sm:$0xf]
      %v1472 = vld [vmem:[%s223 + $0x4] sm:$0xf]
      %v1473 = vsel %vm407, 0, %v1471
      %v1474 = vsel %vm407, 0, %v1472
      %v1475 = vld [vmem:[%s410] sm:$0xf]
      %v1478 = vunpack.c.l.b16 %v1473
      %v1479 = vunpack.c.l.b16 %v1474
      %v1480 = vpack.c.b16 %v1479, %v1478
      %1481 = vrot.lane.b32.xlu0 %v1480, 120
      %v1482 = vpop.permute.xlu0 %1481
      %v1485 = vsel %vm238, %v1475, 0
      %1487 = vmatprep.subr.bf16.mxu0 0
      %1488 = vmatpush1.bf16.msra.mxu0 %v1482
      %1489 = vmatprep.subr.bf16.mxu0 0
      %1490 = vmatpush1.bf16.msra.mxu0 0
      %1491 = vmatprep.subr.bf16.mxu0 0
      %1492 = vmatpush1.bf16.msra.mxu0 0
      %1493 = vmatprep.subr.bf16.mxu0 0
      %1494 = vmatpush1.bf16.msra.mxu0 0
      %1495 = vmatprep.subr.bf16.mxu0 0
      %1496 = vmatpush1.bf16.msra.mxu0 0
      %1497 = vmatprep.subr.bf16.mxu0 0
      %1498 = vmatpush1.bf16.msra.mxu0 0
      %1499 = vmatprep.subr.bf16.mxu0 0
      %1500 = vmatpush1.bf16.msra.mxu0 0
      %1501 = vmatprep.subr.bf16.mxu0 0
      %1502 = vmatpush1.bf16.msra.mxu0 0
      %1503 = vmatprep.subr.bf16.mxu0 0
      %1504 = vmatpush1.bf16.msra.mxu0 0
      %1505 = vmatprep.subr.bf16.mxu0 0
      %1506 = vmatpush1.bf16.msra.mxu0 0
      %1507 = vmatprep.subr.bf16.mxu0 0
      %1508 = vmatpush1.bf16.msra.mxu0 0
      %1509 = vmatprep.subr.bf16.mxu0 0
      %1510 = vmatpush1.bf16.msra.mxu0 0
      %1511 = vmatprep.subr.bf16.mxu0 0
      %1512 = vmatpush1.bf16.msra.mxu0 0
      %1513 = vmatprep.subr.bf16.mxu0 0
      %1514 = vmatpush1.bf16.msra.mxu0 0
      %1515 = vmatprep.subr.bf16.mxu0 0
      %1516 = vmatpush1.bf16.msra.mxu0 0
      %1517 = vmatprep.subr.bf16.mxu0 0
      %1518 = vmatpush1.bf16.msra.mxu0 0
      %1519 = vmatprep.mubr.bf16.mxu0 0
      %1520 = vmatmul.mubr.bf16.gmra.mrb[0].mxu0 %v1485
      %v1521 = vpop.f32.mrb[0].mxu0
      %v1522 = vadd.f32 0.0, %v1521
      %v1523 = vpop.f32.mrb[0].mxu0
      %v1524 = vpop.f32.mrb[0].mxu0
      %v1525 = vpop.f32.mrb[0].mxu0
      %1526 = vdwg.mxu0
      %v1527 = vld [vmem:[#allocation2] sm:$0xff]
      %v1528 = vadd.f32 %v1527, %v1522
      %1529 = vst.msk [vmem:[#allocation2] sm:$0xff] %vm282, %v1528
      %v1530 = vld [vmem:[%s284] sm:$0xf]
      %v1531 = vld [vmem:[%s284 + $0x4] sm:$0xf]
      %v1532 = vld [vmem:[%s468] sm:$0xf]
      %v1535 = vunpack.c.l.b16 %v1530
      %v1536 = vunpack.c.l.b16 %v1531
      %v1537 = vpack.c.b16 %v1536, %v1535
      %1538 = vrot.lane.b32.xlu0 %v1537, 119
      %v1539 = vpop.permute.xlu0 %1538
      %v1542 = vsel %vm238, %v1532, 0
      %1544 = vmatprep.subr.bf16.mxu0 0
      %1545 = vmatpush1.bf16.msra.mxu0 %v1539
      %1546 = vmatprep.subr.bf16.mxu0 0
      %1547 = vmatpush1.bf16.msra.mxu0 0
      %1548 = vmatprep.subr.bf16.mxu0 0
      %1549 = vmatpush1.bf16.msra.mxu0 0
      %1550 = vmatprep.subr.bf16.mxu0 0
      %1551 = vmatpush1.bf16.msra.mxu0 0
      %1552 = vmatprep.subr.bf16.mxu0 0
      %1553 = vmatpush1.bf16.msra.mxu0 0
      %1554 = vmatprep.subr.bf16.mxu0 0
      %1555 = vmatpush1.bf16.msra.mxu0 0
      %1556 = vmatprep.subr.bf16.mxu0 0
      %1557 = vmatpush1.bf16.msra.mxu0 0
      %1558 = vmatprep.subr.bf16.mxu0 0
      %1559 = vmatpush1.bf16.msra.mxu0 0
      %1560 = vmatprep.subr.bf16.mxu0 0
      %1561 = vmatpush1.bf16.msra.mxu0 0
      %1562 = vmatprep.subr.bf16.mxu0 0
      %1563 = vmatpush1.bf16.msra.mxu0 0
      %1564 = vmatprep.subr.bf16.mxu0 0
      %1565 = vmatpush1.bf16.msra.mxu0 0
      %1566 = vmatprep.subr.bf16.mxu0 0
      %1567 = vmatpush1.bf16.msra.mxu0 0
      %1568 = vmatprep.subr.bf16.mxu0 0
      %1569 = vmatpush1.bf16.msra.mxu0 0
      %1570 = vmatprep.subr.bf16.mxu0 0
      %1571 = vmatpush1.bf16.msra.mxu0 0
      %1572 = vmatprep.subr.bf16.mxu0 0
      %1573 = vmatpush1.bf16.msra.mxu0 0
      %1574 = vmatprep.subr.bf16.mxu0 0
      %1575 = vmatpush1.bf16.msra.mxu0 0
      %1576 = vmatprep.mubr.bf16.mxu0 0
      %1577 = vmatmul.mubr.bf16.gmra.mrb[0].mxu0 %v1542
      %v1578 = vpop.f32.mrb[0].mxu0
      %v1579 = vadd.f32 0.0, %v1578
      %v1580 = vpop.f32.mrb[0].mxu0
      %v1581 = vpop.f32.mrb[0].mxu0
      %v1582 = vpop.f32.mrb[0].mxu0
      %1583 = vdwg.mxu0
      %v1584 = vld [vmem:[#allocation2] sm:$0xff]
      %v1585 = vadd.f32 %v1584, %v1579
      %1586 = vst.msk [vmem:[#allocation2] sm:$0xff] %vm282, %v1585
      %v1587 = vld [vmem:[%s223] sm:$0xf]
      %v1588 = vld [vmem:[%s223 + $0x4] sm:$0xf]
      %v1589 = vld [vmem:[%s526] sm:$0xf]
      %v1592 = vunpack.c.l.b16 %v1587
      %v1593 = vunpack.c.l.b16 %v1588
      %v1594 = vpack.c.b16 %v1593, %v1592
      %1595 = vrot.lane.b32.xlu0 %v1594, 119
      %v1596 = vpop.permute.xlu0 %1595
      %v1599 = vsel %vm238, %v1589, 0
      %1601 = vmatprep.subr.bf16.mxu0 0
      %1602 = vmatpush1.bf16.msra.mxu0 %v1596
      %1603 = vmatprep.subr.bf16.mxu0 0
      %1604 = vmatpush1.bf16.msra.mxu0 0
      %1605 = vmatprep.subr.bf16.mxu0 0
      %1606 = vmatpush1.bf16.msra.mxu0 0
      %1607 = vmatprep.subr.bf16.mxu0 0
      %1608 = vmatpush1.bf16.msra.mxu0 0
      %1609 = vmatprep.subr.bf16.mxu0 0
      %1610 = vmatpush1.bf16.msra.mxu0 0
      %1611 = vmatprep.subr.bf16.mxu0 0
      %1612 = vmatpush1.bf16.msra.mxu0 0
      %1613 = vmatprep.subr.bf16.mxu0 0
      %1614 = vmatpush1.bf16.msra.mxu0 0
      %1615 = vmatprep.subr.bf16.mxu0 0
      %1616 = vmatpush1.bf16.msra.mxu0 0
      %1617 = vmatprep.subr.bf16.mxu0 0
      %1618 = vmatpush1.bf16.msra.mxu0 0
      %1619 = vmatprep.subr.bf16.mxu0 0
      %1620 = vmatpush1.bf16.msra.mxu0 0
      %1621 = vmatprep.subr.bf16.mxu0 0
      %1622 = vmatpush1.bf16.msra.mxu0 0
      %1623 = vmatprep.subr.bf16.mxu0 0
      %1624 = vmatpush1.bf16.msra.mxu0 0
      %1625 = vmatprep.subr.bf16.mxu0 0
      %1626 = vmatpush1.bf16.msra.mxu0 0
      %1627 = vmatprep.subr.bf16.mxu0 0
      %1628 = vmatpush1.bf16.msra.mxu0 0
      %1629 = vmatprep.subr.bf16.mxu0 0
      %1630 = vmatpush1.bf16.msra.mxu0 0
      %1631 = vmatprep.subr.bf16.mxu0 0
      %1632 = vmatpush1.bf16.msra.mxu0 0
      %1633 = vmatprep.mubr.bf16.mxu0 0
      %1634 = vmatmul.mubr.bf16.gmra.mrb[0].mxu0 %v1599
      %v1635 = vpop.f32.mrb[0].mxu0
      %v1636 = vadd.f32 0.0, %v1635
      %v1637 = vpop.f32.mrb[0].mxu0
      %v1638 = vpop.f32.mrb[0].mxu0
      %v1639 = vpop.f32.mrb[0].mxu0
      %1640 = vdwg.mxu0
      %v1641 = vld [vmem:[#allocation2] sm:$0xff]
      %v1642 = vadd.f32 %v1641, %v1636
      %1643 = vst.msk [vmem:[#allocation2] sm:$0xff] %vm282, %v1642
      %v1644 = vld [vmem:[%s401] sm:$0xf]
      %v1645 = vld [vmem:[%s401 + $0x4] sm:$0xf]
      %1646 = vrot.lane.b32.xlu0 %v404, 16
      %v1647 = vpop.permute.xlu0 %1646
      %vm1648 = vcmp.ne.s16.totalorder %v1647, 0
      %v1649 = vsel %vm1648, 0, %v1644
      %v1650 = vsel %vm1648, 0, %v1645
      %v1651 = vld [vmem:[%s586] sm:$0xf]
      %v1654 = vunpack.c.l.b16 %v1649
      %v1655 = vunpack.c.l.b16 %v1650
      %v1656 = vpack.c.b16 %v1655, %v1654
      %1657 = vrot.lane.b32.xlu0 %v1656, 112
      %v1658 = vpop.permute.xlu0 %1657
      %v1661 = vsel %vm238, %v1651, 0
      %1663 = vmatprep.subr.bf16.mxu0 0
      %1664 = vmatpush1.bf16.msra.mxu0 %v1658
      %1665 = vmatprep.subr.bf16.mxu0 0
      %1666 = vmatpush1.bf16.msra.mxu0 0
      %1667 = vmatprep.subr.bf16.mxu0 0
      %1668 = vmatpush1.bf16.msra.mxu0 0
      %1669 = vmatprep.subr.bf16.mxu0 0
      %1670 = vmatpush1.bf16.msra.mxu0 0
      %1671 = vmatprep.subr.bf16.mxu0 0
      %1672 = vmatpush1.bf16.msra.mxu0 0
      %1673 = vmatprep.subr.bf16.mxu0 0
      %1674 = vmatpush1.bf16.msra.mxu0 0
      %1675 = vmatprep.subr.bf16.mxu0 0
      %1676 = vmatpush1.bf16.msra.mxu0 0
      %1677 = vmatprep.subr.bf16.mxu0 0
      %1678 = vmatpush1.bf16.msra.mxu0 0
      %1679 = vmatprep.subr.bf16.mxu0 0
      %1680 = vmatpush1.bf16.msra.mxu0 0
      %1681 = vmatprep.subr.bf16.mxu0 0
      %1682 = vmatpush1.bf16.msra.mxu0 0
      %1683 = vmatprep.subr.bf16.mxu0 0
      %1684 = vmatpush1.bf16.msra.mxu0 0
      %1685 = vmatprep.subr.bf16.mxu0 0
      %1686 = vmatpush1.bf16.msra.mxu0 0
      %1687 = vmatprep.subr.bf16.mxu0 0
      %1688 = vmatpush1.bf16.msra.mxu0 0
      %1689 = vmatprep.subr.bf16.mxu0 0
      %1690 = vmatpush1.bf16.msra.mxu0 0
      %1691 = vmatprep.subr.bf16.mxu0 0
      %1692 = vmatpush1.bf16.msra.mxu0 0
      %1693 = vmatprep.subr.bf16.mxu0 0
      %1694 = vmatpush1.bf16.msra.mxu0 0
      %1695 = vmatprep.mubr.bf16.mxu0 0
      %1696 = vmatmul.mubr.bf16.gmra.mrb[0].mxu0 %v1661
      %v1697 = vpop.f32.mrb[0].mxu0
      %v1698 = vadd.f32 0.0, %v1697
      %v1699 = vpop.f32.mrb[0].mxu0
      %v1700 = vpop.f32.mrb[0].mxu0
      %v1701 = vpop.f32.mrb[0].mxu0
      %1702 = vdwg.mxu0
      %v1703 = vld [vmem:[#allocation2] sm:$0xff]
      %v1704 = vadd.f32 %v1703, %v1698
      %1705 = vst.msk [vmem:[#allocation2] sm:$0xff] %vm282, %v1704
      %v1706 = vld [vmem:[%s195] sm:$0xf]
      %v1707 = vld [vmem:[%s195 + $0x4] sm:$0xf]
      %v1708 = vld [vmem:[%s644] sm:$0xf]
      %v1711 = vunpack.c.l.b16 %v1706
      %v1712 = vunpack.c.l.b16 %v1707
      %v1713 = vpack.c.b16 %v1712, %v1711
      %1714 = vrot.lane.b32.xlu0 %v1713, 111
      %v1715 = vpop.permute.xlu0 %1714
      %v1718 = vsel %vm238, %v1708, 0
      %1720 = vmatprep.subr.bf16.mxu0 0
      %1721 = vmatpush1.bf16.msra.mxu0 %v1715
      %1722 = vmatprep.subr.bf16.mxu0 0
      %1723 = vmatpush1.bf16.msra.mxu0 0
      %1724 = vmatprep.subr.bf16.mxu0 0
      %1725 = vmatpush1.bf16.msra.mxu0 0
      %1726 = vmatprep.subr.bf16.mxu0 0
      %1727 = vmatpush1.bf16.msra.mxu0 0
      %1728 = vmatprep.subr.bf16.mxu0 0
      %1729 = vmatpush1.bf16.msra.mxu0 0
      %1730 = vmatprep.subr.bf16.mxu0 0
      %1731 = vmatpush1.bf16.msra.mxu0 0
      %1732 = vmatprep.subr.bf16.mxu0 0
      %1733 = vmatpush1.bf16.msra.mxu0 0
      %1734 = vmatprep.subr.bf16.mxu0 0
      %1735 = vmatpush1.bf16.msra.mxu0 0
      %1736 = vmatprep.subr.bf16.mxu0 0
      %1737 = vmatpush1.bf16.msra.mxu0 0
      %1738 = vmatprep.subr.bf16.mxu0 0
      %1739 = vmatpush1.bf16.msra.mxu0 0
      %1740 = vmatprep.subr.bf16.mxu0 0
      %1741 = vmatpush1.bf16.msra.mxu0 0
      %1742 = vmatprep.subr.bf16.mxu0 0
      %1743 = vmatpush1.bf16.msra.mxu0 0
      %1744 = vmatprep.subr.bf16.mxu0 0
      %1745 = vmatpush1.bf16.msra.mxu0 0
      %1746 = vmatprep.subr.bf16.mxu0 0
      %1747 = vmatpush1.bf16.msra.mxu0 0
      %1748 = vmatprep.subr.bf16.mxu0 0
      %1749 = vmatpush1.bf16.msra.mxu0 0
      %1750 = vmatprep.subr.bf16.mxu0 0
      %1751 = vmatpush1.bf16.msra.mxu0 0
      %1752 = vmatprep.mubr.bf16.mxu0 0
      %1753 = vmatmul.mubr.bf16.gmra.mrb[0].mxu0 %v1718
      %v1754 = vpop.f32.mrb[0].mxu0
      %v1755 = vadd.f32 0.0, %v1754
      %v1756 = vpop.f32.mrb[0].mxu0
      %v1757 = vpop.f32.mrb[0].mxu0
      %v1758 = vpop.f32.mrb[0].mxu0
      %1759 = vdwg.mxu0
      %v1760 = vld [vmem:[#allocation2] sm:$0xff]
      %v1761 = vadd.f32 %v1760, %v1755
      %1762 = vst.msk [vmem:[#allocation2] sm:$0xff] %vm282, %v1761
      %v1763 = vld [vmem:[%s401] sm:$0xf]
      %v1764 = vld [vmem:[%s401 + $0x4] sm:$0xf]
      %v1765 = vld [vmem:[%s702] sm:$0xf]
      %v1768 = vunpack.c.l.b16 %v1763
      %v1769 = vunpack.c.l.b16 %v1764
      %v1770 = vpack.c.b16 %v1769, %v1768
      %1771 = vrot.lane.b32.xlu0 %v1770, 111
      %v1772 = vpop.permute.xlu0 %1771
      %v1775 = vsel %vm238, %v1765, 0
      %1777 = vmatprep.subr.bf16.mxu0 0
      %1778 = vmatpush1.bf16.msra.mxu0 %v1772
      %1779 = vmatprep.subr.bf16.mxu0 0
      %1780 = vmatpush1.bf16.msra.mxu0 0
      %1781 = vmatprep.subr.bf16.mxu0 0
      %1782 = vmatpush1.bf16.msra.mxu0 0
      %1783 = vmatprep.subr.bf16.mxu0 0
      %1784 = vmatpush1.bf16.msra.mxu0 0
      %1785 = vmatprep.subr.bf16.mxu0 0
      %1786 = vmatpush1.bf16.msra.mxu0 0
      %1787 = vmatprep.subr.bf16.mxu0 0
      %1788 = vmatpush1.bf16.msra.mxu0 0
      %1789 = vmatprep.subr.bf16.mxu0 0
      %1790 = vmatpush1.bf16.msra.mxu0 0
      %1791 = vmatprep.subr.bf16.mxu0 0
      %1792 = vmatpush1.bf16.msra.mxu0 0
      %1793 = vmatprep.subr.bf16.mxu0 0
      %1794 = vmatpush1.bf16.msra.mxu0 0
      %1795 = vmatprep.subr.bf16.mxu0 0
      %1796 = vmatpush1.bf16.msra.mxu0 0
      %1797 = vmatprep.subr.bf16.mxu0 0
      %1798 = vmatpush1.bf16.msra.mxu0 0
      %1799 = vmatprep.subr.bf16.mxu0 0
      %1800 = vmatpush1.bf16.msra.mxu0 0
      %1801 = vmatprep.subr.bf16.mxu0 0
      %1802 = vmatpush1.bf16.msra.mxu0 0
      %1803 = vmatprep.subr.bf16.mxu0 0
      %1804 = vmatpush1.bf16.msra.mxu0 0
      %1805 = vmatprep.subr.bf16.mxu0 0
      %1806 = vmatpush1.bf16.msra.mxu0 0
      %1807 = vmatprep.subr.bf16.mxu0 0
      %1808 = vmatpush1.bf16.msra.mxu0 0
      %1809 = vmatprep.mubr.bf16.mxu0 0
      %1810 = vmatmul.mubr.bf16.gmra.mrb[0].mxu0 %v1775
      %v1811 = vpop.f32.mrb[0].mxu0
      %v1812 = vadd.f32 0.0, %v1811
      %v1813 = vpop.f32.mrb[0].mxu0
      %v1814 = vpop.f32.mrb[0].mxu0
      %v1815 = vpop.f32.mrb[0].mxu0
      %1816 = vdwg.mxu0
      %v1817 = vld [vmem:[#allocation2] sm:$0xff]
      %v1818 = vadd.f32 %v1817, %v1812
      %1819 = vst.msk [vmem:[#allocation2] sm:$0xff] %vm282, %v1818
      %v1820 = vld [vmem:[#allocation2] sm:$0xff]
      %v1821 = vadd.f32 %v1820, %v762
      %v1822 = vmax.f32 %v1821, 0.0
      %v1823 = vld [vmem:[#allocation3] sm:$0xff]
      %v1824 = vadd.f32 %v1823, %v1822
      %1825 = vst.msk [vmem:[#allocation3] sm:$0xff] %vm282, %v1824
      %v1826 = vld [vmem:[%s195] sm:$0xf]
      %v1827 = vld [vmem:[%s195 + $0x4] sm:$0xf]
      %v1828 = vld [vmem:[%s1] sm:$0xf]
      %v1831 = vunpack.c.l.b16 %v1826
      %v1832 = vunpack.c.l.b16 %v1827
      %v1833 = vpack.c.b16 %v1832, %v1831
      %1834 = vrot.lane.b32.xlu0 %v1833, 119
      %v1835 = vpop.permute.xlu0 %1834
      %v1838 = vsel %vm238, %v1828, 0
      %1840 = vmatprep.subr.bf16.mxu0 0
      %1841 = vmatpush1.bf16.msra.mxu0 %v1835
      %1842 = vmatprep.subr.bf16.mxu0 0
      %1843 = vmatpush1.bf16.msra.mxu0 0
      %1844 = vmatprep.subr.bf16.mxu0 0
      %1845 = vmatpush1.bf16.msra.mxu0 0
      %1846 = vmatprep.subr.bf16.mxu0 0
      %1847 = vmatpush1.bf16.msra.mxu0 0
      %1848 = vmatprep.subr.bf16.mxu0 0
      %1849 = vmatpush1.bf16.msra.mxu0 0
      %1850 = vmatprep.subr.bf16.mxu0 0
      %1851 = vmatpush1.bf16.msra.mxu0 0
      %1852 = vmatprep.subr.bf16.mxu0 0
      %1853 = vmatpush1.bf16.msra.mxu0 0
      %1854 = vmatprep.subr.bf16.mxu0 0
      %1855 = vmatpush1.bf16.msra.mxu0 0
      %1856 = vmatprep.subr.bf16.mxu0 0
      %1857 = vmatpush1.bf16.msra.mxu0 0
      %1858 = vmatprep.subr.bf16.mxu0 0
      %1859 = vmatpush1.bf16.msra.mxu0 0
      %1860 = vmatprep.subr.bf16.mxu0 0
      %1861 = vmatpush1.bf16.msra.mxu0 0
      %1862 = vmatprep.subr.bf16.mxu0 0
      %1863 = vmatpush1.bf16.msra.mxu0 0
      %1864 = vmatprep.subr.bf16.mxu0 0
      %1865 = vmatpush1.bf16.msra.mxu0 0
      %1866 = vmatprep.subr.bf16.mxu0 0
      %1867 = vmatpush1.bf16.msra.mxu0 0
      %1868 = vmatprep.subr.bf16.mxu0 0
      %1869 = vmatpush1.bf16.msra.mxu0 0
      %1870 = vmatprep.subr.bf16.mxu0 0
      %1871 = vmatpush1.bf16.msra.mxu0 0
      %1872 = vmatprep.mubr.bf16.mxu0 0
      %1873 = vmatmul.mubr.bf16.gmra.mrb[0].mxu0 %v1838
      %v1874 = vpop.f32.mrb[0].mxu0
      %v1875 = vadd.f32 0.0, %v1874
      %v1876 = vpop.f32.mrb[0].mxu0
      %v1877 = vpop.f32.mrb[0].mxu0
      %v1878 = vpop.f32.mrb[0].mxu0
      %1879 = vdwg.mxu0
      %1880 = vst.msk [vmem:[#allocation2] sm:$0xff] %vm282, %v1875
      %v1881 = vld [vmem:[%s401] sm:$0xf]
      %v1882 = vld [vmem:[%s401 + $0x4] sm:$0xf]
      %v1883 = vld [vmem:[%s287] sm:$0xf]
      %v1886 = vunpack.c.l.b16 %v1881
      %v1887 = vunpack.c.l.b16 %v1882
      %v1888 = vpack.c.b16 %v1887, %v1886
      %1889 = vrot.lane.b32.xlu0 %v1888, 119
      %v1890 = vpop.permute.xlu0 %1889
      %v1893 = vsel %vm238, %v1883, 0
      %1895 = vmatprep.subr.bf16.mxu0 0
      %1896 = vmatpush1.bf16.msra.mxu0 %v1890
      %1897 = vmatprep.subr.bf16.mxu0 0
      %1898 = vmatpush1.bf16.msra.mxu0 0
      %1899 = vmatprep.subr.bf16.mxu0 0
      %1900 = vmatpush1.bf16.msra.mxu0 0
      %1901 = vmatprep.subr.bf16.mxu0 0
      %1902 = vmatpush1.bf16.msra.mxu0 0
      %1903 = vmatprep.subr.bf16.mxu0 0
      %1904 = vmatpush1.bf16.msra.mxu0 0
      %1905 = vmatprep.subr.bf16.mxu0 0
      %1906 = vmatpush1.bf16.msra.mxu0 0
      %1907 = vmatprep.subr.bf16.mxu0 0
      %1908 = vmatpush1.bf16.msra.mxu0 0
      %1909 = vmatprep.subr.bf16.mxu0 0
      %1910 = vmatpush1.bf16.msra.mxu0 0
      %1911 = vmatprep.subr.bf16.mxu0 0
      %1912 = vmatpush1.bf16.msra.mxu0 0
      %1913 = vmatprep.subr.bf16.mxu0 0
      %1914 = vmatpush1.bf16.msra.mxu0 0
      %1915 = vmatprep.subr.bf16.mxu0 0
      %1916 = vmatpush1.bf16.msra.mxu0 0
      %1917 = vmatprep.subr.bf16.mxu0 0
      %1918 = vmatpush1.bf16.msra.mxu0 0
      %1919 = vmatprep.subr.bf16.mxu0 0
      %1920 = vmatpush1.bf16.msra.mxu0 0
      %1921 = vmatprep.subr.bf16.mxu0 0
      %1922 = vmatpush1.bf16.msra.mxu0 0
      %1923 = vmatprep.subr.bf16.mxu0 0
      %1924 = vmatpush1.bf16.msra.mxu0 0
      %1925 = vmatprep.subr.bf16.mxu0 0
      %1926 = vmatpush1.bf16.msra.mxu0 0
      %1927 = vmatprep.mubr.bf16.mxu0 0
      %1928 = vmatmul.mubr.bf16.gmra.mrb[0].mxu0 %v1893
      %v1929 = vpop.f32.mrb[0].mxu0
      %v1930 = vadd.f32 0.0, %v1929
      %v1931 = vpop.f32.mrb[0].mxu0
      %v1932 = vpop.f32.mrb[0].mxu0
      %v1933 = vpop.f32.mrb[0].mxu0
      %1934 = vdwg.mxu0
      %v1935 = vld [vmem:[#allocation2] sm:$0xff]
      %v1936 = vadd.f32 %v1935, %v1930
      %1937 = vst.msk [vmem:[#allocation2] sm:$0xff] %vm282, %v1936
      %v1938 = vld [vmem:[%s195] sm:$0xf]
      %v1939 = vld [vmem:[%s195 + $0x4] sm:$0xf]
      %v1940 = vsel %vm1063, 0, %v1938
      %v1941 = vsel %vm1063, 0, %v1939
      %v1942 = vld [vmem:[%s345] sm:$0xf]
      %v1945 = vunpack.c.l.b16 %v1940
      %v1946 = vunpack.c.l.b16 %v1941
      %v1947 = vpack.c.b16 %v1946, %v1945
      %1948 = vrot.lane.b32.xlu0 %v1947, 118
      %v1949 = vpop.permute.xlu0 %1948
      %v1952 = vsel %vm238, %v1942, 0
      %1954 = vmatprep.subr.bf16.mxu0 0
      %1955 = vmatpush1.bf16.msra.mxu0 %v1949
      %1956 = vmatprep.subr.bf16.mxu0 0
      %1957 = vmatpush1.bf16.msra.mxu0 0
      %1958 = vmatprep.subr.bf16.mxu0 0
      %1959 = vmatpush1.bf16.msra.mxu0 0
      %1960 = vmatprep.subr.bf16.mxu0 0
      %1961 = vmatpush1.bf16.msra.mxu0 0
      %1962 = vmatprep.subr.bf16.mxu0 0
      %1963 = vmatpush1.bf16.msra.mxu0 0
      %1964 = vmatprep.subr.bf16.mxu0 0
      %1965 = vmatpush1.bf16.msra.mxu0 0
      %1966 = vmatprep.subr.bf16.mxu0 0
      %1967 = vmatpush1.bf16.msra.mxu0 0
      %1968 = vmatprep.subr.bf16.mxu0 0
      %1969 = vmatpush1.bf16.msra.mxu0 0
      %1970 = vmatprep.subr.bf16.mxu0 0
      %1971 = vmatpush1.bf16.msra.mxu0 0
      %1972 = vmatprep.subr.bf16.mxu0 0
      %1973 = vmatpush1.bf16.msra.mxu0 0
      %1974 = vmatprep.subr.bf16.mxu0 0
      %1975 = vmatpush1.bf16.msra.mxu0 0
      %1976 = vmatprep.subr.bf16.mxu0 0
      %1977 = vmatpush1.bf16.msra.mxu0 0
      %1978 = vmatprep.subr.bf16.mxu0 0
      %1979 = vmatpush1.bf16.msra.mxu0 0
      %1980 = vmatprep.subr.bf16.mxu0 0
      %1981 = vmatpush1.bf16.msra.mxu0 0
      %1982 = vmatprep.subr.bf16.mxu0 0
      %1983 = vmatpush1.bf16.msra.mxu0 0
      %1984 = vmatprep.subr.bf16.mxu0 0
      %1985 = vmatpush1.bf16.msra.mxu0 0
      %1986 = vmatprep.mubr.bf16.mxu0 0
      %1987 = vmatmul.mubr.bf16.gmra.mrb[0].mxu0 %v1952
      %v1988 = vpop.f32.mrb[0].mxu0
      %v1989 = vadd.f32 0.0, %v1988
      %v1990 = vpop.f32.mrb[0].mxu0
      %v1991 = vpop.f32.mrb[0].mxu0
      %v1992 = vpop.f32.mrb[0].mxu0
      %1993 = vdwg.mxu0
      %v1994 = vld [vmem:[#allocation2] sm:$0xff]
      %v1995 = vadd.f32 %v1994, %v1989
      %1996 = vst.msk [vmem:[#allocation2] sm:$0xff] %vm282, %v1995
      %v1997 = vld [vmem:[%s284] sm:$0xf]
      %v1998 = vld [vmem:[%s284 + $0x4] sm:$0xf]
      %v1999 = vld [vmem:[%s410] sm:$0xf]
      %v2002 = vunpack.c.l.b16 %v1997
      %v2003 = vunpack.c.l.b16 %v1998
      %v2004 = vpack.c.b16 %v2003, %v2002
      %2005 = vrot.lane.b32.xlu0 %v2004, 119
      %v2006 = vpop.permute.xlu0 %2005
      %v2009 = vsel %vm238, %v1999, 0
      %2011 = vmatprep.subr.bf16.mxu0 0
      %2012 = vmatpush1.bf16.msra.mxu0 %v2006
      %2013 = vmatprep.subr.bf16.mxu0 0
      %2014 = vmatpush1.bf16.msra.mxu0 0
      %2015 = vmatprep.subr.bf16.mxu0 0
      %2016 = vmatpush1.bf16.msra.mxu0 0
      %2017 = vmatprep.subr.bf16.mxu0 0
      %2018 = vmatpush1.bf16.msra.mxu0 0
      %2019 = vmatprep.subr.bf16.mxu0 0
      %2020 = vmatpush1.bf16.msra.mxu0 0
      %2021 = vmatprep.subr.bf16.mxu0 0
      %2022 = vmatpush1.bf16.msra.mxu0 0
      %2023 = vmatprep.subr.bf16.mxu0 0
      %2024 = vmatpush1.bf16.msra.mxu0 0
      %2025 = vmatprep.subr.bf16.mxu0 0
      %2026 = vmatpush1.bf16.msra.mxu0 0
      %2027 = vmatprep.subr.bf16.mxu0 0
      %2028 = vmatpush1.bf16.msra.mxu0 0
      %2029 = vmatprep.subr.bf16.mxu0 0
      %2030 = vmatpush1.bf16.msra.mxu0 0
      %2031 = vmatprep.subr.bf16.mxu0 0
      %2032 = vmatpush1.bf16.msra.mxu0 0
      %2033 = vmatprep.subr.bf16.mxu0 0
      %2034 = vmatpush1.bf16.msra.mxu0 0
      %2035 = vmatprep.subr.bf16.mxu0 0
      %2036 = vmatpush1.bf16.msra.mxu0 0
      %2037 = vmatprep.subr.bf16.mxu0 0
      %2038 = vmatpush1.bf16.msra.mxu0 0
      %2039 = vmatprep.subr.bf16.mxu0 0
      %2040 = vmatpush1.bf16.msra.mxu0 0
      %2041 = vmatprep.subr.bf16.mxu0 0
      %2042 = vmatpush1.bf16.msra.mxu0 0
      %2043 = vmatprep.mubr.bf16.mxu0 0
      %2044 = vmatmul.mubr.bf16.gmra.mrb[0].mxu0 %v2009
      %v2045 = vpop.f32.mrb[0].mxu0
      %v2046 = vadd.f32 0.0, %v2045
      %v2047 = vpop.f32.mrb[0].mxu0
      %v2048 = vpop.f32.mrb[0].mxu0
      %v2049 = vpop.f32.mrb[0].mxu0
      %2050 = vdwg.mxu0
      %v2051 = vld [vmem:[#allocation2] sm:$0xff]
      %v2052 = vadd.f32 %v2051, %v2046
      %2053 = vst.msk [vmem:[#allocation2] sm:$0xff] %vm282, %v2052
      %v2054 = vld [vmem:[%s223] sm:$0xf]
      %v2055 = vld [vmem:[%s223 + $0x4] sm:$0xf]
      %v2056 = vld [vmem:[%s468] sm:$0xf]
      %v2059 = vunpack.c.l.b16 %v2054
      %v2060 = vunpack.c.l.b16 %v2055
      %v2061 = vpack.c.b16 %v2060, %v2059
      %2062 = vrot.lane.b32.xlu0 %v2061, 119
      %v2063 = vpop.permute.xlu0 %2062
      %v2066 = vsel %vm238, %v2056, 0
      %2068 = vmatprep.subr.bf16.mxu0 0
      %2069 = vmatpush1.bf16.msra.mxu0 %v2063
      %2070 = vmatprep.subr.bf16.mxu0 0
      %2071 = vmatpush1.bf16.msra.mxu0 0
      %2072 = vmatprep.subr.bf16.mxu0 0
      %2073 = vmatpush1.bf16.msra.mxu0 0
      %2074 = vmatprep.subr.bf16.mxu0 0
      %2075 = vmatpush1.bf16.msra.mxu0 0
      %2076 = vmatprep.subr.bf16.mxu0 0
      %2077 = vmatpush1.bf16.msra.mxu0 0
      %2078 = vmatprep.subr.bf16.mxu0 0
      %2079 = vmatpush1.bf16.msra.mxu0 0
      %2080 = vmatprep.subr.bf16.mxu0 0
      %2081 = vmatpush1.bf16.msra.mxu0 0
      %2082 = vmatprep.subr.bf16.mxu0 0
      %2083 = vmatpush1.bf16.msra.mxu0 0
      %2084 = vmatprep.subr.bf16.mxu0 0
      %2085 = vmatpush1.bf16.msra.mxu0 0
      %2086 = vmatprep.subr.bf16.mxu0 0
      %2087 = vmatpush1.bf16.msra.mxu0 0
      %2088 = vmatprep.subr.bf16.mxu0 0
      %2089 = vmatpush1.bf16.msra.mxu0 0
      %2090 = vmatprep.subr.bf16.mxu0 0
      %2091 = vmatpush1.bf16.msra.mxu0 0
      %2092 = vmatprep.subr.bf16.mxu0 0
      %2093 = vmatpush1.bf16.msra.mxu0 0
      %2094 = vmatprep.subr.bf16.mxu0 0
      %2095 = vmatpush1.bf16.msra.mxu0 0
      %2096 = vmatprep.subr.bf16.mxu0 0
      %2097 = vmatpush1.bf16.msra.mxu0 0
      %2098 = vmatprep.subr.bf16.mxu0 0
      %2099 = vmatpush1.bf16.msra.mxu0 0
      %2100 = vmatprep.mubr.bf16.mxu0 0
      %2101 = vmatmul.mubr.bf16.gmra.mrb[0].mxu0 %v2066
      %v2102 = vpop.f32.mrb[0].mxu0
      %v2103 = vadd.f32 0.0, %v2102
      %v2104 = vpop.f32.mrb[0].mxu0
      %v2105 = vpop.f32.mrb[0].mxu0
      %v2106 = vpop.f32.mrb[0].mxu0
      %2107 = vdwg.mxu0
      %v2108 = vld [vmem:[#allocation2] sm:$0xff]
      %v2109 = vadd.f32 %v2108, %v2103
      %2110 = vst.msk [vmem:[#allocation2] sm:$0xff] %vm282, %v2109
      %v2111 = vld [vmem:[%s284] sm:$0xf]
      %v2112 = vld [vmem:[%s284 + $0x4] sm:$0xf]
      %v2113 = vsel %vm1063, 0, %v2111
      %v2114 = vsel %vm1063, 0, %v2112
      %v2115 = vld [vmem:[%s526] sm:$0xf]
      %v2118 = vunpack.c.l.b16 %v2113
      %v2119 = vunpack.c.l.b16 %v2114
      %v2120 = vpack.c.b16 %v2119, %v2118
      %2121 = vrot.lane.b32.xlu0 %v2120, 118
      %v2122 = vpop.permute.xlu0 %2121
      %v2125 = vsel %vm238, %v2115, 0
      %2127 = vmatprep.subr.bf16.mxu0 0
      %2128 = vmatpush1.bf16.msra.mxu0 %v2122
      %2129 = vmatprep.subr.bf16.mxu0 0
      %2130 = vmatpush1.bf16.msra.mxu0 0
      %2131 = vmatprep.subr.bf16.mxu0 0
      %2132 = vmatpush1.bf16.msra.mxu0 0
      %2133 = vmatprep.subr.bf16.mxu0 0
      %2134 = vmatpush1.bf16.msra.mxu0 0
      %2135 = vmatprep.subr.bf16.mxu0 0
      %2136 = vmatpush1.bf16.msra.mxu0 0
      %2137 = vmatprep.subr.bf16.mxu0 0
      %2138 = vmatpush1.bf16.msra.mxu0 0
      %2139 = vmatprep.subr.bf16.mxu0 0
      %2140 = vmatpush1.bf16.msra.mxu0 0
      %2141 = vmatprep.subr.bf16.mxu0 0
      %2142 = vmatpush1.bf16.msra.mxu0 0
      %2143 = vmatprep.subr.bf16.mxu0 0
      %2144 = vmatpush1.bf16.msra.mxu0 0
      %2145 = vmatprep.subr.bf16.mxu0 0
      %2146 = vmatpush1.bf16.msra.mxu0 0
      %2147 = vmatprep.subr.bf16.mxu0 0
      %2148 = vmatpush1.bf16.msra.mxu0 0
      %2149 = vmatprep.subr.bf16.mxu0 0
      %2150 = vmatpush1.bf16.msra.mxu0 0
      %2151 = vmatprep.subr.bf16.mxu0 0
      %2152 = vmatpush1.bf16.msra.mxu0 0
      %2153 = vmatprep.subr.bf16.mxu0 0
      %2154 = vmatpush1.bf16.msra.mxu0 0
      %2155 = vmatprep.subr.bf16.mxu0 0
      %2156 = vmatpush1.bf16.msra.mxu0 0
      %2157 = vmatprep.subr.bf16.mxu0 0
      %2158 = vmatpush1.bf16.msra.mxu0 0
      %2159 = vmatprep.mubr.bf16.mxu0 0
      %2160 = vmatmul.mubr.bf16.gmra.mrb[0].mxu0 %v2125
      %v2161 = vpop.f32.mrb[0].mxu0
      %v2162 = vadd.f32 0.0, %v2161
      %v2163 = vpop.f32.mrb[0].mxu0
      %v2164 = vpop.f32.mrb[0].mxu0
      %v2165 = vpop.f32.mrb[0].mxu0
      %2166 = vdwg.mxu0
      %v2167 = vld [vmem:[#allocation2] sm:$0xff]
      %v2168 = vadd.f32 %v2167, %v2162
      %2169 = vst.msk [vmem:[#allocation2] sm:$0xff] %vm282, %v2168
      %v2170 = vld [vmem:[%s195] sm:$0xf]
      %v2171 = vld [vmem:[%s195 + $0x4] sm:$0xf]
      %v2172 = vld [vmem:[%s586] sm:$0xf]
      %v2175 = vunpack.c.l.b16 %v2170
      %v2176 = vunpack.c.l.b16 %v2171
      %v2177 = vpack.c.b16 %v2176, %v2175
      %2178 = vrot.lane.b32.xlu0 %v2177, 111
      %v2179 = vpop.permute.xlu0 %2178
      %v2182 = vsel %vm238, %v2172, 0
      %2184 = vmatprep.subr.bf16.mxu0 0
      %2185 = vmatpush1.bf16.msra.mxu0 %v2179
      %2186 = vmatprep.subr.bf16.mxu0 0
      %2187 = vmatpush1.bf16.msra.mxu0 0
      %2188 = vmatprep.subr.bf16.mxu0 0
      %2189 = vmatpush1.bf16.msra.mxu0 0
      %2190 = vmatprep.subr.bf16.mxu0 0
      %2191 = vmatpush1.bf16.msra.mxu0 0
      %2192 = vmatprep.subr.bf16.mxu0 0
      %2193 = vmatpush1.bf16.msra.mxu0 0
      %2194 = vmatprep.subr.bf16.mxu0 0
      %2195 = vmatpush1.bf16.msra.mxu0 0
      %2196 = vmatprep.subr.bf16.mxu0 0
      %2197 = vmatpush1.bf16.msra.mxu0 0
      %2198 = vmatprep.subr.bf16.mxu0 0
      %2199 = vmatpush1.bf16.msra.mxu0 0
      %2200 = vmatprep.subr.bf16.mxu0 0
      %2201 = vmatpush1.bf16.msra.mxu0 0
      %2202 = vmatprep.subr.bf16.mxu0 0
      %2203 = vmatpush1.bf16.msra.mxu0 0
      %2204 = vmatprep.subr.bf16.mxu0 0
      %2205 = vmatpush1.bf16.msra.mxu0 0
      %2206 = vmatprep.subr.bf16.mxu0 0
      %2207 = vmatpush1.bf16.msra.mxu0 0
      %2208 = vmatprep.subr.bf16.mxu0 0
      %2209 = vmatpush1.bf16.msra.mxu0 0
      %2210 = vmatprep.subr.bf16.mxu0 0
      %2211 = vmatpush1.bf16.msra.mxu0 0
      %2212 = vmatprep.subr.bf16.mxu0 0
      %2213 = vmatpush1.bf16.msra.mxu0 0
      %2214 = vmatprep.subr.bf16.mxu0 0
      %2215 = vmatpush1.bf16.msra.mxu0 0
      %2216 = vmatprep.mubr.bf16.mxu0 0
      %2217 = vmatmul.mubr.bf16.gmra.mrb[0].mxu0 %v2182
      %v2218 = vpop.f32.mrb[0].mxu0
      %v2219 = vadd.f32 0.0, %v2218
      %v2220 = vpop.f32.mrb[0].mxu0
      %v2221 = vpop.f32.mrb[0].mxu0
      %v2222 = vpop.f32.mrb[0].mxu0
      %2223 = vdwg.mxu0
      %v2224 = vld [vmem:[#allocation2] sm:$0xff]
      %v2225 = vadd.f32 %v2224, %v2219
      %2226 = vst.msk [vmem:[#allocation2] sm:$0xff] %vm282, %v2225
      %v2227 = vld [vmem:[%s401] sm:$0xf]
      %v2228 = vld [vmem:[%s401 + $0x4] sm:$0xf]
      %v2229 = vld [vmem:[%s644] sm:$0xf]
      %v2232 = vunpack.c.l.b16 %v2227
      %v2233 = vunpack.c.l.b16 %v2228
      %v2234 = vpack.c.b16 %v2233, %v2232
      %2235 = vrot.lane.b32.xlu0 %v2234, 111
      %v2236 = vpop.permute.xlu0 %2235
      %v2239 = vsel %vm238, %v2229, 0
      %2241 = vmatprep.subr.bf16.mxu0 0
      %2242 = vmatpush1.bf16.msra.mxu0 %v2236
      %2243 = vmatprep.subr.bf16.mxu0 0
      %2244 = vmatpush1.bf16.msra.mxu0 0
      %2245 = vmatprep.subr.bf16.mxu0 0
      %2246 = vmatpush1.bf16.msra.mxu0 0
      %2247 = vmatprep.subr.bf16.mxu0 0
      %2248 = vmatpush1.bf16.msra.mxu0 0
      %2249 = vmatprep.subr.bf16.mxu0 0
      %2250 = vmatpush1.bf16.msra.mxu0 0
      %2251 = vmatprep.subr.bf16.mxu0 0
      %2252 = vmatpush1.bf16.msra.mxu0 0
      %2253 = vmatprep.subr.bf16.mxu0 0
      %2254 = vmatpush1.bf16.msra.mxu0 0
      %2255 = vmatprep.subr.bf16.mxu0 0
      %2256 = vmatpush1.bf16.msra.mxu0 0
      %2257 = vmatprep.subr.bf16.mxu0 0
      %2258 = vmatpush1.bf16.msra.mxu0 0
      %2259 = vmatprep.subr.bf16.mxu0 0
      %2260 = vmatpush1.bf16.msra.mxu0 0
      %2261 = vmatprep.subr.bf16.mxu0 0
      %2262 = vmatpush1.bf16.msra.mxu0 0
      %2263 = vmatprep.subr.bf16.mxu0 0
      %2264 = vmatpush1.bf16.msra.mxu0 0
      %2265 = vmatprep.subr.bf16.mxu0 0
      %2266 = vmatpush1.bf16.msra.mxu0 0
      %2267 = vmatprep.subr.bf16.mxu0 0
      %2268 = vmatpush1.bf16.msra.mxu0 0
      %2269 = vmatprep.subr.bf16.mxu0 0
      %2270 = vmatpush1.bf16.msra.mxu0 0
      %2271 = vmatprep.subr.bf16.mxu0 0
      %2272 = vmatpush1.bf16.msra.mxu0 0
      %2273 = vmatprep.mubr.bf16.mxu0 0
      %2274 = vmatmul.mubr.bf16.gmra.mrb[0].mxu0 %v2239
      %v2275 = vpop.f32.mrb[0].mxu0
      %v2276 = vadd.f32 0.0, %v2275
      %v2277 = vpop.f32.mrb[0].mxu0
      %v2278 = vpop.f32.mrb[0].mxu0
      %v2279 = vpop.f32.mrb[0].mxu0
      %2280 = vdwg.mxu0
      %v2281 = vld [vmem:[#allocation2] sm:$0xff]
      %v2282 = vadd.f32 %v2281, %v2276
      %2283 = vst.msk [vmem:[#allocation2] sm:$0xff] %vm282, %v2282
      %v2284 = vld [vmem:[%s195] sm:$0xf]
      %v2285 = vld [vmem:[%s195 + $0x4] sm:$0xf]
      %2286 = vrot.lane.b32.xlu0 %v884, 18
      %v2287 = vpop.permute.xlu0 %2286
      %vm2288 = vcmp.ne.s16.totalorder %v2287, 0
      %v2289 = vsel %vm2288, 0, %v2284
      %v2290 = vsel %vm2288, 0, %v2285
      %v2291 = vld [vmem:[%s702] sm:$0xf]
      %v2294 = vunpack.c.l.b16 %v2289
      %v2295 = vunpack.c.l.b16 %v2290
      %v2296 = vpack.c.b16 %v2295, %v2294
      %2297 = vrot.lane.b32.xlu0 %v2296, 110
      %v2298 = vpop.permute.xlu0 %2297
      %v2301 = vsel %vm238, %v2291, 0
      %2303 = vmatprep.subr.bf16.mxu0 0
      %2304 = vmatpush1.bf16.msra.mxu0 %v2298
      %2305 = vmatprep.subr.bf16.mxu0 0
      %2306 = vmatpush1.bf16.msra.mxu0 0
      %2307 = vmatprep.subr.bf16.mxu0 0
      %2308 = vmatpush1.bf16.msra.mxu0 0
      %2309 = vmatprep.subr.bf16.mxu0 0
      %2310 = vmatpush1.bf16.msra.mxu0 0
      %2311 = vmatprep.subr.bf16.mxu0 0
      %2312 = vmatpush1.bf16.msra.mxu0 0
      %2313 = vmatprep.subr.bf16.mxu0 0
      %2314 = vmatpush1.bf16.msra.mxu0 0
      %2315 = vmatprep.subr.bf16.mxu0 0
      %2316 = vmatpush1.bf16.msra.mxu0 0
      %2317 = vmatprep.subr.bf16.mxu0 0
      %2318 = vmatpush1.bf16.msra.mxu0 0
      %2319 = vmatprep.subr.bf16.mxu0 0
      %2320 = vmatpush1.bf16.msra.mxu0 0
      %2321 = vmatprep.subr.bf16.mxu0 0
      %2322 = vmatpush1.bf16.msra.mxu0 0
      %2323 = vmatprep.subr.bf16.mxu0 0
      %2324 = vmatpush1.bf16.msra.mxu0 0
      %2325 = vmatprep.subr.bf16.mxu0 0
      %2326 = vmatpush1.bf16.msra.mxu0 0
      %2327 = vmatprep.subr.bf16.mxu0 0
      %2328 = vmatpush1.bf16.msra.mxu0 0
      %2329 = vmatprep.subr.bf16.mxu0 0
      %2330 = vmatpush1.bf16.msra.mxu0 0
      %2331 = vmatprep.subr.bf16.mxu0 0
      %2332 = vmatpush1.bf16.msra.mxu0 0
      %2333 = vmatprep.subr.bf16.mxu0 0
      %2334 = vmatpush1.bf16.msra.mxu0 0
      %2335 = vmatprep.mubr.bf16.mxu0 0
      %2336 = vmatmul.mubr.bf16.gmra.mrb[0].mxu0 %v2301
      %v2337 = vpop.f32.mrb[0].mxu0
      %v2338 = vadd.f32 0.0, %v2337
      %v2339 = vpop.f32.mrb[0].mxu0
      %v2340 = vpop.f32.mrb[0].mxu0
      %v2341 = vpop.f32.mrb[0].mxu0
      %2342 = vdwg.mxu0
      %v2343 = vld [vmem:[#allocation2] sm:$0xff]
      %v2344 = vadd.f32 %v2343, %v2338
      %2345 = vst.msk [vmem:[#allocation2] sm:$0xff] %vm282, %v2344
      %v2346 = vld [vmem:[#allocation2] sm:$0xff]
      %v2347 = vadd.f32 %v2346, %v762
      %v2348 = vmax.f32 %v2347, 0.0
      %v2349 = vld [vmem:[#allocation3] sm:$0xff]
      %v2350 = vadd.f32 %v2349, %v2348
      %2351 = vst.msk [vmem:[#allocation3] sm:$0xff] %vm282, %v2350
      %v2352 = vld [vmem:[#allocation3] sm:$0xff]
      %2353 = vst.msk [vmem:[%s202] sm:$0xff] %vm282, %v2352
      %p2354 = scmp.lt.s32.totalorder %s18, 1
      %s2355 = scalar_select %p2354, %s18, 1
      %p2356 = scmp.lt.s32.totalorder %s19, 0
      %s2357 = scalar_select %p2356, %s19, 0
      %s2358 = sadd.s32 %s2357, %s2355
      %s2359 = smul.addr %s2358, 8
      %s2360 = scalar_lea.vmem %s3, %s2359
      // Predicated region
      $region33: #{down_block_pallas.1} parent=31 // pred_check
        %p2361 = pneg %p116
      $region34: #{down_block_pallas.1} parent=31 // pred_check_branch
        %2363 = sbr.rel (%p2361) target = $region36
      $region35: #{down_block_pallas.1} parent=31 // pred_region
        _
      $region36: #{down_block_pallas.1} parent=31 // pred_fallthru
        _
    $region32: #{down_block_pallas.1} parent=5 // pred_fallthru
      _
    %p2364 = scmp.le.s32.totalorder 2, %s9
    // Predicated region
    $region37: #{down_block_pallas.1} parent=5 // pred_check
      %p2365 = pneg %p2364
    $region38: #{down_block_pallas.1} parent=5 // pred_check_branch
      %2367 = sbr.rel (%p2365) target = $region40
    $region39: #{down_block_pallas.1} parent=5 // pred_region
      %s2368 = ssub.s32 %s9, 2
      // Predicated region
      $region41: #{down_block_pallas.1} parent=39 // pred_check
        %p2369 = pneg %p122
      $region42: #{down_block_pallas.1} parent=39 // pred_check_branch
        %2371 = sbr.rel (%p2369) target = $region44
      $region43: #{down_block_pallas.1} parent=39 // pred_region
        %p2372 = scmp.lt.s32.totalorder %s20, 1
        %s2373 = scalar_select %p2372, %s20, 1
        %p2374 = scmp.lt.s32.totalorder %s21, 0
        %s2375 = scalar_select %p2374, %s21, 0
        %s2376 = sadd.s32 %s2375, %s2373
        %s2377 = smul.addr %s2376, 8
        %s2378 = scalar_lea.vmem %s3, %s2377
      $region44: #{down_block_pallas.1} parent=39 // pred_fallthru
        _
    $region40: #{down_block_pallas.1} parent=5 // pred_fallthru
      _
  $region6: #{down_block_pallas.1} parent=0 // loop_footer
    %s13 = sadd.s32 1, %s9
  $region7: #{down_block_pallas.1} parent=0 // loop_footer_branch
    %8 = sbr.rel target = $region3
  $region8: #{down_block_pallas.1} parent=0 // loop_exit
    _

</llo_original>
